<compile_context>
chip_gen: v6e
topology: v6e:2x2x1
jax: 0.10.0
libtpu: 0.0.40
codegen_flags: <defaults>
</compile_context>

<pallas_src>
import jax
import jax.numpy as jnp
from jax.experimental import pallas as pl
from jax.experimental.pallas import tpu as pltpu

# ----------------------------- configuration --------------------------------
B = 2            # batch
S = 8            # text sequence length
S_ASP = 4        # aspect sequence length
VOCAB = 50
H_BERT = 32      # bert hidden_size == GRU input size
HID = 32         # GRU hidden_dim
N_LAYERS = 2
NUM_CLASSES = 3
NTOK = B * (S + S_ASP)

assert N_LAYERS == B  # the PyTorch hidden-reshape trick only holds for L == B


def _ceil8(n):
    return -(-n // 8) * 8


VOCAB_PAD = _ceil8(VOCAB)      # one-hot width rounded up to a sublane multiple

# --- single weight slab: every f32 operand padded to 128 lanes, 8-row-aligned segments ---
_SLAB_SPECS = [
    ("emb",   VOCAB,  H_BERT),
    ("enc_w", H_BERT, H_BERT),
    ("enc_b", 1,      H_BERT),
    ("wih0",  H_BERT, 3 * HID),
    ("whh0",  HID,    3 * HID),
    ("bx0",   1,      3 * HID),
    ("bhn0",  1,      HID),
    ("wih1",  HID,    3 * HID),
    ("whh1",  HID,    3 * HID),
    ("bx1",   1,      3 * HID),
    ("bhn1",  1,      HID),
    ("w_att", 1,      HID),
    ("fc_w",  HID,    NUM_CLASSES),
    ("fc_b",  1,      NUM_CLASSES),
    ("mask",  S * B,  HID),
]
_SLAB_SHAPES = {n: (r, c) for n, r, c in _SLAB_SPECS}
_SLAB_OFF = {}
_off = 0
for _n, _r, _c in _SLAB_SPECS:
    _SLAB_OFF[_n] = _off
    _off += _ceil8(_r)
SLAB_ROWS = _off
SLAB_LANES = 128


# ----------------------------- fused kernel --------------------------------
def drbert_kernel(ids_ref, slab_ref, res_ref):
    f32 = jnp.float32

    def ld(name, rows=None, cols=None):
        r, c = _SLAB_SHAPES[name]
        rows = r if rows is None else rows
        cols = c if cols is None else cols
        off = _SLAB_OFF[name]
        return slab_ref[off:off + rows, 0:cols]      # static window load

    # ---------- BERT proxy: one-hot embedding matmul + dense + tanh-GELU ----------
    ids = ids_ref[...]                                                   # [NTOK, 1] int32
    vocab_iota = jax.lax.broadcasted_iota(jnp.int32, (NTOK, VOCAB_PAD), 1)
    onehot = (vocab_iota == ids).astype(f32)                             # [NTOK, VOCAB_PAD]
    tok = jnp.dot(onehot, ld("emb", rows=VOCAB_PAD), preferred_element_type=f32)
    y = jnp.dot(tok, ld("enc_w"), preferred_element_type=f32) + ld("enc_b")
    c = 0.7978845608028654
    # TODO(synk): tanh-approx GELU; PyTorch/BERT default is the erf form.
    enc = 0.5 * y * (1.0 + jnp.tanh(c * (y + 0.044715 * y * y * y)))     # [NTOK, H_BERT]

    # Row layout (register-resident, no scratch):
    #   rows 0 .. S*B-1      sentence tokens, TIME-major (row = t*B + b), sorted batch order
    #   rows S*B .. NTOK-1   aspect tokens, batch-major (row = S*B + b*S_ASP + t), asp-sorted
    enc_sent = enc[0:S * B, :]
    asp_mean = jnp.concatenate(
        [jnp.mean(enc[S * B + b * S_ASP:S * B + (b + 1) * S_ASP, :], axis=0, keepdims=True)
         for b in range(B)], axis=0)                                     # [B, H]
    # TODO(synk): F(sentence, aspect) is undefined in the source; approximated as
    #             sentence + mean-pooled aspect fusion.
    x0 = enc_sent + jnp.concatenate([asp_mean] * S, axis=0)              # time-major [S*B, H]

    mask = ld("mask")                                                    # [S*B, HID] 0/1, time-major

    # ---------- 2-layer GRU: lane-packed gates (r|z|n), packed-sequence semantics ----------
    def run_gru_layer(x_tm, wih, whh, bx, bhn):
        # All input-side projections of the layer hoisted into ONE matmul.
        gi_all = jnp.dot(x_tm, wih, preferred_element_type=f32) + bx     # [S*B, 3H]
        bhn_b = jnp.broadcast_to(bhn, (B, HID))                          # hoisted broadcast
        h = jnp.zeros((B, HID), f32)
        outs = []
        for t in range(S):                                               # unrolled, static slices
            gh = jnp.dot(h, whh, preferred_element_type=f32)             # ONE [B,H]x[H,3H] matmul
            gi = gi_all[t * B:(t + 1) * B, :]
            r = jax.nn.sigmoid(gi[:, 0:HID] + gh[:, 0:HID])
            z = jax.nn.sigmoid(gi[:, HID:2 * HID] + gh[:, HID:2 * HID])
            n = jnp.tanh(gi[:, 2 * HID:3 * HID] + r * (gh[:, 2 * HID:3 * HID] + bhn_b))
            h_new = (1.0 - z) * n + z * h
            m = mask[t * B:(t + 1) * B, :]                               # [B, HID]
            out_t = m * h_new                                            # zero past each length
            h = out_t + (1.0 - m) * h                                    # freeze hidden past length
            outs.append(out_t)
        return outs, h

    # TODO(synk): PyTorch applies inter-layer dropout during training; identity at inference.
    outs0, h0 = run_gru_layer(x0, ld("wih0"), ld("whh0"), ld("bx0"), ld("bhn0"))
    x1 = jnp.concatenate(outs0, axis=0)                                  # [S*B, HID], one concat
    outs1, h1 = run_gru_layer(x1, ld("wih1"), ld("whh1"), ld("bx1"), ld("bhn1"))

    # ---------- attention pooling: softmax over the *batch* axis (dim=0, as in source) ----------
    # Done per time step on the register-resident [B, HID] outputs (sorted order).  Permuting
    # the batch only permutes softmax rows, so the pooled part is desorted in the wrapper.
    # pool = sum_t out*alpha + sum_t out = sum_t out*(1+alpha).
    w_att = ld("w_att")                                                  # [1, HID]
    pool = jnp.zeros((B, HID), f32)
    for t in range(S):
        o_t = outs1[t]
        s_t = jnp.sum(jnp.tanh(o_t) * w_att, axis=1, keepdims=True)      # [B, 1]
        e_t = jnp.exp(s_t - jnp.max(s_t, axis=0, keepdims=True))
        a_t = e_t / jnp.sum(e_t, axis=0, keepdims=True)
        pool = pool + o_t * (1.0 + a_t)

    # ---------- hidden reshape-mean + final FC (split: pooled part | hidden part) ----------
    # reshape([L,B,H] -> [B,-1,H]).mean(1) is an identity layout because L == B, so row b
    # averages layer b's final hidden over the (sorted, NOT desorted) batch.
    hid_mean = jnp.concatenate([jnp.mean(h0, axis=0, keepdims=True),
                                jnp.mean(h1, axis=0, keepdims=True)], axis=0)   # [B, H]
    fc_in = jnp.concatenate([pool, hid_mean], axis=0)                    # [2B, H]; dropout==identity
    res = jnp.dot(fc_in, ld("fc_w"), preferred_element_type=f32)         # [2B, C]
    # bias only on the hidden rows; wrapper adds both halves -> bias counted exactly once.
    res = res + jnp.concatenate(
        [jnp.zeros((B, NUM_CLASSES), f32),
         jnp.broadcast_to(ld("fc_b"), (B, NUM_CLASSES))], axis=0)
    res_ref[...] = res


# ----------------------------- wrapper --------------------------------
def _pack_gru(p, layer):
    """PyTorch-packed [Hin,3H]/[1,3H] (gate order r|z|n) with biases pre-folded."""
    wih, whh = p[f"wih{layer}"], p[f"whh{layer}"]
    bih, bhh = p[f"bih{layer}"], p[f"bhh{layer}"]
    # r/z gates: bih+bhh pre-summed; n gate: only bih folds (bhh_n stays inside r*(.)).
    bx = jnp.concatenate([bih[:, :2 * HID] + bhh[:, :2 * HID], bih[:, 2 * HID:]], axis=1)
    bhn = bhh[:, 2 * HID:]
    return wih, whh, bx, bhn


def _pack_slab(tensors):
    """Concatenate every f32 operand into one 128-lane, 8-row-aligned slab (single DMA)."""
    parts = []
    for name, rows, cols in _SLAB_SPECS:
        a = tensors[name].astype(jnp.float32)
        parts.append(jnp.pad(a, ((0, _ceil8(rows) - rows), (0, SLAB_LANES - cols))))
    return jnp.concatenate(parts, axis=0)                                # [SLAB_ROWS, 128]


@jax.jit
def drbert_forward(params, text, aspect, bert_masks, seq_lens, asp_len):
    del bert_masks  # TODO(synk): attention mask unused by the BERT proxy.

    # prepare_pack_padded_sequence: sort by descending length (+ inverse for desorting).
    # Sort/desort live entirely in the wrapper (cheap XLA gathers on tiny arrays) so the
    # kernel uses only static indexing.
    sorted_idx = jnp.argsort(-seq_lens).astype(jnp.int32)
    desorted_idx = jnp.argsort(sorted_idx).astype(jnp.int32)
    sorted_lens = seq_lens[sorted_idx]
    asp_sorted_idx = jnp.argsort(-asp_len).astype(jnp.int32)

    text_sorted = jnp.take(text, sorted_idx, axis=0)                     # [B, S]
    aspect_sorted = jnp.take(aspect, asp_sorted_idx, axis=0)             # [B, S_ASP]

    # time-major sentence ids (row = t*B + b) followed by batch-major aspect ids.
    ids = jnp.concatenate([text_sorted.T.reshape(-1),
                           aspect_sorted.reshape(-1)]).astype(jnp.int32)[:, None]

    # packed-sequence mask, time-major [S*B, HID], sorted batch order.
    mask = (jnp.arange(S, dtype=jnp.int32)[:, None]
            < sorted_lens[None, :]).astype(jnp.float32)                  # [S, B]
    mask_full = jnp.broadcast_to(mask.reshape(S * B, 1), (S * B, HID))

    wih0, whh0, bx0, bhn0 = _pack_gru(params, 0)
    wih1, whh1, bx1, bhn1 = _pack_gru(params, 1)
    slab = _pack_slab({
        "emb": params["emb"], "enc_w": params["enc_w"], "enc_b": params["enc_b"],
        "wih0": wih0, "whh0": whh0, "bx0": bx0, "bhn0": bhn0,
        "wih1": wih1, "whh1": whh1, "bx1": bx1, "bhn1": bhn1,
        "w_att": params["w_att"], "fc_w": params["fc_w"], "fc_b": params["fc_b"],
        "mask": mask_full,
    })

    vmem = pl.BlockSpec(memory_space=pltpu.MemorySpace.VMEM)
    res = pl.pallas_call(
        drbert_kernel,
        out_shape=jax.ShapeDtypeStruct((2 * B, NUM_CLASSES), jnp.float32),
        in_specs=[vmem, vmem],
        out_specs=vmem,
    )(ids, slab)

    # rows [0:B]  : fc(attention+sum pooled output) in SORTED order -> desorted here;
    # rows [B:2B] : fc(hidden-mean)+bias in layer order (NOT desorted, as in the source).
    return jnp.take(res[:B], desorted_idx, axis=0) + res[B:]


# ----------------------------- params & main --------------------------------
def init_params(key):
    ks = jax.random.split(key, 16)
    r = lambda k, shp: (0.1 * jax.random.normal(k, shp)).astype(jnp.float32)
    return {
        "emb":   r(ks[0], (VOCAB, H_BERT)),
        "enc_w": r(ks[1], (H_BERT, H_BERT)),
        "enc_b": r(ks[2], (1, H_BERT)),
        # GRU layer 0 (input H_BERT), layer 1 (input HID); gate order [r | z | n]
        "wih0": r(ks[3], (H_BERT, 3 * HID)), "whh0": r(ks[4], (HID, 3 * HID)),
        "bih0": r(ks[5], (1, 3 * HID)),      "bhh0": r(ks[6], (1, 3 * HID)),
        "wih1": r(ks[7], (HID, 3 * HID)),    "whh1": r(ks[8], (HID, 3 * HID)),
        "bih1": r(ks[9], (1, 3 * HID)),      "bhh1": r(ks[10], (1, 3 * HID)),
        "w_att": r(ks[11], (1, HID)),                                   # nn.Parameter(randn(H))
        "fc_w":  r(ks[12], (HID, NUM_CLASSES)),
        "fc_b":  r(ks[13], (1, NUM_CLASSES)),
    }


if __name__ == "__main__":
    key = jax.random.PRNGKey(0)
    k_text, k_asp, k_param = jax.random.split(key, 3)

    text = jax.random.randint(k_text, (B, S), 0, VOCAB, dtype=jnp.int32)
    aspect = jax.random.randint(k_asp, (B, S_ASP), 0, VOCAB, dtype=jnp.int32)
    seq_lens = jnp.array([S, 5], dtype=jnp.int32)
    asp_len = jnp.array([3, 4], dtype=jnp.int32)
    bert_masks = (jnp.arange(S)[None, :] < seq_lens[:, None]).astype(jnp.int32)

    params = init_params(k_param)

    out = drbert_forward(params, text, aspect, bert_masks, seq_lens, asp_len)
    out = jax.block_until_ready(out)
    assert out.shape == (B, NUM_CLASSES) and bool(jnp.all(jnp.isfinite(out)))
    print("KERNEL_OK")
</pallas_src>

<mosaic_0001>
module attributes {stable_mosaic.version = 11 : i64} {
  func.func @drbert_kernel(%arg0: memref<24x1xi32, #tpu.memory_space<vmem>>, %arg1: memref<320x128xf32, #tpu.memory_space<vmem>>, %arg2: memref<4x3xf32, #tpu.memory_space<vmem>>) attributes {dimension_semantics = [], scalar_prefetch = 0 : i64, scratch_operands = 0 : i64, tpu.core_type = #tpu.core_type<tc>} {
    %c0 = arith.constant 0 : index
    %c0_0 = arith.constant 0 : index
    %0 = vector.load %arg0[%c0, %c0_0] : memref<24x1xi32, #tpu.memory_space<vmem>>, vector<24x1xi32>
    %1 = tpu.iota {dimensions = array<i32: 1>} : vector<24x56xi32>
    %2 = vector.broadcast %0 : vector<24x1xi32> to vector<24x56xi32>
    %3 = arith.cmpi eq, %1, %2 : vector<24x56xi32>
    %4 = arith.extui %3 : vector<24x56xi1> to vector<24x56xi32>
    %5 = arith.sitofp %4 : vector<24x56xi32> to vector<24x56xf32>
    %c0_1 = arith.constant 0 : index
    %c0_2 = arith.constant 0 : index
    %6 = vector.load %arg1[%c0_1, %c0_2] : memref<320x128xf32, #tpu.memory_space<vmem>>, vector<56x32xf32>
    %cst = arith.constant dense<0.000000e+00> : vector<24x32xf32>
    %7 = tpu.matmul %5, %6, %cst {dimension_numbers = #tpu.dot_dimension_numbers<[1], [0], [0], [1], [0, 0, 1, 1], [], []>} : vector<24x56xf32>, vector<56x32xf32>, vector<24x32xf32> -> vector<24x32xf32>
    %c56 = arith.constant 56 : index
    %c0_3 = arith.constant 0 : index
    %8 = vector.load %arg1[%c56, %c0_3] : memref<320x128xf32, #tpu.memory_space<vmem>>, vector<32x32xf32>
    %cst_4 = arith.constant dense<0.000000e+00> : vector<24x32xf32>
    %9 = tpu.matmul %7, %8, %cst_4 {dimension_numbers = #tpu.dot_dimension_numbers<[1], [0], [0], [1], [0, 0, 1, 1], [], []>} : vector<24x32xf32>, vector<32x32xf32>, vector<24x32xf32> -> vector<24x32xf32>
    %c88 = arith.constant 88 : index
    %c0_5 = arith.constant 0 : index
    %10 = vector.load %arg1[%c88, %c0_5] : memref<320x128xf32, #tpu.memory_space<vmem>>, vector<1x32xf32>
    %11 = vector.broadcast %10 : vector<1x32xf32> to vector<24x32xf32>
    %12 = arith.addf %9, %11 : vector<24x32xf32>
    %cst_6 = arith.constant 5.000000e-01 : f32
    %13 = vector.broadcast %cst_6 : f32 to vector<24x32xf32>
    %14 = arith.mulf %13, %12 : vector<24x32xf32>
    %cst_7 = arith.constant 4.471500e-02 : f32
    %15 = vector.broadcast %cst_7 : f32 to vector<24x32xf32>
    %16 = arith.mulf %15, %12 : vector<24x32xf32>
    %17 = arith.mulf %16, %12 : vector<24x32xf32>
    %18 = arith.mulf %17, %12 : vector<24x32xf32>
    %19 = arith.addf %12, %18 : vector<24x32xf32>
    %cst_8 = arith.constant 0.797884583 : f32
    %20 = vector.broadcast %cst_8 : f32 to vector<24x32xf32>
    %21 = arith.mulf %20, %19 : vector<24x32xf32>
    %22 = math.tanh %21 : vector<24x32xf32>
    %cst_9 = arith.constant 1.000000e+00 : f32
    %23 = vector.broadcast %cst_9 : f32 to vector<24x32xf32>
    %24 = arith.addf %23, %22 : vector<24x32xf32>
    %25 = arith.mulf %14, %24 : vector<24x32xf32>
    %26 = vector.extract_strided_slice %25 {offsets = [0, 0], sizes = [16, 32], strides = [1, 1]} : vector<24x32xf32> to vector<16x32xf32>
    %27 = vector.extract_strided_slice %25 {offsets = [16, 0], sizes = [4, 32], strides = [1, 1]} : vector<24x32xf32> to vector<4x32xf32>
    %cst_10 = arith.constant dense<0.000000e+00> : vector<32xf32>
    %28 = vector.multi_reduction <add>, %27, %cst_10 [0] : vector<4x32xf32> to vector<32xf32>
    %29 = vector.shape_cast %28 : vector<32xf32> to vector<1x32xf32>
    %cst_11 = arith.constant 4.000000e+00 : f32
    %30 = vector.broadcast %cst_11 : f32 to vector<1x32xf32>
    %31 = arith.divf %29, %30 : vector<1x32xf32>
    %32 = vector.extract_strided_slice %25 {offsets = [20, 0], sizes = [4, 32], strides = [1, 1]} : vector<24x32xf32> to vector<4x32xf32>
    %cst_12 = arith.constant dense<0.000000e+00> : vector<32xf32>
    %33 = vector.multi_reduction <add>, %32, %cst_12 [0] : vector<4x32xf32> to vector<32xf32>
    %34 = vector.shape_cast %33 : vector<32xf32> to vector<1x32xf32>
    %cst_13 = arith.constant 4.000000e+00 : f32
    %35 = vector.broadcast %cst_13 : f32 to vector<1x32xf32>
    %36 = arith.divf %34, %35 : vector<1x32xf32>
    %37 = tpu.concatenate %31, %36 in 0 : vector<1x32xf32>, vector<1x32xf32> -> vector<2x32xf32>
    %38 = tpu.concatenate %37, %37, %37, %37, %37, %37, %37, %37 in 0 : vector<2x32xf32>, vector<2x32xf32>, vector<2x32xf32>, vector<2x32xf32>, vector<2x32xf32>, vector<2x32xf32>, vector<2x32xf32>, vector<2x32xf32> -> vector<16x32xf32>
    %39 = arith.addf %26, %38 : vector<16x32xf32>
    %c304 = arith.constant 304 : index
    %c0_14 = arith.constant 0 : index
    %40 = vector.load %arg1[%c304, %c0_14] : memref<320x128xf32, #tpu.memory_space<vmem>>, vector<16x32xf32>
    %c96 = arith.constant 96 : index
    %c0_15 = arith.constant 0 : index
    %41 = vector.load %arg1[%c96, %c0_15] : memref<320x128xf32, #tpu.memory_space<vmem>>, vector<32x96xf32>
    %c128 = arith.constant 128 : index
    %c0_16 = arith.constant 0 : index
    %42 = vector.load %arg1[%c128, %c0_16] : memref<320x128xf32, #tpu.memory_space<vmem>>, vector<32x96xf32>
    %c160 = arith.constant 160 : index
    %c0_17 = arith.constant 0 : index
    %43 = vector.load %arg1[%c160, %c0_17] : memref<320x128xf32, #tpu.memory_space<vmem>>, vector<1x96xf32>
    %c168 = arith.constant 168 : index
    %c0_18 = arith.constant 0 : index
    %44 = vector.load %arg1[%c168, %c0_18] : memref<320x128xf32, #tpu.memory_space<vmem>>, vector<1x32xf32>
    %cst_19 = arith.constant dense<0.000000e+00> : vector<16x96xf32>
    %45 = tpu.matmul %39, %41, %cst_19 {dimension_numbers = #tpu.dot_dimension_numbers<[1], [0], [0], [1], [0, 0, 1, 1], [], []>} : vector<16x32xf32>, vector<32x96xf32>, vector<16x96xf32> -> vector<16x96xf32>
    %46 = vector.broadcast %43 : vector<1x96xf32> to vector<16x96xf32>
    %47 = arith.addf %45, %46 : vector<16x96xf32>
    %48 = vector.shape_cast %44 : vector<1x32xf32> to vector<1x32xf32>
    %49 = vector.broadcast %48 : vector<1x32xf32> to vector<2x32xf32>
    %cst_20 = arith.constant 0.000000e+00 : f32
    %50 = vector.broadcast %cst_20 : f32 to vector<2x32xf32>
    %cst_21 = arith.constant dense<0.000000e+00> : vector<2x96xf32>
    %51 = tpu.matmul %50, %42, %cst_21 {dimension_numbers = #tpu.dot_dimension_numbers<[1], [0], [0], [1], [0, 0, 1, 1], [], []>} : vector<2x32xf32>, vector<32x96xf32>, vector<2x96xf32> -> vector<2x96xf32>
    %52 = vector.extract_strided_slice %47 {offsets = [0, 0], sizes = [2, 96], strides = [1, 1]} : vector<16x96xf32> to vector<2x96xf32>
    %53 = vector.extract_strided_slice %52 {offsets = [0, 0], sizes = [2, 32], strides = [1, 1]} : vector<2x96xf32> to vector<2x32xf32>
    %54 = vector.extract_strided_slice %51 {offsets = [0, 0], sizes = [2, 32], strides = [1, 1]} : vector<2x96xf32> to vector<2x32xf32>
    %55 = arith.addf %53, %54 : vector<2x32xf32>
    %56 = arith.negf %55 : vector<2x32xf32>
    %57 = math.exp %56 : vector<2x32xf32>
    %cst_22 = arith.constant 1.000000e+00 : f32
    %58 = vector.broadcast %cst_22 : f32 to vector<2x32xf32>
    %59 = arith.addf %58, %57 : vector<2x32xf32>
    %60 = arith.divf %58, %59 : vector<2x32xf32>
    %61 = vector.extract_strided_slice %52 {offsets = [0, 32], sizes = [2, 32], strides = [1, 1]} : vector<2x96xf32> to vector<2x32xf32>
    %62 = vector.extract_strided_slice %51 {offsets = [0, 32], sizes = [2, 32], strides = [1, 1]} : vector<2x96xf32> to vector<2x32xf32>
    %63 = arith.addf %61, %62 : vector<2x32xf32>
    %64 = arith.negf %63 : vector<2x32xf32>
    %65 = math.exp %64 : vector<2x32xf32>
    %cst_23 = arith.constant 1.000000e+00 : f32
    %66 = vector.broadcast %cst_23 : f32 to vector<2x32xf32>
    %67 = arith.addf %66, %65 : vector<2x32xf32>
    %68 = arith.divf %66, %67 : vector<2x32xf32>
    %69 = vector.extract_strided_slice %52 {offsets = [0, 64], sizes = [2, 32], strides = [1, 1]} : vector<2x96xf32> to vector<2x32xf32>
    %70 = vector.extract_strided_slice %51 {offsets = [0, 64], sizes = [2, 32], strides = [1, 1]} : vector<2x96xf32> to vector<2x32xf32>
    %71 = arith.addf %70, %49 : vector<2x32xf32>
    %72 = arith.mulf %60, %71 : vector<2x32xf32>
    %73 = arith.addf %69, %72 : vector<2x32xf32>
    %74 = math.tanh %73 : vector<2x32xf32>
    %cst_24 = arith.constant 1.000000e+00 : f32
    %75 = vector.broadcast %cst_24 : f32 to vector<2x32xf32>
    %76 = arith.subf %75, %68 : vector<2x32xf32>
    %77 = arith.mulf %76, %74 : vector<2x32xf32>
    %78 = arith.mulf %68, %50 : vector<2x32xf32>
    %79 = arith.addf %77, %78 : vector<2x32xf32>
    %80 = vector.extract_strided_slice %40 {offsets = [0, 0], sizes = [2, 32], strides = [1, 1]} : vector<16x32xf32> to vector<2x32xf32>
    %81 = arith.mulf %80, %79 : vector<2x32xf32>
    %cst_25 = arith.constant 1.000000e+00 : f32
    %82 = vector.broadcast %cst_25 : f32 to vector<2x32xf32>
    %83 = arith.subf %82, %80 : vector<2x32xf32>
    %84 = arith.mulf %83, %50 : vector<2x32xf32>
    %85 = arith.addf %81, %84 : vector<2x32xf32>
    %cst_26 = arith.constant dense<0.000000e+00> : vector<2x96xf32>
    %86 = tpu.matmul %85, %42, %cst_26 {dimension_numbers = #tpu.dot_dimension_numbers<[1], [0], [0], [1], [0, 0, 1, 1], [], []>} : vector<2x32xf32>, vector<32x96xf32>, vector<2x96xf32> -> vector<2x96xf32>
    %87 = vector.extract_strided_slice %47 {offsets = [2, 0], sizes = [2, 96], strides = [1, 1]} : vector<16x96xf32> to vector<2x96xf32>
    %88 = vector.extract_strided_slice %87 {offsets = [0, 0], sizes = [2, 32], strides = [1, 1]} : vector<2x96xf32> to vector<2x32xf32>
    %89 = vector.extract_strided_slice %86 {offsets = [0, 0], sizes = [2, 32], strides = [1, 1]} : vector<2x96xf32> to vector<2x32xf32>
    %90 = arith.addf %88, %89 : vector<2x32xf32>
    %91 = arith.negf %90 : vector<2x32xf32>
    %92 = math.exp %91 : vector<2x32xf32>
    %cst_27 = arith.constant 1.000000e+00 : f32
    %93 = vector.broadcast %cst_27 : f32 to vector<2x32xf32>
    %94 = arith.addf %93, %92 : vector<2x32xf32>
    %95 = arith.divf %93, %94 : vector<2x32xf32>
    %96 = vector.extract_strided_slice %87 {offsets = [0, 32], sizes = [2, 32], strides = [1, 1]} : vector<2x96xf32> to vector<2x32xf32>
    %97 = vector.extract_strided_slice %86 {offsets = [0, 32], sizes = [2, 32], strides = [1, 1]} : vector<2x96xf32> to vector<2x32xf32>
    %98 = arith.addf %96, %97 : vector<2x32xf32>
    %99 = arith.negf %98 : vector<2x32xf32>
    %100 = math.exp %99 : vector<2x32xf32>
    %cst_28 = arith.constant 1.000000e+00 : f32
    %101 = vector.broadcast %cst_28 : f32 to vector<2x32xf32>
    %102 = arith.addf %101, %100 : vector<2x32xf32>
    %103 = arith.divf %101, %102 : vector<2x32xf32>
    %104 = vector.extract_strided_slice %87 {offsets = [0, 64], sizes = [2, 32], strides = [1, 1]} : vector<2x96xf32> to vector<2x32xf32>
    %105 = vector.extract_strided_slice %86 {offsets = [0, 64], sizes = [2, 32], strides = [1, 1]} : vector<2x96xf32> to vector<2x32xf32>
    %106 = arith.addf %105, %49 : vector<2x32xf32>
    %107 = arith.mulf %95, %106 : vector<2x32xf32>
    %108 = arith.addf %104, %107 : vector<2x32xf32>
    %109 = math.tanh %108 : vector<2x32xf32>
    %cst_29 = arith.constant 1.000000e+00 : f32
    %110 = vector.broadcast %cst_29 : f32 to vector<2x32xf32>
    %111 = arith.subf %110, %103 : vector<2x32xf32>
    %112 = arith.mulf %111, %109 : vector<2x32xf32>
    %113 = arith.mulf %103, %85 : vector<2x32xf32>
    %114 = arith.addf %112, %113 : vector<2x32xf32>
    %115 = vector.extract_strided_slice %40 {offsets = [2, 0], sizes = [2, 32], strides = [1, 1]} : vector<16x32xf32> to vector<2x32xf32>
    %116 = arith.mulf %115, %114 : vector<2x32xf32>
    %cst_30 = arith.constant 1.000000e+00 : f32
    %117 = vector.broadcast %cst_30 : f32 to vector<2x32xf32>
    %118 = arith.subf %117, %115 : vector<2x32xf32>
    %119 = arith.mulf %118, %85 : vector<2x32xf32>
    %120 = arith.addf %116, %119 : vector<2x32xf32>
    %cst_31 = arith.constant dense<0.000000e+00> : vector<2x96xf32>
    %121 = tpu.matmul %120, %42, %cst_31 {dimension_numbers = #tpu.dot_dimension_numbers<[1], [0], [0], [1], [0, 0, 1, 1], [], []>} : vector<2x32xf32>, vector<32x96xf32>, vector<2x96xf32> -> vector<2x96xf32>
    %122 = vector.extract_strided_slice %47 {offsets = [4, 0], sizes = [2, 96], strides = [1, 1]} : vector<16x96xf32> to vector<2x96xf32>
    %123 = vector.extract_strided_slice %122 {offsets = [0, 0], sizes = [2, 32], strides = [1, 1]} : vector<2x96xf32> to vector<2x32xf32>
    %124 = vector.extract_strided_slice %121 {offsets = [0, 0], sizes = [2, 32], strides = [1, 1]} : vector<2x96xf32> to vector<2x32xf32>
    %125 = arith.addf %123, %124 : vector<2x32xf32>
    %126 = arith.negf %125 : vector<2x32xf32>
    %127 = math.exp %126 : vector<2x32xf32>
    %cst_32 = arith.constant 1.000000e+00 : f32
    %128 = vector.broadcast %cst_32 : f32 to vector<2x32xf32>
    %129 = arith.addf %128, %127 : vector<2x32xf32>
    %130 = arith.divf %128, %129 : vector<2x32xf32>
    %131 = vector.extract_strided_slice %122 {offsets = [0, 32], sizes = [2, 32], strides = [1, 1]} : vector<2x96xf32> to vector<2x32xf32>
    %132 = vector.extract_strided_slice %121 {offsets = [0, 32], sizes = [2, 32], strides = [1, 1]} : vector<2x96xf32> to vector<2x32xf32>
    %133 = arith.addf %131, %132 : vector<2x32xf32>
    %134 = arith.negf %133 : vector<2x32xf32>
    %135 = math.exp %134 : vector<2x32xf32>
    %cst_33 = arith.constant 1.000000e+00 : f32
    %136 = vector.broadcast %cst_33 : f32 to vector<2x32xf32>
    %137 = arith.addf %136, %135 : vector<2x32xf32>
    %138 = arith.divf %136, %137 : vector<2x32xf32>
    %139 = vector.extract_strided_slice %122 {offsets = [0, 64], sizes = [2, 32], strides = [1, 1]} : vector<2x96xf32> to vector<2x32xf32>
    %140 = vector.extract_strided_slice %121 {offsets = [0, 64], sizes = [2, 32], strides = [1, 1]} : vector<2x96xf32> to vector<2x32xf32>
    %141 = arith.addf %140, %49 : vector<2x32xf32>
    %142 = arith.mulf %130, %141 : vector<2x32xf32>
    %143 = arith.addf %139, %142 : vector<2x32xf32>
    %144 = math.tanh %143 : vector<2x32xf32>
    %cst_34 = arith.constant 1.000000e+00 : f32
    %145 = vector.broadcast %cst_34 : f32 to vector<2x32xf32>
    %146 = arith.subf %145, %138 : vector<2x32xf32>
    %147 = arith.mulf %146, %144 : vector<2x32xf32>
    %148 = arith.mulf %138, %120 : vector<2x32xf32>
    %149 = arith.addf %147, %148 : vector<2x32xf32>
    %150 = vector.extract_strided_slice %40 {offsets = [4, 0], sizes = [2, 32], strides = [1, 1]} : vector<16x32xf32> to vector<2x32xf32>
    %151 = arith.mulf %150, %149 : vector<2x32xf32>
    %cst_35 = arith.constant 1.000000e+00 : f32
    %152 = vector.broadcast %cst_35 : f32 to vector<2x32xf32>
    %153 = arith.subf %152, %150 : vector<2x32xf32>
    %154 = arith.mulf %153, %120 : vector<2x32xf32>
    %155 = arith.addf %151, %154 : vector<2x32xf32>
    %cst_36 = arith.constant dense<0.000000e+00> : vector<2x96xf32>
    %156 = tpu.matmul %155, %42, %cst_36 {dimension_numbers = #tpu.dot_dimension_numbers<[1], [0], [0], [1], [0, 0, 1, 1], [], []>} : vector<2x32xf32>, vector<32x96xf32>, vector<2x96xf32> -> vector<2x96xf32>
    %157 = vector.extract_strided_slice %47 {offsets = [6, 0], sizes = [2, 96], strides = [1, 1]} : vector<16x96xf32> to vector<2x96xf32>
    %158 = vector.extract_strided_slice %157 {offsets = [0, 0], sizes = [2, 32], strides = [1, 1]} : vector<2x96xf32> to vector<2x32xf32>
    %159 = vector.extract_strided_slice %156 {offsets = [0, 0], sizes = [2, 32], strides = [1, 1]} : vector<2x96xf32> to vector<2x32xf32>
    %160 = arith.addf %158, %159 : vector<2x32xf32>
    %161 = arith.negf %160 : vector<2x32xf32>
    %162 = math.exp %161 : vector<2x32xf32>
    %cst_37 = arith.constant 1.000000e+00 : f32
    %163 = vector.broadcast %cst_37 : f32 to vector<2x32xf32>
    %164 = arith.addf %163, %162 : vector<2x32xf32>
    %165 = arith.divf %163, %164 : vector<2x32xf32>
    %166 = vector.extract_strided_slice %157 {offsets = [0, 32], sizes = [2, 32], strides = [1, 1]} : vector<2x96xf32> to vector<2x32xf32>
    %167 = vector.extract_strided_slice %156 {offsets = [0, 32], sizes = [2, 32], strides = [1, 1]} : vector<2x96xf32> to vector<2x32xf32>
    %168 = arith.addf %166, %167 : vector<2x32xf32>
    %169 = arith.negf %168 : vector<2x32xf32>
    %170 = math.exp %169 : vector<2x32xf32>
    %cst_38 = arith.constant 1.000000e+00 : f32
    %171 = vector.broadcast %cst_38 : f32 to vector<2x32xf32>
    %172 = arith.addf %171, %170 : vector<2x32xf32>
    %173 = arith.divf %171, %172 : vector<2x32xf32>
    %174 = vector.extract_strided_slice %157 {offsets = [0, 64], sizes = [2, 32], strides = [1, 1]} : vector<2x96xf32> to vector<2x32xf32>
    %175 = vector.extract_strided_slice %156 {offsets = [0, 64], sizes = [2, 32], strides = [1, 1]} : vector<2x96xf32> to vector<2x32xf32>
    %176 = arith.addf %175, %49 : vector<2x32xf32>
    %177 = arith.mulf %165, %176 : vector<2x32xf32>
    %178 = arith.addf %174, %177 : vector<2x32xf32>
    %179 = math.tanh %178 : vector<2x32xf32>
    %cst_39 = arith.constant 1.000000e+00 : f32
    %180 = vector.broadcast %cst_39 : f32 to vector<2x32xf32>
    %181 = arith.subf %180, %173 : vector<2x32xf32>
    %182 = arith.mulf %181, %179 : vector<2x32xf32>
    %183 = arith.mulf %173, %155 : vector<2x32xf32>
    %184 = arith.addf %182, %183 : vector<2x32xf32>
    %185 = vector.extract_strided_slice %40 {offsets = [6, 0], sizes = [2, 32], strides = [1, 1]} : vector<16x32xf32> to vector<2x32xf32>
    %186 = arith.mulf %185, %184 : vector<2x32xf32>
    %cst_40 = arith.constant 1.000000e+00 : f32
    %187 = vector.broadcast %cst_40 : f32 to vector<2x32xf32>
    %188 = arith.subf %187, %185 : vector<2x32xf32>
    %189 = arith.mulf %188, %155 : vector<2x32xf32>
    %190 = arith.addf %186, %189 : vector<2x32xf32>
    %cst_41 = arith.constant dense<0.000000e+00> : vector<2x96xf32>
    %191 = tpu.matmul %190, %42, %cst_41 {dimension_numbers = #tpu.dot_dimension_numbers<[1], [0], [0], [1], [0, 0, 1, 1], [], []>} : vector<2x32xf32>, vector<32x96xf32>, vector<2x96xf32> -> vector<2x96xf32>
    %192 = vector.extract_strided_slice %47 {offsets = [8, 0], sizes = [2, 96], strides = [1, 1]} : vector<16x96xf32> to vector<2x96xf32>
    %193 = vector.extract_strided_slice %192 {offsets = [0, 0], sizes = [2, 32], strides = [1, 1]} : vector<2x96xf32> to vector<2x32xf32>
    %194 = vector.extract_strided_slice %191 {offsets = [0, 0], sizes = [2, 32], strides = [1, 1]} : vector<2x96xf32> to vector<2x32xf32>
    %195 = arith.addf %193, %194 : vector<2x32xf32>
    %196 = arith.negf %195 : vector<2x32xf32>
    %197 = math.exp %196 : vector<2x32xf32>
    %cst_42 = arith.constant 1.000000e+00 : f32
    %198 = vector.broadcast %cst_42 : f32 to vector<2x32xf32>
    %199 = arith.addf %198, %197 : vector<2x32xf32>
    %200 = arith.divf %198, %199 : vector<2x32xf32>
    %201 = vector.extract_strided_slice %192 {offsets = [0, 32], sizes = [2, 32], strides = [1, 1]} : vector<2x96xf32> to vector<2x32xf32>
    %202 = vector.extract_strided_slice %191 {offsets = [0, 32], sizes = [2, 32], strides = [1, 1]} : vector<2x96xf32> to vector<2x32xf32>
    %203 = arith.addf %201, %202 : vector<2x32xf32>
    %204 = arith.negf %203 : vector<2x32xf32>
    %205 = math.exp %204 : vector<2x32xf32>
    %cst_43 = arith.constant 1.000000e+00 : f32
    %206 = vector.broadcast %cst_43 : f32 to vector<2x32xf32>
    %207 = arith.addf %206, %205 : vector<2x32xf32>
    %208 = arith.divf %206, %207 : vector<2x32xf32>
    %209 = vector.extract_strided_slice %192 {offsets = [0, 64], sizes = [2, 32], strides = [1, 1]} : vector<2x96xf32> to vector<2x32xf32>
    %210 = vector.extract_strided_slice %191 {offsets = [0, 64], sizes = [2, 32], strides = [1, 1]} : vector<2x96xf32> to vector<2x32xf32>
    %211 = arith.addf %210, %49 : vector<2x32xf32>
    %212 = arith.mulf %200, %211 : vector<2x32xf32>
    %213 = arith.addf %209, %212 : vector<2x32xf32>
    %214 = math.tanh %213 : vector<2x32xf32>
    %cst_44 = arith.constant 1.000000e+00 : f32
    %215 = vector.broadcast %cst_44 : f32 to vector<2x32xf32>
    %216 = arith.subf %215, %208 : vector<2x32xf32>
    %217 = arith.mulf %216, %214 : vector<2x32xf32>
    %218 = arith.mulf %208, %190 : vector<2x32xf32>
    %219 = arith.addf %217, %218 : vector<2x32xf32>
    %220 = vector.extract_strided_slice %40 {offsets = [8, 0], sizes = [2, 32], strides = [1, 1]} : vector<16x32xf32> to vector<2x32xf32>
    %221 = arith.mulf %220, %219 : vector<2x32xf32>
    %cst_45 = arith.constant 1.000000e+00 : f32
    %222 = vector.broadcast %cst_45 : f32 to vector<2x32xf32>
    %223 = arith.subf %222, %220 : vector<2x32xf32>
    %224 = arith.mulf %223, %190 : vector<2x32xf32>
    %225 = arith.addf %221, %224 : vector<2x32xf32>
    %cst_46 = arith.constant dense<0.000000e+00> : vector<2x96xf32>
    %226 = tpu.matmul %225, %42, %cst_46 {dimension_numbers = #tpu.dot_dimension_numbers<[1], [0], [0], [1], [0, 0, 1, 1], [], []>} : vector<2x32xf32>, vector<32x96xf32>, vector<2x96xf32> -> vector<2x96xf32>
    %227 = vector.extract_strided_slice %47 {offsets = [10, 0], sizes = [2, 96], strides = [1, 1]} : vector<16x96xf32> to vector<2x96xf32>
    %228 = vector.extract_strided_slice %227 {offsets = [0, 0], sizes = [2, 32], strides = [1, 1]} : vector<2x96xf32> to vector<2x32xf32>
    %229 = vector.extract_strided_slice %226 {offsets = [0, 0], sizes = [2, 32], strides = [1, 1]} : vector<2x96xf32> to vector<2x32xf32>
    %230 = arith.addf %228, %229 : vector<2x32xf32>
    %231 = arith.negf %230 : vector<2x32xf32>
    %232 = math.exp %231 : vector<2x32xf32>
    %cst_47 = arith.constant 1.000000e+00 : f32
    %233 = vector.broadcast %cst_47 : f32 to vector<2x32xf32>
    %234 = arith.addf %233, %232 : vector<2x32xf32>
    %235 = arith.divf %233, %234 : vector<2x32xf32>
    %236 = vector.extract_strided_slice %227 {offsets = [0, 32], sizes = [2, 32], strides = [1, 1]} : vector<2x96xf32> to vector<2x32xf32>
    %237 = vector.extract_strided_slice %226 {offsets = [0, 32], sizes = [2, 32], strides = [1, 1]} : vector<2x96xf32> to vector<2x32xf32>
    %238 = arith.addf %236, %237 : vector<2x32xf32>
    %239 = arith.negf %238 : vector<2x32xf32>
    %240 = math.exp %239 : vector<2x32xf32>
    %cst_48 = arith.constant 1.000000e+00 : f32
    %241 = vector.broadcast %cst_48 : f32 to vector<2x32xf32>
    %242 = arith.addf %241, %240 : vector<2x32xf32>
    %243 = arith.divf %241, %242 : vector<2x32xf32>
    %244 = vector.extract_strided_slice %227 {offsets = [0, 64], sizes = [2, 32], strides = [1, 1]} : vector<2x96xf32> to vector<2x32xf32>
    %245 = vector.extract_strided_slice %226 {offsets = [0, 64], sizes = [2, 32], strides = [1, 1]} : vector<2x96xf32> to vector<2x32xf32>
    %246 = arith.addf %245, %49 : vector<2x32xf32>
    %247 = arith.mulf %235, %246 : vector<2x32xf32>
    %248 = arith.addf %244, %247 : vector<2x32xf32>
    %249 = math.tanh %248 : vector<2x32xf32>
    %cst_49 = arith.constant 1.000000e+00 : f32
    %250 = vector.broadcast %cst_49 : f32 to vector<2x32xf32>
    %251 = arith.subf %250, %243 : vector<2x32xf32>
    %252 = arith.mulf %251, %249 : vector<2x32xf32>
    %253 = arith.mulf %243, %225 : vector<2x32xf32>
    %254 = arith.addf %252, %253 : vector<2x32xf32>
    %255 = vector.extract_strided_slice %40 {offsets = [10, 0], sizes = [2, 32], strides = [1, 1]} : vector<16x32xf32> to vector<2x32xf32>
    %256 = arith.mulf %255, %254 : vector<2x32xf32>
    %cst_50 = arith.constant 1.000000e+00 : f32
    %257 = vector.broadcast %cst_50 : f32 to vector<2x32xf32>
    %258 = arith.subf %257, %255 : vector<2x32xf32>
    %259 = arith.mulf %258, %225 : vector<2x32xf32>
    %260 = arith.addf %256, %259 : vector<2x32xf32>
    %cst_51 = arith.constant dense<0.000000e+00> : vector<2x96xf32>
    %261 = tpu.matmul %260, %42, %cst_51 {dimension_numbers = #tpu.dot_dimension_numbers<[1], [0], [0], [1], [0, 0, 1, 1], [], []>} : vector<2x32xf32>, vector<32x96xf32>, vector<2x96xf32> -> vector<2x96xf32>
    %262 = vector.extract_strided_slice %47 {offsets = [12, 0], sizes = [2, 96], strides = [1, 1]} : vector<16x96xf32> to vector<2x96xf32>
    %263 = vector.extract_strided_slice %262 {offsets = [0, 0], sizes = [2, 32], strides = [1, 1]} : vector<2x96xf32> to vector<2x32xf32>
    %264 = vector.extract_strided_slice %261 {offsets = [0, 0], sizes = [2, 32], strides = [1, 1]} : vector<2x96xf32> to vector<2x32xf32>
    %265 = arith.addf %263, %264 : vector<2x32xf32>
    %266 = arith.negf %265 : vector<2x32xf32>
    %267 = math.exp %266 : vector<2x32xf32>
    %cst_52 = arith.constant 1.000000e+00 : f32
    %268 = vector.broadcast %cst_52 : f32 to vector<2x32xf32>
    %269 = arith.addf %268, %267 : vector<2x32xf32>
    %270 = arith.divf %268, %269 : vector<2x32xf32>
    %271 = vector.extract_strided_slice %262 {offsets = [0, 32], sizes = [2, 32], strides = [1, 1]} : vector<2x96xf32> to vector<2x32xf32>
    %272 = vector.extract_strided_slice %261 {offsets = [0, 32], sizes = [2, 32], strides = [1, 1]} : vector<2x96xf32> to vector<2x32xf32>
    %273 = arith.addf %271, %272 : vector<2x32xf32>
    %274 = arith.negf %273 : vector<2x32xf32>
    %275 = math.exp %274 : vector<2x32xf32>
    %cst_53 = arith.constant 1.000000e+00 : f32
    %276 = vector.broadcast %cst_53 : f32 to vector<2x32xf32>
    %277 = arith.addf %276, %275 : vector<2x32xf32>
    %278 = arith.divf %276, %277 : vector<2x32xf32>
    %279 = vector.extract_strided_slice %262 {offsets = [0, 64], sizes = [2, 32], strides = [1, 1]} : vector<2x96xf32> to vector<2x32xf32>
    %280 = vector.extract_strided_slice %261 {offsets = [0, 64], sizes = [2, 32], strides = [1, 1]} : vector<2x96xf32> to vector<2x32xf32>
    %281 = arith.addf %280, %49 : vector<2x32xf32>
    %282 = arith.mulf %270, %281 : vector<2x32xf32>
    %283 = arith.addf %279, %282 : vector<2x32xf32>
    %284 = math.tanh %283 : vector<2x32xf32>
    %cst_54 = arith.constant 1.000000e+00 : f32
    %285 = vector.broadcast %cst_54 : f32 to vector<2x32xf32>
    %286 = arith.subf %285, %278 : vector<2x32xf32>
    %287 = arith.mulf %286, %284 : vector<2x32xf32>
    %288 = arith.mulf %278, %260 : vector<2x32xf32>
    %289 = arith.addf %287, %288 : vector<2x32xf32>
    %290 = vector.extract_strided_slice %40 {offsets = [12, 0], sizes = [2, 32], strides = [1, 1]} : vector<16x32xf32> to vector<2x32xf32>
    %291 = arith.mulf %290, %289 : vector<2x32xf32>
    %cst_55 = arith.constant 1.000000e+00 : f32
    %292 = vector.broadcast %cst_55 : f32 to vector<2x32xf32>
    %293 = arith.subf %292, %290 : vector<2x32xf32>
    %294 = arith.mulf %293, %260 : vector<2x32xf32>
    %295 = arith.addf %291, %294 : vector<2x32xf32>
    %cst_56 = arith.constant dense<0.000000e+00> : vector<2x96xf32>
    %296 = tpu.matmul %295, %42, %cst_56 {dimension_numbers = #tpu.dot_dimension_numbers<[1], [0], [0], [1], [0, 0, 1, 1], [], []>} : vector<2x32xf32>, vector<32x96xf32>, vector<2x96xf32> -> vector<2x96xf32>
    %297 = vector.extract_strided_slice %47 {offsets = [14, 0], sizes = [2, 96], strides = [1, 1]} : vector<16x96xf32> to vector<2x96xf32>
    %298 = vector.extract_strided_slice %297 {offsets = [0, 0], sizes = [2, 32], strides = [1, 1]} : vector<2x96xf32> to vector<2x32xf32>
    %299 = vector.extract_strided_slice %296 {offsets = [0, 0], sizes = [2, 32], strides = [1, 1]} : vector<2x96xf32> to vector<2x32xf32>
    %300 = arith.addf %298, %299 : vector<2x32xf32>
    %301 = arith.negf %300 : vector<2x32xf32>
    %302 = math.exp %301 : vector<2x32xf32>
    %cst_57 = arith.constant 1.000000e+00 : f32
    %303 = vector.broadcast %cst_57 : f32 to vector<2x32xf32>
    %304 = arith.addf %303, %302 : vector<2x32xf32>
    %305 = arith.divf %303, %304 : vector<2x32xf32>
    %306 = vector.extract_strided_slice %297 {offsets = [0, 32], sizes = [2, 32], strides = [1, 1]} : vector<2x96xf32> to vector<2x32xf32>
    %307 = vector.extract_strided_slice %296 {offsets = [0, 32], sizes = [2, 32], strides = [1, 1]} : vector<2x96xf32> to vector<2x32xf32>
    %308 = arith.addf %306, %307 : vector<2x32xf32>
    %309 = arith.negf %308 : vector<2x32xf32>
    %310 = math.exp %309 : vector<2x32xf32>
    %cst_58 = arith.constant 1.000000e+00 : f32
    %311 = vector.broadcast %cst_58 : f32 to vector<2x32xf32>
    %312 = arith.addf %311, %310 : vector<2x32xf32>
    %313 = arith.divf %311, %312 : vector<2x32xf32>
    %314 = vector.extract_strided_slice %297 {offsets = [0, 64], sizes = [2, 32], strides = [1, 1]} : vector<2x96xf32> to vector<2x32xf32>
    %315 = vector.extract_strided_slice %296 {offsets = [0, 64], sizes = [2, 32], strides = [1, 1]} : vector<2x96xf32> to vector<2x32xf32>
    %316 = arith.addf %315, %49 : vector<2x32xf32>
    %317 = arith.mulf %305, %316 : vector<2x32xf32>
    %318 = arith.addf %314, %317 : vector<2x32xf32>
    %319 = math.tanh %318 : vector<2x32xf32>
    %cst_59 = arith.constant 1.000000e+00 : f32
    %320 = vector.broadcast %cst_59 : f32 to vector<2x32xf32>
    %321 = arith.subf %320, %313 : vector<2x32xf32>
    %322 = arith.mulf %321, %319 : vector<2x32xf32>
    %323 = arith.mulf %313, %295 : vector<2x32xf32>
    %324 = arith.addf %322, %323 : vector<2x32xf32>
    %325 = vector.extract_strided_slice %40 {offsets = [14, 0], sizes = [2, 32], strides = [1, 1]} : vector<16x32xf32> to vector<2x32xf32>
    %326 = arith.mulf %325, %324 : vector<2x32xf32>
    %cst_60 = arith.constant 1.000000e+00 : f32
    %327 = vector.broadcast %cst_60 : f32 to vector<2x32xf32>
    %328 = arith.subf %327, %325 : vector<2x32xf32>
    %329 = arith.mulf %328, %295 : vector<2x32xf32>
    %330 = arith.addf %326, %329 : vector<2x32xf32>
    %331 = tpu.concatenate %81, %116, %151, %186, %221, %256, %291, %326 in 0 : vector<2x32xf32>, vector<2x32xf32>, vector<2x32xf32>, vector<2x32xf32>, vector<2x32xf32>, vector<2x32xf32>, vector<2x32xf32>, vector<2x32xf32> -> vector<16x32xf32>
    %c176 = arith.constant 176 : index
    %c0_61 = arith.constant 0 : index
    %332 = vector.load %arg1[%c176, %c0_61] : memref<320x128xf32, #tpu.memory_space<vmem>>, vector<32x96xf32>
    %c208 = arith.constant 208 : index
    %c0_62 = arith.constant 0 : index
    %333 = vector.load %arg1[%c208, %c0_62] : memref<320x128xf32, #tpu.memory_space<vmem>>, vector<32x96xf32>
    %c240 = arith.constant 240 : index
    %c0_63 = arith.constant 0 : index
    %334 = vector.load %arg1[%c240, %c0_63] : memref<320x128xf32, #tpu.memory_space<vmem>>, vector<1x96xf32>
    %c248 = arith.constant 248 : index
    %c0_64 = arith.constant 0 : index
    %335 = vector.load %arg1[%c248, %c0_64] : memref<320x128xf32, #tpu.memory_space<vmem>>, vector<1x32xf32>
    %cst_65 = arith.constant dense<0.000000e+00> : vector<16x96xf32>
    %336 = tpu.matmul %331, %332, %cst_65 {dimension_numbers = #tpu.dot_dimension_numbers<[1], [0], [0], [1], [0, 0, 1, 1], [], []>} : vector<16x32xf32>, vector<32x96xf32>, vector<16x96xf32> -> vector<16x96xf32>
    %337 = vector.broadcast %334 : vector<1x96xf32> to vector<16x96xf32>
    %338 = arith.addf %336, %337 : vector<16x96xf32>
    %339 = vector.shape_cast %335 : vector<1x32xf32> to vector<1x32xf32>
    %340 = vector.broadcast %339 : vector<1x32xf32> to vector<2x32xf32>
    %cst_66 = arith.constant 0.000000e+00 : f32
    %341 = vector.broadcast %cst_66 : f32 to vector<2x32xf32>
    %cst_67 = arith.constant dense<0.000000e+00> : vector<2x96xf32>
    %342 = tpu.matmul %341, %333, %cst_67 {dimension_numbers = #tpu.dot_dimension_numbers<[1], [0], [0], [1], [0, 0, 1, 1], [], []>} : vector<2x32xf32>, vector<32x96xf32>, vector<2x96xf32> -> vector<2x96xf32>
    %343 = vector.extract_strided_slice %338 {offsets = [0, 0], sizes = [2, 96], strides = [1, 1]} : vector<16x96xf32> to vector<2x96xf32>
    %344 = vector.extract_strided_slice %343 {offsets = [0, 0], sizes = [2, 32], strides = [1, 1]} : vector<2x96xf32> to vector<2x32xf32>
    %345 = vector.extract_strided_slice %342 {offsets = [0, 0], sizes = [2, 32], strides = [1, 1]} : vector<2x96xf32> to vector<2x32xf32>
    %346 = arith.addf %344, %345 : vector<2x32xf32>
    %347 = arith.negf %346 : vector<2x32xf32>
    %348 = math.exp %347 : vector<2x32xf32>
    %cst_68 = arith.constant 1.000000e+00 : f32
    %349 = vector.broadcast %cst_68 : f32 to vector<2x32xf32>
    %350 = arith.addf %349, %348 : vector<2x32xf32>
    %351 = arith.divf %349, %350 : vector<2x32xf32>
    %352 = vector.extract_strided_slice %343 {offsets = [0, 32], sizes = [2, 32], strides = [1, 1]} : vector<2x96xf32> to vector<2x32xf32>
    %353 = vector.extract_strided_slice %342 {offsets = [0, 32], sizes = [2, 32], strides = [1, 1]} : vector<2x96xf32> to vector<2x32xf32>
    %354 = arith.addf %352, %353 : vector<2x32xf32>
    %355 = arith.negf %354 : vector<2x32xf32>
    %356 = math.exp %355 : vector<2x32xf32>
    %cst_69 = arith.constant 1.000000e+00 : f32
    %357 = vector.broadcast %cst_69 : f32 to vector<2x32xf32>
    %358 = arith.addf %357, %356 : vector<2x32xf32>
    %359 = arith.divf %357, %358 : vector<2x32xf32>
    %360 = vector.extract_strided_slice %343 {offsets = [0, 64], sizes = [2, 32], strides = [1, 1]} : vector<2x96xf32> to vector<2x32xf32>
    %361 = vector.extract_strided_slice %342 {offsets = [0, 64], sizes = [2, 32], strides = [1, 1]} : vector<2x96xf32> to vector<2x32xf32>
    %362 = arith.addf %361, %340 : vector<2x32xf32>
    %363 = arith.mulf %351, %362 : vector<2x32xf32>
    %364 = arith.addf %360, %363 : vector<2x32xf32>
    %365 = math.tanh %364 : vector<2x32xf32>
    %cst_70 = arith.constant 1.000000e+00 : f32
    %366 = vector.broadcast %cst_70 : f32 to vector<2x32xf32>
    %367 = arith.subf %366, %359 : vector<2x32xf32>
    %368 = arith.mulf %367, %365 : vector<2x32xf32>
    %369 = arith.mulf %359, %341 : vector<2x32xf32>
    %370 = arith.addf %368, %369 : vector<2x32xf32>
    %371 = vector.extract_strided_slice %40 {offsets = [0, 0], sizes = [2, 32], strides = [1, 1]} : vector<16x32xf32> to vector<2x32xf32>
    %372 = arith.mulf %371, %370 : vector<2x32xf32>
    %cst_71 = arith.constant 1.000000e+00 : f32
    %373 = vector.broadcast %cst_71 : f32 to vector<2x32xf32>
    %374 = arith.subf %373, %371 : vector<2x32xf32>
    %375 = arith.mulf %374, %341 : vector<2x32xf32>
    %376 = arith.addf %372, %375 : vector<2x32xf32>
    %cst_72 = arith.constant dense<0.000000e+00> : vector<2x96xf32>
    %377 = tpu.matmul %376, %333, %cst_72 {dimension_numbers = #tpu.dot_dimension_numbers<[1], [0], [0], [1], [0, 0, 1, 1], [], []>} : vector<2x32xf32>, vector<32x96xf32>, vector<2x96xf32> -> vector<2x96xf32>
    %378 = vector.extract_strided_slice %338 {offsets = [2, 0], sizes = [2, 96], strides = [1, 1]} : vector<16x96xf32> to vector<2x96xf32>
    %379 = vector.extract_strided_slice %378 {offsets = [0, 0], sizes = [2, 32], strides = [1, 1]} : vector<2x96xf32> to vector<2x32xf32>
    %380 = vector.extract_strided_slice %377 {offsets = [0, 0], sizes = [2, 32], strides = [1, 1]} : vector<2x96xf32> to vector<2x32xf32>
    %381 = arith.addf %379, %380 : vector<2x32xf32>
    %382 = arith.negf %381 : vector<2x32xf32>
    %383 = math.exp %382 : vector<2x32xf32>
    %cst_73 = arith.constant 1.000000e+00 : f32
    %384 = vector.broadcast %cst_73 : f32 to vector<2x32xf32>
    %385 = arith.addf %384, %383 : vector<2x32xf32>
    %386 = arith.divf %384, %385 : vector<2x32xf32>
    %387 = vector.extract_strided_slice %378 {offsets = [0, 32], sizes = [2, 32], strides = [1, 1]} : vector<2x96xf32> to vector<2x32xf32>
    %388 = vector.extract_strided_slice %377 {offsets = [0, 32], sizes = [2, 32], strides = [1, 1]} : vector<2x96xf32> to vector<2x32xf32>
    %389 = arith.addf %387, %388 : vector<2x32xf32>
    %390 = arith.negf %389 : vector<2x32xf32>
    %391 = math.exp %390 : vector<2x32xf32>
    %cst_74 = arith.constant 1.000000e+00 : f32
    %392 = vector.broadcast %cst_74 : f32 to vector<2x32xf32>
    %393 = arith.addf %392, %391 : vector<2x32xf32>
    %394 = arith.divf %392, %393 : vector<2x32xf32>
    %395 = vector.extract_strided_slice %378 {offsets = [0, 64], sizes = [2, 32], strides = [1, 1]} : vector<2x96xf32> to vector<2x32xf32>
    %396 = vector.extract_strided_slice %377 {offsets = [0, 64], sizes = [2, 32], strides = [1, 1]} : vector<2x96xf32> to vector<2x32xf32>
    %397 = arith.addf %396, %340 : vector<2x32xf32>
    %398 = arith.mulf %386, %397 : vector<2x32xf32>
    %399 = arith.addf %395, %398 : vector<2x32xf32>
    %400 = math.tanh %399 : vector<2x32xf32>
    %cst_75 = arith.constant 1.000000e+00 : f32
    %401 = vector.broadcast %cst_75 : f32 to vector<2x32xf32>
    %402 = arith.subf %401, %394 : vector<2x32xf32>
    %403 = arith.mulf %402, %400 : vector<2x32xf32>
    %404 = arith.mulf %394, %376 : vector<2x32xf32>
    %405 = arith.addf %403, %404 : vector<2x32xf32>
    %406 = vector.extract_strided_slice %40 {offsets = [2, 0], sizes = [2, 32], strides = [1, 1]} : vector<16x32xf32> to vector<2x32xf32>
    %407 = arith.mulf %406, %405 : vector<2x32xf32>
    %cst_76 = arith.constant 1.000000e+00 : f32
    %408 = vector.broadcast %cst_76 : f32 to vector<2x32xf32>
    %409 = arith.subf %408, %406 : vector<2x32xf32>
    %410 = arith.mulf %409, %376 : vector<2x32xf32>
    %411 = arith.addf %407, %410 : vector<2x32xf32>
    %cst_77 = arith.constant dense<0.000000e+00> : vector<2x96xf32>
    %412 = tpu.matmul %411, %333, %cst_77 {dimension_numbers = #tpu.dot_dimension_numbers<[1], [0], [0], [1], [0, 0, 1, 1], [], []>} : vector<2x32xf32>, vector<32x96xf32>, vector<2x96xf32> -> vector<2x96xf32>
    %413 = vector.extract_strided_slice %338 {offsets = [4, 0], sizes = [2, 96], strides = [1, 1]} : vector<16x96xf32> to vector<2x96xf32>
    %414 = vector.extract_strided_slice %413 {offsets = [0, 0], sizes = [2, 32], strides = [1, 1]} : vector<2x96xf32> to vector<2x32xf32>
    %415 = vector.extract_strided_slice %412 {offsets = [0, 0], sizes = [2, 32], strides = [1, 1]} : vector<2x96xf32> to vector<2x32xf32>
    %416 = arith.addf %414, %415 : vector<2x32xf32>
    %417 = arith.negf %416 : vector<2x32xf32>
    %418 = math.exp %417 : vector<2x32xf32>
    %cst_78 = arith.constant 1.000000e+00 : f32
    %419 = vector.broadcast %cst_78 : f32 to vector<2x32xf32>
    %420 = arith.addf %419, %418 : vector<2x32xf32>
    %421 = arith.divf %419, %420 : vector<2x32xf32>
    %422 = vector.extract_strided_slice %413 {offsets = [0, 32], sizes = [2, 32], strides = [1, 1]} : vector<2x96xf32> to vector<2x32xf32>
    %423 = vector.extract_strided_slice %412 {offsets = [0, 32], sizes = [2, 32], strides = [1, 1]} : vector<2x96xf32> to vector<2x32xf32>
    %424 = arith.addf %422, %423 : vector<2x32xf32>
    %425 = arith.negf %424 : vector<2x32xf32>
    %426 = math.exp %425 : vector<2x32xf32>
    %cst_79 = arith.constant 1.000000e+00 : f32
    %427 = vector.broadcast %cst_79 : f32 to vector<2x32xf32>
    %428 = arith.addf %427, %426 : vector<2x32xf32>
    %429 = arith.divf %427, %428 : vector<2x32xf32>
    %430 = vector.extract_strided_slice %413 {offsets = [0, 64], sizes = [2, 32], strides = [1, 1]} : vector<2x96xf32> to vector<2x32xf32>
    %431 = vector.extract_strided_slice %412 {offsets = [0, 64], sizes = [2, 32], strides = [1, 1]} : vector<2x96xf32> to vector<2x32xf32>
    %432 = arith.addf %431, %340 : vector<2x32xf32>
    %433 = arith.mulf %421, %432 : vector<2x32xf32>
    %434 = arith.addf %430, %433 : vector<2x32xf32>
    %435 = math.tanh %434 : vector<2x32xf32>
    %cst_80 = arith.constant 1.000000e+00 : f32
    %436 = vector.broadcast %cst_80 : f32 to vector<2x32xf32>
    %437 = arith.subf %436, %429 : vector<2x32xf32>
    %438 = arith.mulf %437, %435 : vector<2x32xf32>
    %439 = arith.mulf %429, %411 : vector<2x32xf32>
    %440 = arith.addf %438, %439 : vector<2x32xf32>
    %441 = vector.extract_strided_slice %40 {offsets = [4, 0], sizes = [2, 32], strides = [1, 1]} : vector<16x32xf32> to vector<2x32xf32>
    %442 = arith.mulf %441, %440 : vector<2x32xf32>
    %cst_81 = arith.constant 1.000000e+00 : f32
    %443 = vector.broadcast %cst_81 : f32 to vector<2x32xf32>
    %444 = arith.subf %443, %441 : vector<2x32xf32>
    %445 = arith.mulf %444, %411 : vector<2x32xf32>
    %446 = arith.addf %442, %445 : vector<2x32xf32>
    %cst_82 = arith.constant dense<0.000000e+00> : vector<2x96xf32>
    %447 = tpu.matmul %446, %333, %cst_82 {dimension_numbers = #tpu.dot_dimension_numbers<[1], [0], [0], [1], [0, 0, 1, 1], [], []>} : vector<2x32xf32>, vector<32x96xf32>, vector<2x96xf32> -> vector<2x96xf32>
    %448 = vector.extract_strided_slice %338 {offsets = [6, 0], sizes = [2, 96], strides = [1, 1]} : vector<16x96xf32> to vector<2x96xf32>
    %449 = vector.extract_strided_slice %448 {offsets = [0, 0], sizes = [2, 32], strides = [1, 1]} : vector<2x96xf32> to vector<2x32xf32>
    %450 = vector.extract_strided_slice %447 {offsets = [0, 0], sizes = [2, 32], strides = [1, 1]} : vector<2x96xf32> to vector<2x32xf32>
    %451 = arith.addf %449, %450 : vector<2x32xf32>
    %452 = arith.negf %451 : vector<2x32xf32>
    %453 = math.exp %452 : vector<2x32xf32>
    %cst_83 = arith.constant 1.000000e+00 : f32
    %454 = vector.broadcast %cst_83 : f32 to vector<2x32xf32>
    %455 = arith.addf %454, %453 : vector<2x32xf32>
    %456 = arith.divf %454, %455 : vector<2x32xf32>
    %457 = vector.extract_strided_slice %448 {offsets = [0, 32], sizes = [2, 32], strides = [1, 1]} : vector<2x96xf32> to vector<2x32xf32>
    %458 = vector.extract_strided_slice %447 {offsets = [0, 32], sizes = [2, 32], strides = [1, 1]} : vector<2x96xf32> to vector<2x32xf32>
    %459 = arith.addf %457, %458 : vector<2x32xf32>
    %460 = arith.negf %459 : vector<2x32xf32>
    %461 = math.exp %460 : vector<2x32xf32>
    %cst_84 = arith.constant 1.000000e+00 : f32
    %462 = vector.broadcast %cst_84 : f32 to vector<2x32xf32>
    %463 = arith.addf %462, %461 : vector<2x32xf32>
    %464 = arith.divf %462, %463 : vector<2x32xf32>
    %465 = vector.extract_strided_slice %448 {offsets = [0, 64], sizes = [2, 32], strides = [1, 1]} : vector<2x96xf32> to vector<2x32xf32>
    %466 = vector.extract_strided_slice %447 {offsets = [0, 64], sizes = [2, 32], strides = [1, 1]} : vector<2x96xf32> to vector<2x32xf32>
    %467 = arith.addf %466, %340 : vector<2x32xf32>
    %468 = arith.mulf %456, %467 : vector<2x32xf32>
    %469 = arith.addf %465, %468 : vector<2x32xf32>
    %470 = math.tanh %469 : vector<2x32xf32>
    %cst_85 = arith.constant 1.000000e+00 : f32
    %471 = vector.broadcast %cst_85 : f32 to vector<2x32xf32>
    %472 = arith.subf %471, %464 : vector<2x32xf32>
    %473 = arith.mulf %472, %470 : vector<2x32xf32>
    %474 = arith.mulf %464, %446 : vector<2x32xf32>
    %475 = arith.addf %473, %474 : vector<2x32xf32>
    %476 = vector.extract_strided_slice %40 {offsets = [6, 0], sizes = [2, 32], strides = [1, 1]} : vector<16x32xf32> to vector<2x32xf32>
    %477 = arith.mulf %476, %475 : vector<2x32xf32>
    %cst_86 = arith.constant 1.000000e+00 : f32
    %478 = vector.broadcast %cst_86 : f32 to vector<2x32xf32>
    %479 = arith.subf %478, %476 : vector<2x32xf32>
    %480 = arith.mulf %479, %446 : vector<2x32xf32>
    %481 = arith.addf %477, %480 : vector<2x32xf32>
    %cst_87 = arith.constant dense<0.000000e+00> : vector<2x96xf32>
    %482 = tpu.matmul %481, %333, %cst_87 {dimension_numbers = #tpu.dot_dimension_numbers<[1], [0], [0], [1], [0, 0, 1, 1], [], []>} : vector<2x32xf32>, vector<32x96xf32>, vector<2x96xf32> -> vector<2x96xf32>
    %483 = vector.extract_strided_slice %338 {offsets = [8, 0], sizes = [2, 96], strides = [1, 1]} : vector<16x96xf32> to vector<2x96xf32>
    %484 = vector.extract_strided_slice %483 {offsets = [0, 0], sizes = [2, 32], strides = [1, 1]} : vector<2x96xf32> to vector<2x32xf32>
    %485 = vector.extract_strided_slice %482 {offsets = [0, 0], sizes = [2, 32], strides = [1, 1]} : vector<2x96xf32> to vector<2x32xf32>
    %486 = arith.addf %484, %485 : vector<2x32xf32>
    %487 = arith.negf %486 : vector<2x32xf32>
    %488 = math.exp %487 : vector<2x32xf32>
    %cst_88 = arith.constant 1.000000e+00 : f32
    %489 = vector.broadcast %cst_88 : f32 to vector<2x32xf32>
    %490 = arith.addf %489, %488 : vector<2x32xf32>
    %491 = arith.divf %489, %490 : vector<2x32xf32>
    %492 = vector.extract_strided_slice %483 {offsets = [0, 32], sizes = [2, 32], strides = [1, 1]} : vector<2x96xf32> to vector<2x32xf32>
    %493 = vector.extract_strided_slice %482 {offsets = [0, 32], sizes = [2, 32], strides = [1, 1]} : vector<2x96xf32> to vector<2x32xf32>
    %494 = arith.addf %492, %493 : vector<2x32xf32>
    %495 = arith.negf %494 : vector<2x32xf32>
    %496 = math.exp %495 : vector<2x32xf32>
    %cst_89 = arith.constant 1.000000e+00 : f32
    %497 = vector.broadcast %cst_89 : f32 to vector<2x32xf32>
    %498 = arith.addf %497, %496 : vector<2x32xf32>
    %499 = arith.divf %497, %498 : vector<2x32xf32>
    %500 = vector.extract_strided_slice %483 {offsets = [0, 64], sizes = [2, 32], strides = [1, 1]} : vector<2x96xf32> to vector<2x32xf32>
    %501 = vector.extract_strided_slice %482 {offsets = [0, 64], sizes = [2, 32], strides = [1, 1]} : vector<2x96xf32> to vector<2x32xf32>
    %502 = arith.addf %501, %340 : vector<2x32xf32>
    %503 = arith.mulf %491, %502 : vector<2x32xf32>
    %504 = arith.addf %500, %503 : vector<2x32xf32>
    %505 = math.tanh %504 : vector<2x32xf32>
    %cst_90 = arith.constant 1.000000e+00 : f32
    %506 = vector.broadcast %cst_90 : f32 to vector<2x32xf32>
    %507 = arith.subf %506, %499 : vector<2x32xf32>
    %508 = arith.mulf %507, %505 : vector<2x32xf32>
    %509 = arith.mulf %499, %481 : vector<2x32xf32>
    %510 = arith.addf %508, %509 : vector<2x32xf32>
    %511 = vector.extract_strided_slice %40 {offsets = [8, 0], sizes = [2, 32], strides = [1, 1]} : vector<16x32xf32> to vector<2x32xf32>
    %512 = arith.mulf %511, %510 : vector<2x32xf32>
    %cst_91 = arith.constant 1.000000e+00 : f32
    %513 = vector.broadcast %cst_91 : f32 to vector<2x32xf32>
    %514 = arith.subf %513, %511 : vector<2x32xf32>
    %515 = arith.mulf %514, %481 : vector<2x32xf32>
    %516 = arith.addf %512, %515 : vector<2x32xf32>
    %cst_92 = arith.constant dense<0.000000e+00> : vector<2x96xf32>
    %517 = tpu.matmul %516, %333, %cst_92 {dimension_numbers = #tpu.dot_dimension_numbers<[1], [0], [0], [1], [0, 0, 1, 1], [], []>} : vector<2x32xf32>, vector<32x96xf32>, vector<2x96xf32> -> vector<2x96xf32>
    %518 = vector.extract_strided_slice %338 {offsets = [10, 0], sizes = [2, 96], strides = [1, 1]} : vector<16x96xf32> to vector<2x96xf32>
    %519 = vector.extract_strided_slice %518 {offsets = [0, 0], sizes = [2, 32], strides = [1, 1]} : vector<2x96xf32> to vector<2x32xf32>
    %520 = vector.extract_strided_slice %517 {offsets = [0, 0], sizes = [2, 32], strides = [1, 1]} : vector<2x96xf32> to vector<2x32xf32>
    %521 = arith.addf %519, %520 : vector<2x32xf32>
    %522 = arith.negf %521 : vector<2x32xf32>
    %523 = math.exp %522 : vector<2x32xf32>
    %cst_93 = arith.constant 1.000000e+00 : f32
    %524 = vector.broadcast %cst_93 : f32 to vector<2x32xf32>
    %525 = arith.addf %524, %523 : vector<2x32xf32>
    %526 = arith.divf %524, %525 : vector<2x32xf32>
    %527 = vector.extract_strided_slice %518 {offsets = [0, 32], sizes = [2, 32], strides = [1, 1]} : vector<2x96xf32> to vector<2x32xf32>
    %528 = vector.extract_strided_slice %517 {offsets = [0, 32], sizes = [2, 32], strides = [1, 1]} : vector<2x96xf32> to vector<2x32xf32>
    %529 = arith.addf %527, %528 : vector<2x32xf32>
    %530 = arith.negf %529 : vector<2x32xf32>
    %531 = math.exp %530 : vector<2x32xf32>
    %cst_94 = arith.constant 1.000000e+00 : f32
    %532 = vector.broadcast %cst_94 : f32 to vector<2x32xf32>
    %533 = arith.addf %532, %531 : vector<2x32xf32>
    %534 = arith.divf %532, %533 : vector<2x32xf32>
    %535 = vector.extract_strided_slice %518 {offsets = [0, 64], sizes = [2, 32], strides = [1, 1]} : vector<2x96xf32> to vector<2x32xf32>
    %536 = vector.extract_strided_slice %517 {offsets = [0, 64], sizes = [2, 32], strides = [1, 1]} : vector<2x96xf32> to vector<2x32xf32>
    %537 = arith.addf %536, %340 : vector<2x32xf32>
    %538 = arith.mulf %526, %537 : vector<2x32xf32>
    %539 = arith.addf %535, %538 : vector<2x32xf32>
    %540 = math.tanh %539 : vector<2x32xf32>
    %cst_95 = arith.constant 1.000000e+00 : f32
    %541 = vector.broadcast %cst_95 : f32 to vector<2x32xf32>
    %542 = arith.subf %541, %534 : vector<2x32xf32>
    %543 = arith.mulf %542, %540 : vector<2x32xf32>
    %544 = arith.mulf %534, %516 : vector<2x32xf32>
    %545 = arith.addf %543, %544 : vector<2x32xf32>
    %546 = vector.extract_strided_slice %40 {offsets = [10, 0], sizes = [2, 32], strides = [1, 1]} : vector<16x32xf32> to vector<2x32xf32>
    %547 = arith.mulf %546, %545 : vector<2x32xf32>
    %cst_96 = arith.constant 1.000000e+00 : f32
    %548 = vector.broadcast %cst_96 : f32 to vector<2x32xf32>
    %549 = arith.subf %548, %546 : vector<2x32xf32>
    %550 = arith.mulf %549, %516 : vector<2x32xf32>
    %551 = arith.addf %547, %550 : vector<2x32xf32>
    %cst_97 = arith.constant dense<0.000000e+00> : vector<2x96xf32>
    %552 = tpu.matmul %551, %333, %cst_97 {dimension_numbers = #tpu.dot_dimension_numbers<[1], [0], [0], [1], [0, 0, 1, 1], [], []>} : vector<2x32xf32>, vector<32x96xf32>, vector<2x96xf32> -> vector<2x96xf32>
    %553 = vector.extract_strided_slice %338 {offsets = [12, 0], sizes = [2, 96], strides = [1, 1]} : vector<16x96xf32> to vector<2x96xf32>
    %554 = vector.extract_strided_slice %553 {offsets = [0, 0], sizes = [2, 32], strides = [1, 1]} : vector<2x96xf32> to vector<2x32xf32>
    %555 = vector.extract_strided_slice %552 {offsets = [0, 0], sizes = [2, 32], strides = [1, 1]} : vector<2x96xf32> to vector<2x32xf32>
    %556 = arith.addf %554, %555 : vector<2x32xf32>
    %557 = arith.negf %556 : vector<2x32xf32>
    %558 = math.exp %557 : vector<2x32xf32>
    %cst_98 = arith.constant 1.000000e+00 : f32
    %559 = vector.broadcast %cst_98 : f32 to vector<2x32xf32>
    %560 = arith.addf %559, %558 : vector<2x32xf32>
    %561 = arith.divf %559, %560 : vector<2x32xf32>
    %562 = vector.extract_strided_slice %553 {offsets = [0, 32], sizes = [2, 32], strides = [1, 1]} : vector<2x96xf32> to vector<2x32xf32>
    %563 = vector.extract_strided_slice %552 {offsets = [0, 32], sizes = [2, 32], strides = [1, 1]} : vector<2x96xf32> to vector<2x32xf32>
    %564 = arith.addf %562, %563 : vector<2x32xf32>
    %565 = arith.negf %564 : vector<2x32xf32>
    %566 = math.exp %565 : vector<2x32xf32>
    %cst_99 = arith.constant 1.000000e+00 : f32
    %567 = vector.broadcast %cst_99 : f32 to vector<2x32xf32>
    %568 = arith.addf %567, %566 : vector<2x32xf32>
    %569 = arith.divf %567, %568 : vector<2x32xf32>
    %570 = vector.extract_strided_slice %553 {offsets = [0, 64], sizes = [2, 32], strides = [1, 1]} : vector<2x96xf32> to vector<2x32xf32>
    %571 = vector.extract_strided_slice %552 {offsets = [0, 64], sizes = [2, 32], strides = [1, 1]} : vector<2x96xf32> to vector<2x32xf32>
    %572 = arith.addf %571, %340 : vector<2x32xf32>
    %573 = arith.mulf %561, %572 : vector<2x32xf32>
    %574 = arith.addf %570, %573 : vector<2x32xf32>
    %575 = math.tanh %574 : vector<2x32xf32>
    %cst_100 = arith.constant 1.000000e+00 : f32
    %576 = vector.broadcast %cst_100 : f32 to vector<2x32xf32>
    %577 = arith.subf %576, %569 : vector<2x32xf32>
    %578 = arith.mulf %577, %575 : vector<2x32xf32>
    %579 = arith.mulf %569, %551 : vector<2x32xf32>
    %580 = arith.addf %578, %579 : vector<2x32xf32>
    %581 = vector.extract_strided_slice %40 {offsets = [12, 0], sizes = [2, 32], strides = [1, 1]} : vector<16x32xf32> to vector<2x32xf32>
    %582 = arith.mulf %581, %580 : vector<2x32xf32>
    %cst_101 = arith.constant 1.000000e+00 : f32
    %583 = vector.broadcast %cst_101 : f32 to vector<2x32xf32>
    %584 = arith.subf %583, %581 : vector<2x32xf32>
    %585 = arith.mulf %584, %551 : vector<2x32xf32>
    %586 = arith.addf %582, %585 : vector<2x32xf32>
    %cst_102 = arith.constant dense<0.000000e+00> : vector<2x96xf32>
    %587 = tpu.matmul %586, %333, %cst_102 {dimension_numbers = #tpu.dot_dimension_numbers<[1], [0], [0], [1], [0, 0, 1, 1], [], []>} : vector<2x32xf32>, vector<32x96xf32>, vector<2x96xf32> -> vector<2x96xf32>
    %588 = vector.extract_strided_slice %338 {offsets = [14, 0], sizes = [2, 96], strides = [1, 1]} : vector<16x96xf32> to vector<2x96xf32>
    %589 = vector.extract_strided_slice %588 {offsets = [0, 0], sizes = [2, 32], strides = [1, 1]} : vector<2x96xf32> to vector<2x32xf32>
    %590 = vector.extract_strided_slice %587 {offsets = [0, 0], sizes = [2, 32], strides = [1, 1]} : vector<2x96xf32> to vector<2x32xf32>
    %591 = arith.addf %589, %590 : vector<2x32xf32>
    %592 = arith.negf %591 : vector<2x32xf32>
    %593 = math.exp %592 : vector<2x32xf32>
    %cst_103 = arith.constant 1.000000e+00 : f32
    %594 = vector.broadcast %cst_103 : f32 to vector<2x32xf32>
    %595 = arith.addf %594, %593 : vector<2x32xf32>
    %596 = arith.divf %594, %595 : vector<2x32xf32>
    %597 = vector.extract_strided_slice %588 {offsets = [0, 32], sizes = [2, 32], strides = [1, 1]} : vector<2x96xf32> to vector<2x32xf32>
    %598 = vector.extract_strided_slice %587 {offsets = [0, 32], sizes = [2, 32], strides = [1, 1]} : vector<2x96xf32> to vector<2x32xf32>
    %599 = arith.addf %597, %598 : vector<2x32xf32>
    %600 = arith.negf %599 : vector<2x32xf32>
    %601 = math.exp %600 : vector<2x32xf32>
    %cst_104 = arith.constant 1.000000e+00 : f32
    %602 = vector.broadcast %cst_104 : f32 to vector<2x32xf32>
    %603 = arith.addf %602, %601 : vector<2x32xf32>
    %604 = arith.divf %602, %603 : vector<2x32xf32>
    %605 = vector.extract_strided_slice %588 {offsets = [0, 64], sizes = [2, 32], strides = [1, 1]} : vector<2x96xf32> to vector<2x32xf32>
    %606 = vector.extract_strided_slice %587 {offsets = [0, 64], sizes = [2, 32], strides = [1, 1]} : vector<2x96xf32> to vector<2x32xf32>
    %607 = arith.addf %606, %340 : vector<2x32xf32>
    %608 = arith.mulf %596, %607 : vector<2x32xf32>
    %609 = arith.addf %605, %608 : vector<2x32xf32>
    %610 = math.tanh %609 : vector<2x32xf32>
    %cst_105 = arith.constant 1.000000e+00 : f32
    %611 = vector.broadcast %cst_105 : f32 to vector<2x32xf32>
    %612 = arith.subf %611, %604 : vector<2x32xf32>
    %613 = arith.mulf %612, %610 : vector<2x32xf32>
    %614 = arith.mulf %604, %586 : vector<2x32xf32>
    %615 = arith.addf %613, %614 : vector<2x32xf32>
    %616 = vector.extract_strided_slice %40 {offsets = [14, 0], sizes = [2, 32], strides = [1, 1]} : vector<16x32xf32> to vector<2x32xf32>
    %617 = arith.mulf %616, %615 : vector<2x32xf32>
    %cst_106 = arith.constant 1.000000e+00 : f32
    %618 = vector.broadcast %cst_106 : f32 to vector<2x32xf32>
    %619 = arith.subf %618, %616 : vector<2x32xf32>
    %620 = arith.mulf %619, %586 : vector<2x32xf32>
    %621 = arith.addf %617, %620 : vector<2x32xf32>
    %c256 = arith.constant 256 : index
    %c0_107 = arith.constant 0 : index
    %622 = vector.load %arg1[%c256, %c0_107] : memref<320x128xf32, #tpu.memory_space<vmem>>, vector<1x32xf32>
    %cst_108 = arith.constant 0.000000e+00 : f32
    %623 = vector.broadcast %cst_108 : f32 to vector<2x32xf32>
    %624 = math.tanh %372 : vector<2x32xf32>
    %625 = vector.broadcast %622 : vector<1x32xf32> to vector<2x32xf32>
    %626 = arith.mulf %624, %625 : vector<2x32xf32>
    %cst_109 = arith.constant dense<0.000000e+00> : vector<2xf32>
    %627 = vector.multi_reduction <add>, %626, %cst_109 [1] : vector<2x32xf32> to vector<2xf32>
    %628 = vector.shape_cast %627 : vector<2xf32> to vector<2x1xf32>
    %cst_110 = arith.constant dense<0xFF800000> : vector<1xf32>
    %629 = vector.multi_reduction <maximumf>, %628, %cst_110 [0] : vector<2x1xf32> to vector<1xf32>
    %630 = vector.shape_cast %629 : vector<1xf32> to vector<1x1xf32>
    %631 = vector.broadcast %630 : vector<1x1xf32> to vector<2x1xf32>
    %632 = arith.subf %628, %631 : vector<2x1xf32>
    %633 = math.exp %632 : vector<2x1xf32>
    %cst_111 = arith.constant dense<0.000000e+00> : vector<1xf32>
    %634 = vector.multi_reduction <add>, %633, %cst_111 [0] : vector<2x1xf32> to vector<1xf32>
    %635 = vector.shape_cast %634 : vector<1xf32> to vector<1x1xf32>
    %636 = vector.broadcast %635 : vector<1x1xf32> to vector<2x1xf32>
    %637 = arith.divf %633, %636 : vector<2x1xf32>
    %cst_112 = arith.constant 1.000000e+00 : f32
    %638 = vector.broadcast %cst_112 : f32 to vector<2x1xf32>
    %639 = arith.addf %638, %637 : vector<2x1xf32>
    %640 = vector.broadcast %639 : vector<2x1xf32> to vector<2x32xf32>
    %641 = arith.mulf %372, %640 : vector<2x32xf32>
    %642 = arith.addf %623, %641 : vector<2x32xf32>
    %643 = math.tanh %407 : vector<2x32xf32>
    %644 = vector.broadcast %622 : vector<1x32xf32> to vector<2x32xf32>
    %645 = arith.mulf %643, %644 : vector<2x32xf32>
    %cst_113 = arith.constant dense<0.000000e+00> : vector<2xf32>
    %646 = vector.multi_reduction <add>, %645, %cst_113 [1] : vector<2x32xf32> to vector<2xf32>
    %647 = vector.shape_cast %646 : vector<2xf32> to vector<2x1xf32>
    %cst_114 = arith.constant dense<0xFF800000> : vector<1xf32>
    %648 = vector.multi_reduction <maximumf>, %647, %cst_114 [0] : vector<2x1xf32> to vector<1xf32>
    %649 = vector.shape_cast %648 : vector<1xf32> to vector<1x1xf32>
    %650 = vector.broadcast %649 : vector<1x1xf32> to vector<2x1xf32>
    %651 = arith.subf %647, %650 : vector<2x1xf32>
    %652 = math.exp %651 : vector<2x1xf32>
    %cst_115 = arith.constant dense<0.000000e+00> : vector<1xf32>
    %653 = vector.multi_reduction <add>, %652, %cst_115 [0] : vector<2x1xf32> to vector<1xf32>
    %654 = vector.shape_cast %653 : vector<1xf32> to vector<1x1xf32>
    %655 = vector.broadcast %654 : vector<1x1xf32> to vector<2x1xf32>
    %656 = arith.divf %652, %655 : vector<2x1xf32>
    %cst_116 = arith.constant 1.000000e+00 : f32
    %657 = vector.broadcast %cst_116 : f32 to vector<2x1xf32>
    %658 = arith.addf %657, %656 : vector<2x1xf32>
    %659 = vector.broadcast %658 : vector<2x1xf32> to vector<2x32xf32>
    %660 = arith.mulf %407, %659 : vector<2x32xf32>
    %661 = arith.addf %642, %660 : vector<2x32xf32>
    %662 = math.tanh %442 : vector<2x32xf32>
    %663 = vector.broadcast %622 : vector<1x32xf32> to vector<2x32xf32>
    %664 = arith.mulf %662, %663 : vector<2x32xf32>
    %cst_117 = arith.constant dense<0.000000e+00> : vector<2xf32>
    %665 = vector.multi_reduction <add>, %664, %cst_117 [1] : vector<2x32xf32> to vector<2xf32>
    %666 = vector.shape_cast %665 : vector<2xf32> to vector<2x1xf32>
    %cst_118 = arith.constant dense<0xFF800000> : vector<1xf32>
    %667 = vector.multi_reduction <maximumf>, %666, %cst_118 [0] : vector<2x1xf32> to vector<1xf32>
    %668 = vector.shape_cast %667 : vector<1xf32> to vector<1x1xf32>
    %669 = vector.broadcast %668 : vector<1x1xf32> to vector<2x1xf32>
    %670 = arith.subf %666, %669 : vector<2x1xf32>
    %671 = math.exp %670 : vector<2x1xf32>
    %cst_119 = arith.constant dense<0.000000e+00> : vector<1xf32>
    %672 = vector.multi_reduction <add>, %671, %cst_119 [0] : vector<2x1xf32> to vector<1xf32>
    %673 = vector.shape_cast %672 : vector<1xf32> to vector<1x1xf32>
    %674 = vector.broadcast %673 : vector<1x1xf32> to vector<2x1xf32>
    %675 = arith.divf %671, %674 : vector<2x1xf32>
    %cst_120 = arith.constant 1.000000e+00 : f32
    %676 = vector.broadcast %cst_120 : f32 to vector<2x1xf32>
    %677 = arith.addf %676, %675 : vector<2x1xf32>
    %678 = vector.broadcast %677 : vector<2x1xf32> to vector<2x32xf32>
    %679 = arith.mulf %442, %678 : vector<2x32xf32>
    %680 = arith.addf %661, %679 : vector<2x32xf32>
    %681 = math.tanh %477 : vector<2x32xf32>
    %682 = vector.broadcast %622 : vector<1x32xf32> to vector<2x32xf32>
    %683 = arith.mulf %681, %682 : vector<2x32xf32>
    %cst_121 = arith.constant dense<0.000000e+00> : vector<2xf32>
    %684 = vector.multi_reduction <add>, %683, %cst_121 [1] : vector<2x32xf32> to vector<2xf32>
    %685 = vector.shape_cast %684 : vector<2xf32> to vector<2x1xf32>
    %cst_122 = arith.constant dense<0xFF800000> : vector<1xf32>
    %686 = vector.multi_reduction <maximumf>, %685, %cst_122 [0] : vector<2x1xf32> to vector<1xf32>
    %687 = vector.shape_cast %686 : vector<1xf32> to vector<1x1xf32>
    %688 = vector.broadcast %687 : vector<1x1xf32> to vector<2x1xf32>
    %689 = arith.subf %685, %688 : vector<2x1xf32>
    %690 = math.exp %689 : vector<2x1xf32>
    %cst_123 = arith.constant dense<0.000000e+00> : vector<1xf32>
    %691 = vector.multi_reduction <add>, %690, %cst_123 [0] : vector<2x1xf32> to vector<1xf32>
    %692 = vector.shape_cast %691 : vector<1xf32> to vector<1x1xf32>
    %693 = vector.broadcast %692 : vector<1x1xf32> to vector<2x1xf32>
    %694 = arith.divf %690, %693 : vector<2x1xf32>
    %cst_124 = arith.constant 1.000000e+00 : f32
    %695 = vector.broadcast %cst_124 : f32 to vector<2x1xf32>
    %696 = arith.addf %695, %694 : vector<2x1xf32>
    %697 = vector.broadcast %696 : vector<2x1xf32> to vector<2x32xf32>
    %698 = arith.mulf %477, %697 : vector<2x32xf32>
    %699 = arith.addf %680, %698 : vector<2x32xf32>
    %700 = math.tanh %512 : vector<2x32xf32>
    %701 = vector.broadcast %622 : vector<1x32xf32> to vector<2x32xf32>
    %702 = arith.mulf %700, %701 : vector<2x32xf32>
    %cst_125 = arith.constant dense<0.000000e+00> : vector<2xf32>
    %703 = vector.multi_reduction <add>, %702, %cst_125 [1] : vector<2x32xf32> to vector<2xf32>
    %704 = vector.shape_cast %703 : vector<2xf32> to vector<2x1xf32>
    %cst_126 = arith.constant dense<0xFF800000> : vector<1xf32>
    %705 = vector.multi_reduction <maximumf>, %704, %cst_126 [0] : vector<2x1xf32> to vector<1xf32>
    %706 = vector.shape_cast %705 : vector<1xf32> to vector<1x1xf32>
    %707 = vector.broadcast %706 : vector<1x1xf32> to vector<2x1xf32>
    %708 = arith.subf %704, %707 : vector<2x1xf32>
    %709 = math.exp %708 : vector<2x1xf32>
    %cst_127 = arith.constant dense<0.000000e+00> : vector<1xf32>
    %710 = vector.multi_reduction <add>, %709, %cst_127 [0] : vector<2x1xf32> to vector<1xf32>
    %711 = vector.shape_cast %710 : vector<1xf32> to vector<1x1xf32>
    %712 = vector.broadcast %711 : vector<1x1xf32> to vector<2x1xf32>
    %713 = arith.divf %709, %712 : vector<2x1xf32>
    %cst_128 = arith.constant 1.000000e+00 : f32
    %714 = vector.broadcast %cst_128 : f32 to vector<2x1xf32>
    %715 = arith.addf %714, %713 : vector<2x1xf32>
    %716 = vector.broadcast %715 : vector<2x1xf32> to vector<2x32xf32>
    %717 = arith.mulf %512, %716 : vector<2x32xf32>
    %718 = arith.addf %699, %717 : vector<2x32xf32>
    %719 = math.tanh %547 : vector<2x32xf32>
    %720 = vector.broadcast %622 : vector<1x32xf32> to vector<2x32xf32>
    %721 = arith.mulf %719, %720 : vector<2x32xf32>
    %cst_129 = arith.constant dense<0.000000e+00> : vector<2xf32>
    %722 = vector.multi_reduction <add>, %721, %cst_129 [1] : vector<2x32xf32> to vector<2xf32>
    %723 = vector.shape_cast %722 : vector<2xf32> to vector<2x1xf32>
    %cst_130 = arith.constant dense<0xFF800000> : vector<1xf32>
    %724 = vector.multi_reduction <maximumf>, %723, %cst_130 [0] : vector<2x1xf32> to vector<1xf32>
    %725 = vector.shape_cast %724 : vector<1xf32> to vector<1x1xf32>
    %726 = vector.broadcast %725 : vector<1x1xf32> to vector<2x1xf32>
    %727 = arith.subf %723, %726 : vector<2x1xf32>
    %728 = math.exp %727 : vector<2x1xf32>
    %cst_131 = arith.constant dense<0.000000e+00> : vector<1xf32>
    %729 = vector.multi_reduction <add>, %728, %cst_131 [0] : vector<2x1xf32> to vector<1xf32>
    %730 = vector.shape_cast %729 : vector<1xf32> to vector<1x1xf32>
    %731 = vector.broadcast %730 : vector<1x1xf32> to vector<2x1xf32>
    %732 = arith.divf %728, %731 : vector<2x1xf32>
    %cst_132 = arith.constant 1.000000e+00 : f32
    %733 = vector.broadcast %cst_132 : f32 to vector<2x1xf32>
    %734 = arith.addf %733, %732 : vector<2x1xf32>
    %735 = vector.broadcast %734 : vector<2x1xf32> to vector<2x32xf32>
    %736 = arith.mulf %547, %735 : vector<2x32xf32>
    %737 = arith.addf %718, %736 : vector<2x32xf32>
    %738 = math.tanh %582 : vector<2x32xf32>
    %739 = vector.broadcast %622 : vector<1x32xf32> to vector<2x32xf32>
    %740 = arith.mulf %738, %739 : vector<2x32xf32>
    %cst_133 = arith.constant dense<0.000000e+00> : vector<2xf32>
    %741 = vector.multi_reduction <add>, %740, %cst_133 [1] : vector<2x32xf32> to vector<2xf32>
    %742 = vector.shape_cast %741 : vector<2xf32> to vector<2x1xf32>
    %cst_134 = arith.constant dense<0xFF800000> : vector<1xf32>
    %743 = vector.multi_reduction <maximumf>, %742, %cst_134 [0] : vector<2x1xf32> to vector<1xf32>
    %744 = vector.shape_cast %743 : vector<1xf32> to vector<1x1xf32>
    %745 = vector.broadcast %744 : vector<1x1xf32> to vector<2x1xf32>
    %746 = arith.subf %742, %745 : vector<2x1xf32>
    %747 = math.exp %746 : vector<2x1xf32>
    %cst_135 = arith.constant dense<0.000000e+00> : vector<1xf32>
    %748 = vector.multi_reduction <add>, %747, %cst_135 [0] : vector<2x1xf32> to vector<1xf32>
    %749 = vector.shape_cast %748 : vector<1xf32> to vector<1x1xf32>
    %750 = vector.broadcast %749 : vector<1x1xf32> to vector<2x1xf32>
    %751 = arith.divf %747, %750 : vector<2x1xf32>
    %cst_136 = arith.constant 1.000000e+00 : f32
    %752 = vector.broadcast %cst_136 : f32 to vector<2x1xf32>
    %753 = arith.addf %752, %751 : vector<2x1xf32>
    %754 = vector.broadcast %753 : vector<2x1xf32> to vector<2x32xf32>
    %755 = arith.mulf %582, %754 : vector<2x32xf32>
    %756 = arith.addf %737, %755 : vector<2x32xf32>
    %757 = math.tanh %617 : vector<2x32xf32>
    %758 = vector.broadcast %622 : vector<1x32xf32> to vector<2x32xf32>
    %759 = arith.mulf %757, %758 : vector<2x32xf32>
    %cst_137 = arith.constant dense<0.000000e+00> : vector<2xf32>
    %760 = vector.multi_reduction <add>, %759, %cst_137 [1] : vector<2x32xf32> to vector<2xf32>
    %761 = vector.shape_cast %760 : vector<2xf32> to vector<2x1xf32>
    %cst_138 = arith.constant dense<0xFF800000> : vector<1xf32>
    %762 = vector.multi_reduction <maximumf>, %761, %cst_138 [0] : vector<2x1xf32> to vector<1xf32>
    %763 = vector.shape_cast %762 : vector<1xf32> to vector<1x1xf32>
    %764 = vector.broadcast %763 : vector<1x1xf32> to vector<2x1xf32>
    %765 = arith.subf %761, %764 : vector<2x1xf32>
    %766 = math.exp %765 : vector<2x1xf32>
    %cst_139 = arith.constant dense<0.000000e+00> : vector<1xf32>
    %767 = vector.multi_reduction <add>, %766, %cst_139 [0] : vector<2x1xf32> to vector<1xf32>
    %768 = vector.shape_cast %767 : vector<1xf32> to vector<1x1xf32>
    %769 = vector.broadcast %768 : vector<1x1xf32> to vector<2x1xf32>
    %770 = arith.divf %766, %769 : vector<2x1xf32>
    %cst_140 = arith.constant 1.000000e+00 : f32
    %771 = vector.broadcast %cst_140 : f32 to vector<2x1xf32>
    %772 = arith.addf %771, %770 : vector<2x1xf32>
    %773 = vector.broadcast %772 : vector<2x1xf32> to vector<2x32xf32>
    %774 = arith.mulf %617, %773 : vector<2x32xf32>
    %775 = arith.addf %756, %774 : vector<2x32xf32>
    %cst_141 = arith.constant dense<0.000000e+00> : vector<32xf32>
    %776 = vector.multi_reduction <add>, %330, %cst_141 [0] : vector<2x32xf32> to vector<32xf32>
    %777 = vector.shape_cast %776 : vector<32xf32> to vector<1x32xf32>
    %cst_142 = arith.constant 2.000000e+00 : f32
    %778 = vector.broadcast %cst_142 : f32 to vector<1x32xf32>
    %779 = arith.divf %777, %778 : vector<1x32xf32>
    %cst_143 = arith.constant dense<0.000000e+00> : vector<32xf32>
    %780 = vector.multi_reduction <add>, %621, %cst_143 [0] : vector<2x32xf32> to vector<32xf32>
    %781 = vector.shape_cast %780 : vector<32xf32> to vector<1x32xf32>
    %cst_144 = arith.constant 2.000000e+00 : f32
    %782 = vector.broadcast %cst_144 : f32 to vector<1x32xf32>
    %783 = arith.divf %781, %782 : vector<1x32xf32>
    %784 = tpu.concatenate %779, %783 in 0 : vector<1x32xf32>, vector<1x32xf32> -> vector<2x32xf32>
    %785 = tpu.concatenate %775, %784 in 0 : vector<2x32xf32>, vector<2x32xf32> -> vector<4x32xf32>
    %c264 = arith.constant 264 : index
    %c0_145 = arith.constant 0 : index
    %786 = vector.load %arg1[%c264, %c0_145] : memref<320x128xf32, #tpu.memory_space<vmem>>, vector<32x3xf32>
    %cst_146 = arith.constant dense<0.000000e+00> : vector<4x3xf32>
    %787 = tpu.matmul %785, %786, %cst_146 {dimension_numbers = #tpu.dot_dimension_numbers<[1], [0], [0], [1], [0, 0, 1, 1], [], []>} : vector<4x32xf32>, vector<32x3xf32>, vector<4x3xf32> -> vector<4x3xf32>
    %cst_147 = arith.constant 0.000000e+00 : f32
    %788 = vector.broadcast %cst_147 : f32 to vector<2x3xf32>
    %c296 = arith.constant 296 : index
    %c0_148 = arith.constant 0 : index
    %789 = vector.load %arg1[%c296, %c0_148] : memref<320x128xf32, #tpu.memory_space<vmem>>, vector<1x3xf32>
    %790 = vector.shape_cast %789 : vector<1x3xf32> to vector<1x3xf32>
    %791 = vector.broadcast %790 : vector<1x3xf32> to vector<2x3xf32>
    %792 = tpu.concatenate %788, %791 in 0 : vector<2x3xf32>, vector<2x3xf32> -> vector<4x3xf32>
    %793 = arith.addf %787, %792 : vector<4x3xf32>
    %c0_149 = arith.constant 0 : index
    %c0_150 = arith.constant 0 : index
    %794 = vector.load %arg2[%c0_149, %c0_150] : memref<4x3xf32, #tpu.memory_space<vmem>>, vector<4x3xf32>
    tpu.vector_store %arg2[%c0_149, %c0_150], %793 {strides = array<i32>} : memref<4x3xf32, #tpu.memory_space<vmem>>, vector<4x3xf32>,
    return
  }
}

</mosaic_0001>

<llo_original>
// kernel: neg.2
$region0: #{neg.2}
  #allocation0 [shape = 's32[1]{0}', space=sflag, size = 0x4, scoped, tag = 'scoped memory for neg.2']
  %s0 = inlined_call_operand.vmem [shape: s32[2], index: 0, kind: input, shape index: {}]
  %s1 = inlined_call_operand.vmem [shape: s32[2], index: 1, kind: output, shape index: {}]
  %v2 = vld [vmem:[%s0] sm:$0x1]
  %3 = xla_tuple %v2
  %4 = xla_tuple %3
  %v5 = vsub.s32 0, %v2
  %6 = xla_tuple %v5
  %7 = vst [vmem:[%s1] sm:$0x1] %v5

// kernel: drbert_forward.1
$region0: #{drbert_forward.1}
  #allocation0 [shape = 'u32[]', space=smem, size = 0x4, offset = 0x4, fixed_abs, tag = 'smem constant byte address 0x4 - core index']
  #allocation1 [shape = 'u32[144,128]{1,0:T(1,128)}', space=vmem, size = 0x12000, scoped, tag = 'internal scratch']
  %s0 = inlined_call_operand.vmem [shape: s32[24,1], index: 0, kind: input, shape index: {}]
  %s1 = inlined_call_operand.vmem [shape: f32[320,128], index: 1, kind: input, shape index: {}]
  %s2 = inlined_call_operand.vmem [shape: f32[4,3], index: 2, kind: output, shape index: {}]
  %s3 = sld [smem:[#allocation0]]
  $region18: #{drbert_forward.1} parent=0
    _
  %s5 = ssub.s32 1, %s3
  %s6 = scalar_select 0, %s5, %s3
  // Predicated region
  $region2: #{drbert_forward.1} parent=0 // pred_check
    _
  $region3: #{drbert_forward.1} parent=0 // pred_check_branch
    %8 = sbr.rel (0) target = $region5
  $region4: #{drbert_forward.1} parent=0 // pred_region
    _
  $region5: #{drbert_forward.1} parent=0 // pred_fallthru
    _
  // Predicated region
  $region6: #{drbert_forward.1} parent=0 // pred_check
    _
  $region7: #{drbert_forward.1} parent=0 // pred_check_branch
    %10 = sbr.rel (0) target = $region9
  $region8: #{drbert_forward.1} parent=0 // pred_region
    _
  $region9: #{drbert_forward.1} parent=0 // pred_fallthru
    _
  %v11 = vld [vmem:[%s0] sm:$0xff]
  %v12 = vld [vmem:[%s0 + $0x8] sm:$0xff]
  %v13 = vld [vmem:[%s0 + $0x10] sm:$0xff]
  %v14 = vlaneseq
  %v15 = vand.u32 %v14, 127
  %16 = vset.pattern.permute.xlu0 0
  %17 = vperm.xlu0 %16, %v11
  %v18 = vpop.permute.xlu0 %17
  %19 = vset.pattern.permute.xlu0 0
  %20 = vperm.xlu0 %19, %v12
  %v21 = vpop.permute.xlu0 %20
  %22 = vset.pattern.permute.xlu0 0
  %23 = vperm.xlu0 %22, %v13
  %v24 = vpop.permute.xlu0 %23
  %vm25 = vcmp.eq.s32.totalorder %v15, %v18
  %vm26 = vcmp.eq.s32.totalorder %v15, %v21
  %vm27 = vcmp.eq.s32.totalorder %v15, %v24
  %v28 = vsel %vm25, 1, 0
  %v29 = vsel %vm26, 1, 0
  %v30 = vsel %vm27, 1, 0
  %v31 = vcvt.s32.f32 %v28
  %v32 = vcvt.s32.f32 %v29
  %v33 = vcvt.s32.f32 %v30
  %v34 = vld [vmem:[%s1] sm:$0xff]
  %v35 = vld [vmem:[%s1 + $0x8] sm:$0xff]
  %v36 = vld [vmem:[%s1 + $0x10] sm:$0xff]
  %v37 = vld [vmem:[%s1 + $0x18] sm:$0xff]
  %v38 = vld [vmem:[%s1 + $0x20] sm:$0xff]
  %v39 = vld [vmem:[%s1 + $0x28] sm:$0xff]
  %v40 = vld [vmem:[%s1 + $0x30] sm:$0xff]
  %vm41 = vcmask 457728
  %v43 = vsel %vm41, %v31, 0
  %v46 = vsel %vm41, %v32, 0
  %v49 = vsel %vm41, %v33, 0
  %51 = vmatprep.subr.mxu0 0.0
  %52 = vmatpush1.msra.mxu0 0.0
  %53 = vmatprep.subr.mxu0 0.0
  %54 = vmatpush1.msra.mxu0 0.0
  %55 = vmatprep.subr.mxu0 0.0
  %56 = vmatpush1.msra.mxu0 0.0
  %57 = vmatprep.subr.mxu0 0.0
  %58 = vmatpush1.msra.mxu0 0.0
  %59 = vmatprep.subr.mxu0 0.0
  %60 = vmatpush1.msra.mxu0 0.0
  %61 = vmatprep.subr.mxu0 0.0
  %62 = vmatpush1.msra.mxu0 0.0
  %63 = vmatprep.subr.mxu0 0.0
  %64 = vmatpush1.msra.mxu0 0.0
  %65 = vmatprep.subr.mxu0 0.0
  %66 = vmatpush1.msra.mxu0 0.0
  %67 = vmatprep.subr.mxu0 0.0
  %68 = vmatpush1.msra.mxu0 0.0
  %69 = vmatprep.subr.mxu0 0.0
  %70 = vmatpush1.msra.mxu0 %v40
  %71 = vmatprep.subr.mxu0 0.0
  %72 = vmatpush1.msra.mxu0 %v39
  %73 = vmatprep.subr.mxu0 0.0
  %74 = vmatpush1.msra.mxu0 %v38
  %75 = vmatprep.subr.mxu0 0.0
  %76 = vmatpush1.msra.mxu0 %v37
  %77 = vmatprep.subr.mxu0 0.0
  %78 = vmatpush1.msra.mxu0 %v36
  %79 = vmatprep.subr.mxu0 0.0
  %80 = vmatpush1.msra.mxu0 %v35
  %81 = vmatprep.subr.mxu0 0.0
  %82 = vmatpush1.msra.mxu0 %v34
  %83 = vmatprep.subr.mxu0 0.0
  %84 = vmatpush2.msra.mxu0 0.0
  %85 = vmatprep.subr.mxu0 0.0
  %86 = vmatpush2.msra.mxu0 0.0
  %87 = vmatprep.subr.mxu0 0.0
  %88 = vmatpush2.msra.mxu0 0.0
  %89 = vmatprep.subr.mxu0 0.0
  %90 = vmatpush2.msra.mxu0 0.0
  %91 = vmatprep.subr.mxu0 0.0
  %92 = vmatpush2.msra.mxu0 0.0
  %93 = vmatprep.subr.mxu0 0.0
  %94 = vmatpush2.msra.mxu0 0.0
  %95 = vmatprep.subr.mxu0 0.0
  %96 = vmatpush2.msra.mxu0 0.0
  %97 = vmatprep.subr.mxu0 0.0
  %98 = vmatpush2.msra.mxu0 0.0
  %99 = vmatprep.subr.mxu0 0.0
  %100 = vmatpush2.msra.mxu0 0.0
  %101 = vmatprep.subr.mxu0 0.0
  %102 = vmatpush2.msra.mxu0 0.0
  %103 = vmatprep.subr.mxu0 0.0
  %104 = vmatpush2.msra.mxu0 0.0
  %105 = vmatprep.subr.mxu0 0.0
  %106 = vmatpush2.msra.mxu0 0.0
  %107 = vmatprep.subr.mxu0 0.0
  %108 = vmatpush2.msra.mxu0 0.0
  %109 = vmatprep.subr.mxu0 0.0
  %110 = vmatpush2.msra.mxu0 0.0
  %111 = vmatprep.subr.mxu0 0.0
  %112 = vmatpush2.msra.mxu0 0.0
  %113 = vmatprep.subr.mxu0 0.0
  %114 = vmatpush2.msra.mxu0 0.0
  %115 = vmatprep.mubr.f32.mxu0 0.0
  %116 = vmatmul.mubr.f32.gmra.mxu0 %v43
  %v117 = vpop.f32.mrf.mxu0
  %v118 = vadd.f32 0.0, %v117
  %v119 = vpop.f32.mrf.mxu0
  %120 = vmatprep.mubr.f32.mxu0 0.0
  %121 = vmatmul.mubr.f32.gmra.mxu0 %v46
  %v122 = vpop.f32.mrf.mxu0
  %v123 = vadd.f32 0.0, %v122
  %v124 = vpop.f32.mrf.mxu0
  %125 = vmatprep.mubr.f32.mxu0 0.0
  %126 = vmatmul.mubr.f32.gmra.mxu0 %v49
  %v127 = vpop.f32.mrf.mxu0
  %v128 = vadd.f32 0.0, %v127
  %v129 = vpop.f32.mrf.mxu0
  %130 = vdwg.mxu0
  %v131 = vld [vmem:[%s1 + $0x38] sm:$0xff]
  %v132 = vld [vmem:[%s1 + $0x40] sm:$0xff]
  %v133 = vld [vmem:[%s1 + $0x48] sm:$0xff]
  %v134 = vld [vmem:[%s1 + $0x50] sm:$0xff]
  %v135 = vld [vmem:[%s1 + $0x58] sm:$0x1]
  %v136 = vlaneseq
  %v137 = vshrl.u32 %v136, 7
  %v138 = vsub.s32 0, %v137
  %v139 = vrot.slane %v135, %v138
  %vm140 = vcmask 261120
  %v142 = vsel %vm140, %v118, 0
  %v145 = vsel %vm140, %v123, 0
  %v148 = vsel %vm140, %v128, 0
  %150 = vmatprep.subr.mxu0 0.0
  %151 = vmatpush1.msra.mxu0 0.0
  %152 = vmatprep.subr.mxu0 0.0
  %153 = vmatpush1.msra.mxu0 0.0
  %154 = vmatprep.subr.mxu0 0.0
  %155 = vmatpush1.msra.mxu0 0.0
  %156 = vmatprep.subr.mxu0 0.0
  %157 = vmatpush1.msra.mxu0 0.0
  %158 = vmatprep.subr.mxu0 0.0
  %159 = vmatpush1.msra.mxu0 0.0
  %160 = vmatprep.subr.mxu0 0.0
  %161 = vmatpush1.msra.mxu0 0.0
  %162 = vmatprep.subr.mxu0 0.0
  %163 = vmatpush1.msra.mxu0 0.0
  %164 = vmatprep.subr.mxu0 0.0
  %165 = vmatpush1.msra.mxu0 0.0
  %166 = vmatprep.subr.mxu0 0.0
  %167 = vmatpush1.msra.mxu0 0.0
  %168 = vmatprep.subr.mxu0 0.0
  %169 = vmatpush1.msra.mxu0 0.0
  %170 = vmatprep.subr.mxu0 0.0
  %171 = vmatpush1.msra.mxu0 0.0
  %172 = vmatprep.subr.mxu0 0.0
  %173 = vmatpush1.msra.mxu0 0.0
  %174 = vmatprep.subr.mxu0 0.0
  %175 = vmatpush1.msra.mxu0 %v134
  %176 = vmatprep.subr.mxu0 0.0
  %177 = vmatpush1.msra.mxu0 %v133
  %178 = vmatprep.subr.mxu0 0.0
  %179 = vmatpush1.msra.mxu0 %v132
  %180 = vmatprep.subr.mxu0 0.0
  %181 = vmatpush1.msra.mxu0 %v131
  %182 = vmatprep.subr.mxu0 0.0
  %183 = vmatpush2.msra.mxu0 0.0
  %184 = vmatprep.subr.mxu0 0.0
  %185 = vmatpush2.msra.mxu0 0.0
  %186 = vmatprep.subr.mxu0 0.0
  %187 = vmatpush2.msra.mxu0 0.0
  %188 = vmatprep.subr.mxu0 0.0
  %189 = vmatpush2.msra.mxu0 0.0
  %190 = vmatprep.subr.mxu0 0.0
  %191 = vmatpush2.msra.mxu0 0.0
  %192 = vmatprep.subr.mxu0 0.0
  %193 = vmatpush2.msra.mxu0 0.0
  %194 = vmatprep.subr.mxu0 0.0
  %195 = vmatpush2.msra.mxu0 0.0
  %196 = vmatprep.subr.mxu0 0.0
  %197 = vmatpush2.msra.mxu0 0.0
  %198 = vmatprep.subr.mxu0 0.0
  %199 = vmatpush2.msra.mxu0 0.0
  %200 = vmatprep.subr.mxu0 0.0
  %201 = vmatpush2.msra.mxu0 0.0
  %202 = vmatprep.subr.mxu0 0.0
  %203 = vmatpush2.msra.mxu0 0.0
  %204 = vmatprep.subr.mxu0 0.0
  %205 = vmatpush2.msra.mxu0 0.0
  %206 = vmatprep.subr.mxu0 0.0
  %207 = vmatpush2.msra.mxu0 0.0
  %208 = vmatprep.subr.mxu0 0.0
  %209 = vmatpush2.msra.mxu0 0.0
  %210 = vmatprep.subr.mxu0 0.0
  %211 = vmatpush2.msra.mxu0 0.0
  %212 = vmatprep.subr.mxu0 0.0
  %213 = vmatpush2.msra.mxu0 0.0
  %214 = vmatprep.mubr.f32.mxu0 0.0
  %215 = vmatmul.mubr.f32.gmra.mxu0 %v142
  %v216 = vpop.f32.mrf.mxu0
  %v217 = vadd.f32 %v139, %v216
  %v218 = vpop.f32.mrf.mxu0
  %219 = vmatprep.mubr.f32.mxu0 0.0
  %220 = vmatmul.mubr.f32.gmra.mxu0 %v145
  %v221 = vpop.f32.mrf.mxu0
  %v222 = vadd.f32 %v139, %v221
  %v223 = vpop.f32.mrf.mxu0
  %224 = vmatprep.mubr.f32.mxu0 0.0
  %225 = vmatmul.mubr.f32.gmra.mxu0 %v148
  %v226 = vpop.f32.mrf.mxu0
  %v227 = vadd.f32 %v139, %v226
  %v228 = vpop.f32.mrf.mxu0
  %229 = vdwg.mxu0
  %v230 = vmul.f32 %v217, 0.5
  %v231 = vmul.f32 %v222, 0.5
  %v232 = vmul.f32 %v227, 0.5
  %v233 = vmul.f32 %v217, 0.044715
  %v234 = vmul.f32 %v222, 0.044715
  %v235 = vmul.f32 %v227, 0.044715
  %v236 = vmul.f32 %v233, %v217
  %v237 = vmul.f32 %v234, %v222
  %v238 = vmul.f32 %v235, %v227
  %v239 = vmul.f32 %v236, %v217
  %v240 = vmul.f32 %v237, %v222
  %v241 = vmul.f32 %v238, %v227
  %v242 = vadd.f32 %v217, %v239
  %v243 = vadd.f32 %v222, %v240
  %v244 = vadd.f32 %v227, %v241
  %v245 = vmul.f32 %v242, 0.7978846
  %v246 = vmul.f32 %v243, 0.7978846
  %v247 = vmul.f32 %v244, 0.7978846
  %v248 = vtanh.pop %v245
  %v249 = vtanh.pop %v246
  %v250 = vtanh.pop %v247
  %v251 = vadd.f32 %v248, 1.0
  %v252 = vadd.f32 %v249, 1.0
  %v253 = vadd.f32 %v250, 1.0
  %v254 = vmul.f32 %v230, %v251
  %v255 = vmul.f32 %v231, %v252
  %v256 = vmul.f32 %v232, %v253
  %vm257 = vcmask 257024
  %v258 = vsel %vm257, %v256, 0.0
  %v259 = vrot.slane %v258, 4
  %v260 = vadd.f32 %v258, %v259
  %v261 = vrot.slane %v260, 2
  %v262 = vadd.f32 %v260, %v261
  %v263 = vrot.slane %v262, 1
  %v264 = vadd.f32 %v262, %v263
  %v265 = vrcp.pop 4.0
  %v266 = vmul.f32 %v264, %v265
  %v268 = vrot.slane %v256, 4
  %v270 = vsel %vm257, %v268, 0.0
  %v271 = vrot.slane %v270, 4
  %v272 = vadd.f32 %v270, %v271
  %v273 = vrot.slane %v272, 2
  %v274 = vadd.f32 %v272, %v273
  %v275 = vrot.slane %v274, 1
  %v276 = vadd.f32 %v274, %v275
  %v277 = vmul.f32 %v276, %v265
  %vm278 = vcmask 1040384
  %v279 = vsel %vm278, %v266, %v277
  %v281 = vrot.slane %v279, 6
  %v283 = vrot.slane %v279, 4
  %v285 = vrot.slane %v279, 2
  %vm287 = vcmask 1041408
  %v288 = vsel %vm287, %v279, %v281
  %vm289 = vcmask 1043456
  %v290 = vsel %vm289, %v288, %v283
  %vm291 = vcmask 1045504
  %v292 = vsel %vm291, %v290, %v285
  %v293 = vadd.f32 %v254, %v292
  %v294 = vadd.f32 %v255, %v292
  %v295 = vld [vmem:[%s1 + $0x130] sm:$0xff]
  %v296 = vld [vmem:[%s1 + $0x138] sm:$0xff]
  %v297 = vld [vmem:[%s1 + $0x60] sm:$0xff]
  %v298 = vld [vmem:[%s1 + $0x68] sm:$0xff]
  %v299 = vld [vmem:[%s1 + $0x70] sm:$0xff]
  %v300 = vld [vmem:[%s1 + $0x78] sm:$0xff]
  %v301 = vld [vmem:[%s1 + $0x80] sm:$0xff]
  %v302 = vld [vmem:[%s1 + $0x88] sm:$0xff]
  %v303 = vld [vmem:[%s1 + $0x90] sm:$0xff]
  %v304 = vld [vmem:[%s1 + $0x98] sm:$0xff]
  %v305 = vld [vmem:[%s1 + $0xa0] sm:$0x1]
  %v306 = vld [vmem:[%s1 + $0xa8] sm:$0x1]
  %v307 = vlaneseq
  %v308 = vshrl.u32 %v307, 7
  %v309 = vsub.s32 0, %v308
  %v310 = vrot.slane %v305, %v309
  %v312 = vsel %vm140, %v293, 0
  %v315 = vsel %vm140, %v294, 0
  %317 = vmatprep.subr.mxu0 0.0
  %318 = vmatpush1.msra.mxu0 0.0
  %319 = vmatprep.subr.mxu0 0.0
  %320 = vmatpush1.msra.mxu0 0.0
  %321 = vmatprep.subr.mxu0 0.0
  %322 = vmatpush1.msra.mxu0 0.0
  %323 = vmatprep.subr.mxu0 0.0
  %324 = vmatpush1.msra.mxu0 0.0
  %325 = vmatprep.subr.mxu0 0.0
  %326 = vmatpush1.msra.mxu0 0.0
  %327 = vmatprep.subr.mxu0 0.0
  %328 = vmatpush1.msra.mxu0 0.0
  %329 = vmatprep.subr.mxu0 0.0
  %330 = vmatpush1.msra.mxu0 0.0
  %331 = vmatprep.subr.mxu0 0.0
  %332 = vmatpush1.msra.mxu0 0.0
  %333 = vmatprep.subr.mxu0 0.0
  %334 = vmatpush1.msra.mxu0 0.0
  %335 = vmatprep.subr.mxu0 0.0
  %336 = vmatpush1.msra.mxu0 0.0
  %337 = vmatprep.subr.mxu0 0.0
  %338 = vmatpush1.msra.mxu0 0.0
  %339 = vmatprep.subr.mxu0 0.0
  %340 = vmatpush1.msra.mxu0 0.0
  %341 = vmatprep.subr.mxu0 0.0
  %342 = vmatpush1.msra.mxu0 %v300
  %343 = vmatprep.subr.mxu0 0.0
  %344 = vmatpush1.msra.mxu0 %v299
  %345 = vmatprep.subr.mxu0 0.0
  %346 = vmatpush1.msra.mxu0 %v298
  %347 = vmatprep.subr.mxu0 0.0
  %348 = vmatpush1.msra.mxu0 %v297
  %349 = vmatprep.subr.mxu0 0.0
  %350 = vmatpush2.msra.mxu0 0.0
  %351 = vmatprep.subr.mxu0 0.0
  %352 = vmatpush2.msra.mxu0 0.0
  %353 = vmatprep.subr.mxu0 0.0
  %354 = vmatpush2.msra.mxu0 0.0
  %355 = vmatprep.subr.mxu0 0.0
  %356 = vmatpush2.msra.mxu0 0.0
  %357 = vmatprep.subr.mxu0 0.0
  %358 = vmatpush2.msra.mxu0 0.0
  %359 = vmatprep.subr.mxu0 0.0
  %360 = vmatpush2.msra.mxu0 0.0
  %361 = vmatprep.subr.mxu0 0.0
  %362 = vmatpush2.msra.mxu0 0.0
  %363 = vmatprep.subr.mxu0 0.0
  %364 = vmatpush2.msra.mxu0 0.0
  %365 = vmatprep.subr.mxu0 0.0
  %366 = vmatpush2.msra.mxu0 0.0
  %367 = vmatprep.subr.mxu0 0.0
  %368 = vmatpush2.msra.mxu0 0.0
  %369 = vmatprep.subr.mxu0 0.0
  %370 = vmatpush2.msra.mxu0 0.0
  %371 = vmatprep.subr.mxu0 0.0
  %372 = vmatpush2.msra.mxu0 0.0
  %373 = vmatprep.subr.mxu0 0.0
  %374 = vmatpush2.msra.mxu0 0.0
  %375 = vmatprep.subr.mxu0 0.0
  %376 = vmatpush2.msra.mxu0 0.0
  %377 = vmatprep.subr.mxu0 0.0
  %378 = vmatpush2.msra.mxu0 0.0
  %379 = vmatprep.subr.mxu0 0.0
  %380 = vmatpush2.msra.mxu0 0.0
  %381 = vmatprep.mubr.f32.mxu0 0.0
  %382 = vmatmul.mubr.f32.gmra.mxu0 %v312
  %v383 = vpop.f32.mrf.mxu0
  %v384 = vadd.f32 %v310, %v383
  %v385 = vpop.f32.mrf.mxu0
  %386 = vmatprep.mubr.f32.mxu0 0.0
  %387 = vmatmul.mubr.f32.gmra.mxu0 %v315
  %v388 = vpop.f32.mrf.mxu0
  %v389 = vadd.f32 %v310, %v388
  %v390 = vpop.f32.mrf.mxu0
  %391 = vdwg.mxu0
  %v392 = vlaneseq
  %v393 = vshrl.u32 %v392, 7
  %v394 = vsub.s32 0, %v393
  %v395 = vrot.slane %v306, %v394
  %v397 = vsel %vm140, 0.0, 0
  %399 = vmatprep.subr.mxu0 0.0
  %400 = vmatpush1.msra.mxu0 0.0
  %401 = vmatprep.subr.mxu0 0.0
  %402 = vmatpush1.msra.mxu0 0.0
  %403 = vmatprep.subr.mxu0 0.0
  %404 = vmatpush1.msra.mxu0 0.0
  %405 = vmatprep.subr.mxu0 0.0
  %406 = vmatpush1.msra.mxu0 0.0
  %407 = vmatprep.subr.mxu0 0.0
  %408 = vmatpush1.msra.mxu0 0.0
  %409 = vmatprep.subr.mxu0 0.0
  %410 = vmatpush1.msra.mxu0 0.0
  %411 = vmatprep.subr.mxu0 0.0
  %412 = vmatpush1.msra.mxu0 0.0
  %413 = vmatprep.subr.mxu0 0.0
  %414 = vmatpush1.msra.mxu0 0.0
  %415 = vmatprep.subr.mxu0 0.0
  %416 = vmatpush1.msra.mxu0 0.0
  %417 = vmatprep.subr.mxu0 0.0
  %418 = vmatpush1.msra.mxu0 0.0
  %419 = vmatprep.subr.mxu0 0.0
  %420 = vmatpush1.msra.mxu0 0.0
  %421 = vmatprep.subr.mxu0 0.0
  %422 = vmatpush1.msra.mxu0 0.0
  %423 = vmatprep.subr.mxu0 0.0
  %424 = vmatpush1.msra.mxu0 %v304
  %425 = vmatprep.subr.mxu0 0.0
  %426 = vmatpush1.msra.mxu0 %v303
  %427 = vmatprep.subr.mxu0 0.0
  %428 = vmatpush1.msra.mxu0 %v302
  %429 = vmatprep.subr.mxu0 0.0
  %430 = vmatpush1.msra.mxu0 %v301
  %431 = vmatprep.subr.mxu0 0.0
  %432 = vmatpush2.msra.mxu0 0.0
  %433 = vmatprep.subr.mxu0 0.0
  %434 = vmatpush2.msra.mxu0 0.0
  %435 = vmatprep.subr.mxu0 0.0
  %436 = vmatpush2.msra.mxu0 0.0
  %437 = vmatprep.subr.mxu0 0.0
  %438 = vmatpush2.msra.mxu0 0.0
  %439 = vmatprep.subr.mxu0 0.0
  %440 = vmatpush2.msra.mxu0 0.0
  %441 = vmatprep.subr.mxu0 0.0
  %442 = vmatpush2.msra.mxu0 0.0
  %443 = vmatprep.subr.mxu0 0.0
  %444 = vmatpush2.msra.mxu0 0.0
  %445 = vmatprep.subr.mxu0 0.0
  %446 = vmatpush2.msra.mxu0 0.0
  %447 = vmatprep.subr.mxu0 0.0
  %448 = vmatpush2.msra.mxu0 0.0
  %449 = vmatprep.subr.mxu0 0.0
  %450 = vmatpush2.msra.mxu0 0.0
  %451 = vmatprep.subr.mxu0 0.0
  %452 = vmatpush2.msra.mxu0 0.0
  %453 = vmatprep.subr.mxu0 0.0
  %454 = vmatpush2.msra.mxu0 0.0
  %455 = vmatprep.subr.mxu0 0.0
  %456 = vmatpush2.msra.mxu0 0.0
  %457 = vmatprep.subr.mxu0 0.0
  %458 = vmatpush2.msra.mxu0 0.0
  %459 = vmatprep.subr.mxu0 0.0
  %460 = vmatpush2.msra.mxu0 0.0
  %461 = vmatprep.subr.mxu0 0.0
  %462 = vmatpush2.msra.mxu0 0.0
  %463 = vmatprep.mubr.f32.mxu0 0.0
  %464 = vmatmul.mubr.f32.gmra.mxu0 %v397
  %v465 = vpop.f32.mrf.mxu0
  %v466 = vadd.f32 0.0, %v465
  %v467 = vpop.f32.mrf.mxu0
  %468 = vdwg.mxu0
  %v469 = vadd.f32 %v384, %v466
  %v470 = vxor.u32 %v469, 2147483648
  %v471 = vmul.f32 %v470, 1.442695
  %v472 = vpow.pop %v471
  %v473 = vadd.f32 %v472, 1.0
  %v474 = vrcp.pop %v473
  %v475 = vmul.f32 1.0, %v474
  %477 = vrot.lane.b32.xlu0 %v395, 64
  %v478 = vpop.permute.xlu0 %477
  %v480 = vadd.f32 %v466, %v478
  %482 = vrot.lane.b32.xlu0 %v480, 64
  %v483 = vpop.permute.xlu0 %482
  %v485 = vmul.f32 %v475, %v483
  %487 = vrot.lane.b32.xlu0 %v485, 64
  %v488 = vpop.permute.xlu0 %487
  %v490 = vadd.f32 %v384, %v488
  %v491 = vtanh.pop %v490
  %v492 = vsub.f32 1.0, %v475
  %494 = vrot.lane.b32.xlu0 %v491, 96
  %v495 = vpop.permute.xlu0 %494
  %v497 = vmul.f32 %v492, %v495
  %v498 = vmul.f32 %v475, 0.0
  %v499 = vadd.f32 %v497, %v498
  %501 = vrot.lane.b32.xlu0 %v499, 96
  %v502 = vpop.permute.xlu0 %501
  %v504 = vmul.f32 %v295, %v502
  %v505 = vsub.f32 1.0, %v295
  %v506 = vmul.f32 %v505, 0.0
  %v507 = vadd.f32 %v504, %v506
  %v509 = vsel %vm140, %v507, 0
  %511 = vmatprep.subr.mxu0 0.0
  %512 = vmatpush1.msra.mxu0 0.0
  %513 = vmatprep.subr.mxu0 0.0
  %514 = vmatpush1.msra.mxu0 0.0
  %515 = vmatprep.subr.mxu0 0.0
  %516 = vmatpush1.msra.mxu0 0.0
  %517 = vmatprep.subr.mxu0 0.0
  %518 = vmatpush1.msra.mxu0 0.0
  %519 = vmatprep.subr.mxu0 0.0
  %520 = vmatpush1.msra.mxu0 0.0
  %521 = vmatprep.subr.mxu0 0.0
  %522 = vmatpush1.msra.mxu0 0.0
  %523 = vmatprep.subr.mxu0 0.0
  %524 = vmatpush1.msra.mxu0 0.0
  %525 = vmatprep.subr.mxu0 0.0
  %526 = vmatpush1.msra.mxu0 0.0
  %527 = vmatprep.subr.mxu0 0.0
  %528 = vmatpush1.msra.mxu0 0.0
  %529 = vmatprep.subr.mxu0 0.0
  %530 = vmatpush1.msra.mxu0 0.0
  %531 = vmatprep.subr.mxu0 0.0
  %532 = vmatpush1.msra.mxu0 0.0
  %533 = vmatprep.subr.mxu0 0.0
  %534 = vmatpush1.msra.mxu0 0.0
  %535 = vmatprep.subr.mxu0 0.0
  %536 = vmatpush1.msra.mxu0 %v304
  %537 = vmatprep.subr.mxu0 0.0
  %538 = vmatpush1.msra.mxu0 %v303
  %539 = vmatprep.subr.mxu0 0.0
  %540 = vmatpush1.msra.mxu0 %v302
  %541 = vmatprep.subr.mxu0 0.0
  %542 = vmatpush1.msra.mxu0 %v301
  %543 = vmatprep.subr.mxu0 0.0
  %544 = vmatpush2.msra.mxu0 0.0
  %545 = vmatprep.subr.mxu0 0.0
  %546 = vmatpush2.msra.mxu0 0.0
  %547 = vmatprep.subr.mxu0 0.0
  %548 = vmatpush2.msra.mxu0 0.0
  %549 = vmatprep.subr.mxu0 0.0
  %550 = vmatpush2.msra.mxu0 0.0
  %551 = vmatprep.subr.mxu0 0.0
  %552 = vmatpush2.msra.mxu0 0.0
  %553 = vmatprep.subr.mxu0 0.0
  %554 = vmatpush2.msra.mxu0 0.0
  %555 = vmatprep.subr.mxu0 0.0
  %556 = vmatpush2.msra.mxu0 0.0
  %557 = vmatprep.subr.mxu0 0.0
  %558 = vmatpush2.msra.mxu0 0.0
  %559 = vmatprep.subr.mxu0 0.0
  %560 = vmatpush2.msra.mxu0 0.0
  %561 = vmatprep.subr.mxu0 0.0
  %562 = vmatpush2.msra.mxu0 0.0
  %563 = vmatprep.subr.mxu0 0.0
  %564 = vmatpush2.msra.mxu0 0.0
  %565 = vmatprep.subr.mxu0 0.0
  %566 = vmatpush2.msra.mxu0 0.0
  %567 = vmatprep.subr.mxu0 0.0
  %568 = vmatpush2.msra.mxu0 0.0
  %569 = vmatprep.subr.mxu0 0.0
  %570 = vmatpush2.msra.mxu0 0.0
  %571 = vmatprep.subr.mxu0 0.0
  %572 = vmatpush2.msra.mxu0 0.0
  %573 = vmatprep.subr.mxu0 0.0
  %574 = vmatpush2.msra.mxu0 0.0
  %575 = vmatprep.mubr.f32.mxu0 0.0
  %576 = vmatmul.mubr.f32.gmra.mxu0 %v509
  %v577 = vpop.f32.mrf.mxu0
  %v578 = vadd.f32 0.0, %v577
  %v579 = vpop.f32.mrf.mxu0
  %580 = vdwg.mxu0
  %v582 = vrot.slane %v578, 6
  %v584 = vadd.f32 %v384, %v582
  %v585 = vxor.u32 %v584, 2147483648
  %v586 = vmul.f32 %v585, 1.442695
  %v587 = vpow.pop %v586
  %v588 = vadd.f32 %v587, 1.0
  %v589 = vrcp.pop %v588
  %v590 = vmul.f32 1.0, %v589
  %v591 = vadd.f32 %v578, %v478
  %v593 = vrot.slane %v591, 6
  %594 = vrot.lane.b32.xlu0 %v593, 64
  %v595 = vpop.permute.xlu0 %594
  %v597 = vmul.f32 %v590, %v595
  %599 = vrot.lane.b32.xlu0 %v597, 64
  %v600 = vpop.permute.xlu0 %599
  %v602 = vadd.f32 %v384, %v600
  %v603 = vtanh.pop %v602
  %v604 = vsub.f32 1.0, %v590
  %606 = vrot.lane.b32.xlu0 %v603, 96
  %v607 = vpop.permute.xlu0 %606
  %v609 = vmul.f32 %v604, %v607
  %v610 = vrot.slane %v507, 6
  %611 = vrot.lane.b32.xlu0 %v610, 32
  %v612 = vpop.permute.xlu0 %611
  %v614 = vmul.f32 %v590, %v612
  %v615 = vadd.f32 %v609, %v614
  %617 = vrot.lane.b32.xlu0 %v615, 96
  %v618 = vpop.permute.xlu0 %617
  %v620 = vmul.f32 %v295, %v618
  %v622 = vmul.f32 %v505, %v610
  %v623 = vadd.f32 %v620, %v622
  %v625 = vrot.slane %v623, 2
  %v626 = vsel %vm140, %v625, 0
  %628 = vmatprep.subr.mxu0 0.0
  %629 = vmatpush1.msra.mxu0 0.0
  %630 = vmatprep.subr.mxu0 0.0
  %631 = vmatpush1.msra.mxu0 0.0
  %632 = vmatprep.subr.mxu0 0.0
  %633 = vmatpush1.msra.mxu0 0.0
  %634 = vmatprep.subr.mxu0 0.0
  %635 = vmatpush1.msra.mxu0 0.0
  %636 = vmatprep.subr.mxu0 0.0
  %637 = vmatpush1.msra.mxu0 0.0
  %638 = vmatprep.subr.mxu0 0.0
  %639 = vmatpush1.msra.mxu0 0.0
  %640 = vmatprep.subr.mxu0 0.0
  %641 = vmatpush1.msra.mxu0 0.0
  %642 = vmatprep.subr.mxu0 0.0
  %643 = vmatpush1.msra.mxu0 0.0
  %644 = vmatprep.subr.mxu0 0.0
  %645 = vmatpush1.msra.mxu0 0.0
  %646 = vmatprep.subr.mxu0 0.0
  %647 = vmatpush1.msra.mxu0 0.0
  %648 = vmatprep.subr.mxu0 0.0
  %649 = vmatpush1.msra.mxu0 0.0
  %650 = vmatprep.subr.mxu0 0.0
  %651 = vmatpush1.msra.mxu0 0.0
  %652 = vmatprep.subr.mxu0 0.0
  %653 = vmatpush1.msra.mxu0 %v304
  %654 = vmatprep.subr.mxu0 0.0
  %655 = vmatpush1.msra.mxu0 %v303
  %656 = vmatprep.subr.mxu0 0.0
  %657 = vmatpush1.msra.mxu0 %v302
  %658 = vmatprep.subr.mxu0 0.0
  %659 = vmatpush1.msra.mxu0 %v301
  %660 = vmatprep.subr.mxu0 0.0
  %661 = vmatpush2.msra.mxu0 0.0
  %662 = vmatprep.subr.mxu0 0.0
  %663 = vmatpush2.msra.mxu0 0.0
  %664 = vmatprep.subr.mxu0 0.0
  %665 = vmatpush2.msra.mxu0 0.0
  %666 = vmatprep.subr.mxu0 0.0
  %667 = vmatpush2.msra.mxu0 0.0
  %668 = vmatprep.subr.mxu0 0.0
  %669 = vmatpush2.msra.mxu0 0.0
  %670 = vmatprep.subr.mxu0 0.0
  %671 = vmatpush2.msra.mxu0 0.0
  %672 = vmatprep.subr.mxu0 0.0
  %673 = vmatpush2.msra.mxu0 0.0
  %674 = vmatprep.subr.mxu0 0.0
  %675 = vmatpush2.msra.mxu0 0.0
  %676 = vmatprep.subr.mxu0 0.0
  %677 = vmatpush2.msra.mxu0 0.0
  %678 = vmatprep.subr.mxu0 0.0
  %679 = vmatpush2.msra.mxu0 0.0
  %680 = vmatprep.subr.mxu0 0.0
  %681 = vmatpush2.msra.mxu0 0.0
  %682 = vmatprep.subr.mxu0 0.0
  %683 = vmatpush2.msra.mxu0 0.0
  %684 = vmatprep.subr.mxu0 0.0
  %685 = vmatpush2.msra.mxu0 0.0
  %686 = vmatprep.subr.mxu0 0.0
  %687 = vmatpush2.msra.mxu0 0.0
  %688 = vmatprep.subr.mxu0 0.0
  %689 = vmatpush2.msra.mxu0 0.0
  %690 = vmatprep.subr.mxu0 0.0
  %691 = vmatpush2.msra.mxu0 0.0
  %692 = vmatprep.mubr.f32.mxu0 0.0
  %693 = vmatmul.mubr.f32.gmra.mxu0 %v626
  %v694 = vpop.f32.mrf.mxu0
  %v695 = vadd.f32 0.0, %v694
  %v696 = vpop.f32.mrf.mxu0
  %697 = vdwg.mxu0
  %v699 = vrot.slane %v695, 4
  %v701 = vadd.f32 %v384, %v699
  %v702 = vxor.u32 %v701, 2147483648
  %v703 = vmul.f32 %v702, 1.442695
  %v704 = vpow.pop %v703
  %v705 = vadd.f32 %v704, 1.0
  %v706 = vrcp.pop %v705
  %v707 = vmul.f32 1.0, %v706
  %v708 = vadd.f32 %v695, %v478
  %v710 = vrot.slane %v708, 4
  %711 = vrot.lane.b32.xlu0 %v710, 64
  %v712 = vpop.permute.xlu0 %711
  %v714 = vmul.f32 %v707, %v712
  %716 = vrot.lane.b32.xlu0 %v714, 64
  %v717 = vpop.permute.xlu0 %716
  %v719 = vadd.f32 %v384, %v717
  %v720 = vtanh.pop %v719
  %v721 = vsub.f32 1.0, %v707
  %723 = vrot.lane.b32.xlu0 %v720, 96
  %v724 = vpop.permute.xlu0 %723
  %v726 = vmul.f32 %v721, %v724
  %v727 = vrot.slane %v623, 6
  %728 = vrot.lane.b32.xlu0 %v727, 32
  %v729 = vpop.permute.xlu0 %728
  %v731 = vmul.f32 %v707, %v729
  %v732 = vadd.f32 %v726, %v731
  %734 = vrot.lane.b32.xlu0 %v732, 96
  %v735 = vpop.permute.xlu0 %734
  %v737 = vmul.f32 %v295, %v735
  %v739 = vmul.f32 %v505, %v727
  %v740 = vadd.f32 %v737, %v739
  %v742 = vrot.slane %v740, 4
  %v743 = vsel %vm140, %v742, 0
  %745 = vmatprep.subr.mxu0 0.0
  %746 = vmatpush1.msra.mxu0 0.0
  %747 = vmatprep.subr.mxu0 0.0
  %748 = vmatpush1.msra.mxu0 0.0
  %749 = vmatprep.subr.mxu0 0.0
  %750 = vmatpush1.msra.mxu0 0.0
  %751 = vmatprep.subr.mxu0 0.0
  %752 = vmatpush1.msra.mxu0 0.0
  %753 = vmatprep.subr.mxu0 0.0
  %754 = vmatpush1.msra.mxu0 0.0
  %755 = vmatprep.subr.mxu0 0.0
  %756 = vmatpush1.msra.mxu0 0.0
  %757 = vmatprep.subr.mxu0 0.0
  %758 = vmatpush1.msra.mxu0 0.0
  %759 = vmatprep.subr.mxu0 0.0
  %760 = vmatpush1.msra.mxu0 0.0
  %761 = vmatprep.subr.mxu0 0.0
  %762 = vmatpush1.msra.mxu0 0.0
  %763 = vmatprep.subr.mxu0 0.0
  %764 = vmatpush1.msra.mxu0 0.0
  %765 = vmatprep.subr.mxu0 0.0
  %766 = vmatpush1.msra.mxu0 0.0
  %767 = vmatprep.subr.mxu0 0.0
  %768 = vmatpush1.msra.mxu0 0.0
  %769 = vmatprep.subr.mxu0 0.0
  %770 = vmatpush1.msra.mxu0 %v304
  %771 = vmatprep.subr.mxu0 0.0
  %772 = vmatpush1.msra.mxu0 %v303
  %773 = vmatprep.subr.mxu0 0.0
  %774 = vmatpush1.msra.mxu0 %v302
  %775 = vmatprep.subr.mxu0 0.0
  %776 = vmatpush1.msra.mxu0 %v301
  %777 = vmatprep.subr.mxu0 0.0
  %778 = vmatpush2.msra.mxu0 0.0
  %779 = vmatprep.subr.mxu0 0.0
  %780 = vmatpush2.msra.mxu0 0.0
  %781 = vmatprep.subr.mxu0 0.0
  %782 = vmatpush2.msra.mxu0 0.0
  %783 = vmatprep.subr.mxu0 0.0
  %784 = vmatpush2.msra.mxu0 0.0
  %785 = vmatprep.subr.mxu0 0.0
  %786 = vmatpush2.msra.mxu0 0.0
  %787 = vmatprep.subr.mxu0 0.0
  %788 = vmatpush2.msra.mxu0 0.0
  %789 = vmatprep.subr.mxu0 0.0
  %790 = vmatpush2.msra.mxu0 0.0
  %791 = vmatprep.subr.mxu0 0.0
  %792 = vmatpush2.msra.mxu0 0.0
  %793 = vmatprep.subr.mxu0 0.0
  %794 = vmatpush2.msra.mxu0 0.0
  %795 = vmatprep.subr.mxu0 0.0
  %796 = vmatpush2.msra.mxu0 0.0
  %797 = vmatprep.subr.mxu0 0.0
  %798 = vmatpush2.msra.mxu0 0.0
  %799 = vmatprep.subr.mxu0 0.0
  %800 = vmatpush2.msra.mxu0 0.0
  %801 = vmatprep.subr.mxu0 0.0
  %802 = vmatpush2.msra.mxu0 0.0
  %803 = vmatprep.subr.mxu0 0.0
  %804 = vmatpush2.msra.mxu0 0.0
  %805 = vmatprep.subr.mxu0 0.0
  %806 = vmatpush2.msra.mxu0 0.0
  %807 = vmatprep.subr.mxu0 0.0
  %808 = vmatpush2.msra.mxu0 0.0
  %809 = vmatprep.mubr.f32.mxu0 0.0
  %810 = vmatmul.mubr.f32.gmra.mxu0 %v743
  %v811 = vpop.f32.mrf.mxu0
  %v812 = vadd.f32 0.0, %v811
  %v813 = vpop.f32.mrf.mxu0
  %814 = vdwg.mxu0
  %v816 = vrot.slane %v812, 2
  %v818 = vadd.f32 %v384, %v816
  %v819 = vxor.u32 %v818, 2147483648
  %v820 = vmul.f32 %v819, 1.442695
  %v821 = vpow.pop %v820
  %v822 = vadd.f32 %v821, 1.0
  %v823 = vrcp.pop %v822
  %v824 = vmul.f32 1.0, %v823
  %v825 = vadd.f32 %v812, %v478
  %v827 = vrot.slane %v825, 2
  %828 = vrot.lane.b32.xlu0 %v827, 64
  %v829 = vpop.permute.xlu0 %828
  %v831 = vmul.f32 %v824, %v829
  %833 = vrot.lane.b32.xlu0 %v831, 64
  %v834 = vpop.permute.xlu0 %833
  %v836 = vadd.f32 %v384, %v834
  %v837 = vtanh.pop %v836
  %v838 = vsub.f32 1.0, %v824
  %840 = vrot.lane.b32.xlu0 %v837, 96
  %v841 = vpop.permute.xlu0 %840
  %v843 = vmul.f32 %v838, %v841
  %v844 = vrot.slane %v740, 6
  %845 = vrot.lane.b32.xlu0 %v844, 32
  %v846 = vpop.permute.xlu0 %845
  %v848 = vmul.f32 %v824, %v846
  %v849 = vadd.f32 %v843, %v848
  %851 = vrot.lane.b32.xlu0 %v849, 96
  %v852 = vpop.permute.xlu0 %851
  %v854 = vmul.f32 %v295, %v852
  %v856 = vmul.f32 %v505, %v844
  %v857 = vadd.f32 %v854, %v856
  %v859 = vrot.slane %v857, 6
  %v860 = vsel %vm140, %v859, 0
  %862 = vmatprep.subr.mxu0 0.0
  %863 = vmatpush1.msra.mxu0 0.0
  %864 = vmatprep.subr.mxu0 0.0
  %865 = vmatpush1.msra.mxu0 0.0
  %866 = vmatprep.subr.mxu0 0.0
  %867 = vmatpush1.msra.mxu0 0.0
  %868 = vmatprep.subr.mxu0 0.0
  %869 = vmatpush1.msra.mxu0 0.0
  %870 = vmatprep.subr.mxu0 0.0
  %871 = vmatpush1.msra.mxu0 0.0
  %872 = vmatprep.subr.mxu0 0.0
  %873 = vmatpush1.msra.mxu0 0.0
  %874 = vmatprep.subr.mxu0 0.0
  %875 = vmatpush1.msra.mxu0 0.0
  %876 = vmatprep.subr.mxu0 0.0
  %877 = vmatpush1.msra.mxu0 0.0
  %878 = vmatprep.subr.mxu0 0.0
  %879 = vmatpush1.msra.mxu0 0.0
  %880 = vmatprep.subr.mxu0 0.0
  %881 = vmatpush1.msra.mxu0 0.0
  %882 = vmatprep.subr.mxu0 0.0
  %883 = vmatpush1.msra.mxu0 0.0
  %884 = vmatprep.subr.mxu0 0.0
  %885 = vmatpush1.msra.mxu0 0.0
  %886 = vmatprep.subr.mxu0 0.0
  %887 = vmatpush1.msra.mxu0 %v304
  %888 = vmatprep.subr.mxu0 0.0
  %889 = vmatpush1.msra.mxu0 %v303
  %890 = vmatprep.subr.mxu0 0.0
  %891 = vmatpush1.msra.mxu0 %v302
  %892 = vmatprep.subr.mxu0 0.0
  %893 = vmatpush1.msra.mxu0 %v301
  %894 = vmatprep.subr.mxu0 0.0
  %895 = vmatpush2.msra.mxu0 0.0
  %896 = vmatprep.subr.mxu0 0.0
  %897 = vmatpush2.msra.mxu0 0.0
  %898 = vmatprep.subr.mxu0 0.0
  %899 = vmatpush2.msra.mxu0 0.0
  %900 = vmatprep.subr.mxu0 0.0
  %901 = vmatpush2.msra.mxu0 0.0
  %902 = vmatprep.subr.mxu0 0.0
  %903 = vmatpush2.msra.mxu0 0.0
  %904 = vmatprep.subr.mxu0 0.0
  %905 = vmatpush2.msra.mxu0 0.0
  %906 = vmatprep.subr.mxu0 0.0
  %907 = vmatpush2.msra.mxu0 0.0
  %908 = vmatprep.subr.mxu0 0.0
  %909 = vmatpush2.msra.mxu0 0.0
  %910 = vmatprep.subr.mxu0 0.0
  %911 = vmatpush2.msra.mxu0 0.0
  %912 = vmatprep.subr.mxu0 0.0
  %913 = vmatpush2.msra.mxu0 0.0
  %914 = vmatprep.subr.mxu0 0.0
  %915 = vmatpush2.msra.mxu0 0.0
  %916 = vmatprep.subr.mxu0 0.0
  %917 = vmatpush2.msra.mxu0 0.0
  %918 = vmatprep.subr.mxu0 0.0
  %919 = vmatpush2.msra.mxu0 0.0
  %920 = vmatprep.subr.mxu0 0.0
  %921 = vmatpush2.msra.mxu0 0.0
  %922 = vmatprep.subr.mxu0 0.0
  %923 = vmatpush2.msra.mxu0 0.0
  %924 = vmatprep.subr.mxu0 0.0
  %925 = vmatpush2.msra.mxu0 0.0
  %926 = vmatprep.mubr.f32.mxu0 0.0
  %927 = vmatmul.mubr.f32.gmra.mxu0 %v860
  %v928 = vpop.f32.mrf.mxu0
  %v929 = vadd.f32 0.0, %v928
  %v930 = vpop.f32.mrf.mxu0
  %931 = vdwg.mxu0
  %v932 = vadd.f32 %v389, %v929
  %v933 = vxor.u32 %v932, 2147483648
  %v934 = vmul.f32 %v933, 1.442695
  %v935 = vpow.pop %v934
  %v936 = vadd.f32 %v935, 1.0
  %v937 = vrcp.pop %v936
  %v938 = vmul.f32 1.0, %v937
  %v939 = vadd.f32 %v929, %v478
  %941 = vrot.lane.b32.xlu0 %v939, 64
  %v942 = vpop.permute.xlu0 %941
  %v944 = vmul.f32 %v938, %v942
  %946 = vrot.lane.b32.xlu0 %v944, 64
  %v947 = vpop.permute.xlu0 %946
  %v949 = vadd.f32 %v389, %v947
  %v950 = vtanh.pop %v949
  %v951 = vsub.f32 1.0, %v938
  %953 = vrot.lane.b32.xlu0 %v950, 96
  %v954 = vpop.permute.xlu0 %953
  %v956 = vmul.f32 %v951, %v954
  %957 = vrot.lane.b32.xlu0 %v859, 32
  %v958 = vpop.permute.xlu0 %957
  %v960 = vmul.f32 %v938, %v958
  %v961 = vadd.f32 %v956, %v960
  %963 = vrot.lane.b32.xlu0 %v961, 96
  %v964 = vpop.permute.xlu0 %963
  %v966 = vmul.f32 %v296, %v964
  %v967 = vsub.f32 1.0, %v296
  %v969 = vmul.f32 %v967, %v859
  %v970 = vadd.f32 %v966, %v969
  %v972 = vsel %vm140, %v970, 0
  %974 = vmatprep.subr.mxu0 0.0
  %975 = vmatpush1.msra.mxu0 0.0
  %976 = vmatprep.subr.mxu0 0.0
  %977 = vmatpush1.msra.mxu0 0.0
  %978 = vmatprep.subr.mxu0 0.0
  %979 = vmatpush1.msra.mxu0 0.0
  %980 = vmatprep.subr.mxu0 0.0
  %981 = vmatpush1.msra.mxu0 0.0
  %982 = vmatprep.subr.mxu0 0.0
  %983 = vmatpush1.msra.mxu0 0.0
  %984 = vmatprep.subr.mxu0 0.0
  %985 = vmatpush1.msra.mxu0 0.0
  %986 = vmatprep.subr.mxu0 0.0
  %987 = vmatpush1.msra.mxu0 0.0
  %988 = vmatprep.subr.mxu0 0.0
  %989 = vmatpush1.msra.mxu0 0.0
  %990 = vmatprep.subr.mxu0 0.0
  %991 = vmatpush1.msra.mxu0 0.0
  %992 = vmatprep.subr.mxu0 0.0
  %993 = vmatpush1.msra.mxu0 0.0
  %994 = vmatprep.subr.mxu0 0.0
  %995 = vmatpush1.msra.mxu0 0.0
  %996 = vmatprep.subr.mxu0 0.0
  %997 = vmatpush1.msra.mxu0 0.0
  %998 = vmatprep.subr.mxu0 0.0
  %999 = vmatpush1.msra.mxu0 %v304
  %1000 = vmatprep.subr.mxu0 0.0
  %1001 = vmatpush1.msra.mxu0 %v303
  %1002 = vmatprep.subr.mxu0 0.0
  %1003 = vmatpush1.msra.mxu0 %v302
  %1004 = vmatprep.subr.mxu0 0.0
  %1005 = vmatpush1.msra.mxu0 %v301
  %1006 = vmatprep.subr.mxu0 0.0
  %1007 = vmatpush2.msra.mxu0 0.0
  %1008 = vmatprep.subr.mxu0 0.0
  %1009 = vmatpush2.msra.mxu0 0.0
  %1010 = vmatprep.subr.mxu0 0.0
  %1011 = vmatpush2.msra.mxu0 0.0
  %1012 = vmatprep.subr.mxu0 0.0
  %1013 = vmatpush2.msra.mxu0 0.0
  %1014 = vmatprep.subr.mxu0 0.0
  %1015 = vmatpush2.msra.mxu0 0.0
  %1016 = vmatprep.subr.mxu0 0.0
  %1017 = vmatpush2.msra.mxu0 0.0
  %1018 = vmatprep.subr.mxu0 0.0
  %1019 = vmatpush2.msra.mxu0 0.0
  %1020 = vmatprep.subr.mxu0 0.0
  %1021 = vmatpush2.msra.mxu0 0.0
  %1022 = vmatprep.subr.mxu0 0.0
  %1023 = vmatpush2.msra.mxu0 0.0
  %1024 = vmatprep.subr.mxu0 0.0
  %1025 = vmatpush2.msra.mxu0 0.0
  %1026 = vmatprep.subr.mxu0 0.0
  %1027 = vmatpush2.msra.mxu0 0.0
  %1028 = vmatprep.subr.mxu0 0.0
  %1029 = vmatpush2.msra.mxu0 0.0
  %1030 = vmatprep.subr.mxu0 0.0
  %1031 = vmatpush2.msra.mxu0 0.0
  %1032 = vmatprep.subr.mxu0 0.0
  %1033 = vmatpush2.msra.mxu0 0.0
  %1034 = vmatprep.subr.mxu0 0.0
  %1035 = vmatpush2.msra.mxu0 0.0
  %1036 = vmatprep.subr.mxu0 0.0
  %1037 = vmatpush2.msra.mxu0 0.0
  %1038 = vmatprep.mubr.f32.mxu0 0.0
  %1039 = vmatmul.mubr.f32.gmra.mxu0 %v972
  %v1040 = vpop.f32.mrf.mxu0
  %v1041 = vadd.f32 0.0, %v1040
  %v1042 = vpop.f32.mrf.mxu0
  %1043 = vdwg.mxu0
  %v1045 = vrot.slane %v1041, 6
  %v1047 = vadd.f32 %v389, %v1045
  %v1048 = vxor.u32 %v1047, 2147483648
  %v1049 = vmul.f32 %v1048, 1.442695
  %v1050 = vpow.pop %v1049
  %v1051 = vadd.f32 %v1050, 1.0
  %v1052 = vrcp.pop %v1051
  %v1053 = vmul.f32 1.0, %v1052
  %v1054 = vadd.f32 %v1041, %v478
  %v1056 = vrot.slane %v1054, 6
  %1057 = vrot.lane.b32.xlu0 %v1056, 64
  %v1058 = vpop.permute.xlu0 %1057
  %v1060 = vmul.f32 %v1053, %v1058
  %1062 = vrot.lane.b32.xlu0 %v1060, 64
  %v1063 = vpop.permute.xlu0 %1062
  %v1065 = vadd.f32 %v389, %v1063
  %v1066 = vtanh.pop %v1065
  %v1067 = vsub.f32 1.0, %v1053
  %1069 = vrot.lane.b32.xlu0 %v1066, 96
  %v1070 = vpop.permute.xlu0 %1069
  %v1072 = vmul.f32 %v1067, %v1070
  %v1073 = vrot.slane %v970, 6
  %1074 = vrot.lane.b32.xlu0 %v1073, 32
  %v1075 = vpop.permute.xlu0 %1074
  %v1077 = vmul.f32 %v1053, %v1075
  %v1078 = vadd.f32 %v1072, %v1077
  %1080 = vrot.lane.b32.xlu0 %v1078, 96
  %v1081 = vpop.permute.xlu0 %1080
  %v1083 = vmul.f32 %v296, %v1081
  %v1085 = vmul.f32 %v967, %v1073
  %v1086 = vadd.f32 %v1083, %v1085
  %v1088 = vrot.slane %v1086, 2
  %v1089 = vsel %vm140, %v1088, 0
  %1091 = vmatprep.subr.mxu0 0.0
  %1092 = vmatpush1.msra.mxu0 0.0
  %1093 = vmatprep.subr.mxu0 0.0
  %1094 = vmatpush1.msra.mxu0 0.0
  %1095 = vmatprep.subr.mxu0 0.0
  %1096 = vmatpush1.msra.mxu0 0.0
  %1097 = vmatprep.subr.mxu0 0.0
  %1098 = vmatpush1.msra.mxu0 0.0
  %1099 = vmatprep.subr.mxu0 0.0
  %1100 = vmatpush1.msra.mxu0 0.0
  %1101 = vmatprep.subr.mxu0 0.0
  %1102 = vmatpush1.msra.mxu0 0.0
  %1103 = vmatprep.subr.mxu0 0.0
  %1104 = vmatpush1.msra.mxu0 0.0
  %1105 = vmatprep.subr.mxu0 0.0
  %1106 = vmatpush1.msra.mxu0 0.0
  %1107 = vmatprep.subr.mxu0 0.0
  %1108 = vmatpush1.msra.mxu0 0.0
  %1109 = vmatprep.subr.mxu0 0.0
  %1110 = vmatpush1.msra.mxu0 0.0
  %1111 = vmatprep.subr.mxu0 0.0
  %1112 = vmatpush1.msra.mxu0 0.0
  %1113 = vmatprep.subr.mxu0 0.0
  %1114 = vmatpush1.msra.mxu0 0.0
  %1115 = vmatprep.subr.mxu0 0.0
  %1116 = vmatpush1.msra.mxu0 %v304
  %1117 = vmatprep.subr.mxu0 0.0
  %1118 = vmatpush1.msra.mxu0 %v303
  %1119 = vmatprep.subr.mxu0 0.0
  %1120 = vmatpush1.msra.mxu0 %v302
  %1121 = vmatprep.subr.mxu0 0.0
  %1122 = vmatpush1.msra.mxu0 %v301
  %1123 = vmatprep.subr.mxu0 0.0
  %1124 = vmatpush2.msra.mxu0 0.0
  %1125 = vmatprep.subr.mxu0 0.0
  %1126 = vmatpush2.msra.mxu0 0.0
  %1127 = vmatprep.subr.mxu0 0.0
  %1128 = vmatpush2.msra.mxu0 0.0
  %1129 = vmatprep.subr.mxu0 0.0
  %1130 = vmatpush2.msra.mxu0 0.0
  %1131 = vmatprep.subr.mxu0 0.0
  %1132 = vmatpush2.msra.mxu0 0.0
  %1133 = vmatprep.subr.mxu0 0.0
  %1134 = vmatpush2.msra.mxu0 0.0
  %1135 = vmatprep.subr.mxu0 0.0
  %1136 = vmatpush2.msra.mxu0 0.0
  %1137 = vmatprep.subr.mxu0 0.0
  %1138 = vmatpush2.msra.mxu0 0.0
  %1139 = vmatprep.subr.mxu0 0.0
  %1140 = vmatpush2.msra.mxu0 0.0
  %1141 = vmatprep.subr.mxu0 0.0
  %1142 = vmatpush2.msra.mxu0 0.0
  %1143 = vmatprep.subr.mxu0 0.0
  %1144 = vmatpush2.msra.mxu0 0.0
  %1145 = vmatprep.subr.mxu0 0.0
  %1146 = vmatpush2.msra.mxu0 0.0
  %1147 = vmatprep.subr.mxu0 0.0
  %1148 = vmatpush2.msra.mxu0 0.0
  %1149 = vmatprep.subr.mxu0 0.0
  %1150 = vmatpush2.msra.mxu0 0.0
  %1151 = vmatprep.subr.mxu0 0.0
  %1152 = vmatpush2.msra.mxu0 0.0
  %1153 = vmatprep.subr.mxu0 0.0
  %1154 = vmatpush2.msra.mxu0 0.0
  %1155 = vmatprep.mubr.f32.mxu0 0.0
  %1156 = vmatmul.mubr.f32.gmra.mxu0 %v1089
  %v1157 = vpop.f32.mrf.mxu0
  %v1158 = vadd.f32 0.0, %v1157
  %v1159 = vpop.f32.mrf.mxu0
  %1160 = vdwg.mxu0
  %v1162 = vrot.slane %v1158, 4
  %v1164 = vadd.f32 %v389, %v1162
  %v1165 = vxor.u32 %v1164, 2147483648
  %v1166 = vmul.f32 %v1165, 1.442695
  %v1167 = vpow.pop %v1166
  %v1168 = vadd.f32 %v1167, 1.0
  %v1169 = vrcp.pop %v1168
  %v1170 = vmul.f32 1.0, %v1169
  %v1171 = vadd.f32 %v1158, %v478
  %v1173 = vrot.slane %v1171, 4
  %1174 = vrot.lane.b32.xlu0 %v1173, 64
  %v1175 = vpop.permute.xlu0 %1174
  %v1177 = vmul.f32 %v1170, %v1175
  %1179 = vrot.lane.b32.xlu0 %v1177, 64
  %v1180 = vpop.permute.xlu0 %1179
  %v1182 = vadd.f32 %v389, %v1180
  %v1183 = vtanh.pop %v1182
  %v1184 = vsub.f32 1.0, %v1170
  %1186 = vrot.lane.b32.xlu0 %v1183, 96
  %v1187 = vpop.permute.xlu0 %1186
  %v1189 = vmul.f32 %v1184, %v1187
  %v1190 = vrot.slane %v1086, 6
  %1191 = vrot.lane.b32.xlu0 %v1190, 32
  %v1192 = vpop.permute.xlu0 %1191
  %v1194 = vmul.f32 %v1170, %v1192
  %v1195 = vadd.f32 %v1189, %v1194
  %1197 = vrot.lane.b32.xlu0 %v1195, 96
  %v1198 = vpop.permute.xlu0 %1197
  %v1200 = vmul.f32 %v296, %v1198
  %v1202 = vmul.f32 %v967, %v1190
  %v1203 = vadd.f32 %v1200, %v1202
  %v1205 = vrot.slane %v1203, 4
  %v1206 = vsel %vm140, %v1205, 0
  %1208 = vmatprep.subr.mxu0 0.0
  %1209 = vmatpush1.msra.mxu0 0.0
  %1210 = vmatprep.subr.mxu0 0.0
  %1211 = vmatpush1.msra.mxu0 0.0
  %1212 = vmatprep.subr.mxu0 0.0
  %1213 = vmatpush1.msra.mxu0 0.0
  %1214 = vmatprep.subr.mxu0 0.0
  %1215 = vmatpush1.msra.mxu0 0.0
  %1216 = vmatprep.subr.mxu0 0.0
  %1217 = vmatpush1.msra.mxu0 0.0
  %1218 = vmatprep.subr.mxu0 0.0
  %1219 = vmatpush1.msra.mxu0 0.0
  %1220 = vmatprep.subr.mxu0 0.0
  %1221 = vmatpush1.msra.mxu0 0.0
  %1222 = vmatprep.subr.mxu0 0.0
  %1223 = vmatpush1.msra.mxu0 0.0
  %1224 = vmatprep.subr.mxu0 0.0
  %1225 = vmatpush1.msra.mxu0 0.0
  %1226 = vmatprep.subr.mxu0 0.0
  %1227 = vmatpush1.msra.mxu0 0.0
  %1228 = vmatprep.subr.mxu0 0.0
  %1229 = vmatpush1.msra.mxu0 0.0
  %1230 = vmatprep.subr.mxu0 0.0
  %1231 = vmatpush1.msra.mxu0 0.0
  %1232 = vmatprep.subr.mxu0 0.0
  %1233 = vmatpush1.msra.mxu0 %v304
  %1234 = vmatprep.subr.mxu0 0.0
  %1235 = vmatpush1.msra.mxu0 %v303
  %1236 = vmatprep.subr.mxu0 0.0
  %1237 = vmatpush1.msra.mxu0 %v302
  %1238 = vmatprep.subr.mxu0 0.0
  %1239 = vmatpush1.msra.mxu0 %v301
  %1240 = vmatprep.subr.mxu0 0.0
  %1241 = vmatpush2.msra.mxu0 0.0
  %1242 = vmatprep.subr.mxu0 0.0
  %1243 = vmatpush2.msra.mxu0 0.0
  %1244 = vmatprep.subr.mxu0 0.0
  %1245 = vmatpush2.msra.mxu0 0.0
  %1246 = vmatprep.subr.mxu0 0.0
  %1247 = vmatpush2.msra.mxu0 0.0
  %1248 = vmatprep.subr.mxu0 0.0
  %1249 = vmatpush2.msra.mxu0 0.0
  %1250 = vmatprep.subr.mxu0 0.0
  %1251 = vmatpush2.msra.mxu0 0.0
  %1252 = vmatprep.subr.mxu0 0.0
  %1253 = vmatpush2.msra.mxu0 0.0
  %1254 = vmatprep.subr.mxu0 0.0
  %1255 = vmatpush2.msra.mxu0 0.0
  %1256 = vmatprep.subr.mxu0 0.0
  %1257 = vmatpush2.msra.mxu0 0.0
  %1258 = vmatprep.subr.mxu0 0.0
  %1259 = vmatpush2.msra.mxu0 0.0
  %1260 = vmatprep.subr.mxu0 0.0
  %1261 = vmatpush2.msra.mxu0 0.0
  %1262 = vmatprep.subr.mxu0 0.0
  %1263 = vmatpush2.msra.mxu0 0.0
  %1264 = vmatprep.subr.mxu0 0.0
  %1265 = vmatpush2.msra.mxu0 0.0
  %1266 = vmatprep.subr.mxu0 0.0
  %1267 = vmatpush2.msra.mxu0 0.0
  %1268 = vmatprep.subr.mxu0 0.0
  %1269 = vmatpush2.msra.mxu0 0.0
  %1270 = vmatprep.subr.mxu0 0.0
  %1271 = vmatpush2.msra.mxu0 0.0
  %1272 = vmatprep.mubr.f32.mxu0 0.0
  %1273 = vmatmul.mubr.f32.gmra.mxu0 %v1206
  %v1274 = vpop.f32.mrf.mxu0
  %v1275 = vadd.f32 0.0, %v1274
  %v1276 = vpop.f32.mrf.mxu0
  %1277 = vdwg.mxu0
  %v1279 = vrot.slane %v1275, 2
  %v1281 = vadd.f32 %v389, %v1279
  %v1282 = vxor.u32 %v1281, 2147483648
  %v1283 = vmul.f32 %v1282, 1.442695
  %v1284 = vpow.pop %v1283
  %v1285 = vadd.f32 %v1284, 1.0
  %v1286 = vrcp.pop %v1285
  %v1287 = vmul.f32 1.0, %v1286
  %v1288 = vadd.f32 %v1275, %v478
  %v1290 = vrot.slane %v1288, 2
  %1291 = vrot.lane.b32.xlu0 %v1290, 64
  %v1292 = vpop.permute.xlu0 %1291
  %v1294 = vmul.f32 %v1287, %v1292
  %1296 = vrot.lane.b32.xlu0 %v1294, 64
  %v1297 = vpop.permute.xlu0 %1296
  %v1299 = vadd.f32 %v389, %v1297
  %v1300 = vtanh.pop %v1299
  %v1301 = vsub.f32 1.0, %v1287
  %1303 = vrot.lane.b32.xlu0 %v1300, 96
  %v1304 = vpop.permute.xlu0 %1303
  %v1306 = vmul.f32 %v1301, %v1304
  %v1307 = vrot.slane %v1203, 6
  %1308 = vrot.lane.b32.xlu0 %v1307, 32
  %v1309 = vpop.permute.xlu0 %1308
  %v1311 = vmul.f32 %v1287, %v1309
  %v1312 = vadd.f32 %v1306, %v1311
  %1314 = vrot.lane.b32.xlu0 %v1312, 96
  %v1315 = vpop.permute.xlu0 %1314
  %v1317 = vmul.f32 %v296, %v1315
  %v1319 = vmul.f32 %v967, %v1307
  %v1320 = vadd.f32 %v1317, %v1319
  %v1321 = vsel %vm287, %v504, %v620
  %v1322 = vsel %vm289, %v1321, %v737
  %v1323 = vsel %vm291, %v1322, %v854
  %v1324 = vsel %vm287, %v966, %v1083
  %v1325 = vsel %vm289, %v1324, %v1200
  %v1326 = vsel %vm291, %v1325, %v1317
  %v1327 = vld [vmem:[%s1 + $0xb0] sm:$0xff]
  %v1328 = vld [vmem:[%s1 + $0xb8] sm:$0xff]
  %v1329 = vld [vmem:[%s1 + $0xc0] sm:$0xff]
  %v1330 = vld [vmem:[%s1 + $0xc8] sm:$0xff]
  %v1331 = vld [vmem:[%s1 + $0xd0] sm:$0xff]
  %v1332 = vld [vmem:[%s1 + $0xd8] sm:$0xff]
  %v1333 = vld [vmem:[%s1 + $0xe0] sm:$0xff]
  %v1334 = vld [vmem:[%s1 + $0xe8] sm:$0xff]
  %v1335 = vld [vmem:[%s1 + $0xf0] sm:$0x1]
  %v1336 = vld [vmem:[%s1 + $0xf8] sm:$0x1]
  %v1337 = vlaneseq
  %v1338 = vshrl.u32 %v1337, 7
  %v1339 = vsub.s32 0, %v1338
  %v1340 = vrot.slane %v1335, %v1339
  %v1342 = vsel %vm140, %v1323, 0
  %v1345 = vsel %vm140, %v1326, 0
  %1347 = vmatprep.subr.mxu0 0.0
  %1348 = vmatpush1.msra.mxu0 0.0
  %1349 = vmatprep.subr.mxu0 0.0
  %1350 = vmatpush1.msra.mxu0 0.0
  %1351 = vmatprep.subr.mxu0 0.0
  %1352 = vmatpush1.msra.mxu0 0.0
  %1353 = vmatprep.subr.mxu0 0.0
  %1354 = vmatpush1.msra.mxu0 0.0
  %1355 = vmatprep.subr.mxu0 0.0
  %1356 = vmatpush1.msra.mxu0 0.0
  %1357 = vmatprep.subr.mxu0 0.0
  %1358 = vmatpush1.msra.mxu0 0.0
  %1359 = vmatprep.subr.mxu0 0.0
  %1360 = vmatpush1.msra.mxu0 0.0
  %1361 = vmatprep.subr.mxu0 0.0
  %1362 = vmatpush1.msra.mxu0 0.0
  %1363 = vmatprep.subr.mxu0 0.0
  %1364 = vmatpush1.msra.mxu0 0.0
  %1365 = vmatprep.subr.mxu0 0.0
  %1366 = vmatpush1.msra.mxu0 0.0
  %1367 = vmatprep.subr.mxu0 0.0
  %1368 = vmatpush1.msra.mxu0 0.0
  %1369 = vmatprep.subr.mxu0 0.0
  %1370 = vmatpush1.msra.mxu0 0.0
  %1371 = vmatprep.subr.mxu0 0.0
  %1372 = vmatpush1.msra.mxu0 %v1330
  %1373 = vmatprep.subr.mxu0 0.0
  %1374 = vmatpush1.msra.mxu0 %v1329
  %1375 = vmatprep.subr.mxu0 0.0
  %1376 = vmatpush1.msra.mxu0 %v1328
  %1377 = vmatprep.subr.mxu0 0.0
  %1378 = vmatpush1.msra.mxu0 %v1327
  %1379 = vmatprep.subr.mxu0 0.0
  %1380 = vmatpush2.msra.mxu0 0.0
  %1381 = vmatprep.subr.mxu0 0.0
  %1382 = vmatpush2.msra.mxu0 0.0
  %1383 = vmatprep.subr.mxu0 0.0
  %1384 = vmatpush2.msra.mxu0 0.0
  %1385 = vmatprep.subr.mxu0 0.0
  %1386 = vmatpush2.msra.mxu0 0.0
  %1387 = vmatprep.subr.mxu0 0.0
  %1388 = vmatpush2.msra.mxu0 0.0
  %1389 = vmatprep.subr.mxu0 0.0
  %1390 = vmatpush2.msra.mxu0 0.0
  %1391 = vmatprep.subr.mxu0 0.0
  %1392 = vmatpush2.msra.mxu0 0.0
  %1393 = vmatprep.subr.mxu0 0.0
  %1394 = vmatpush2.msra.mxu0 0.0
  %1395 = vmatprep.subr.mxu0 0.0
  %1396 = vmatpush2.msra.mxu0 0.0
  %1397 = vmatprep.subr.mxu0 0.0
  %1398 = vmatpush2.msra.mxu0 0.0
  %1399 = vmatprep.subr.mxu0 0.0
  %1400 = vmatpush2.msra.mxu0 0.0
  %1401 = vmatprep.subr.mxu0 0.0
  %1402 = vmatpush2.msra.mxu0 0.0
  %1403 = vmatprep.subr.mxu0 0.0
  %1404 = vmatpush2.msra.mxu0 0.0
  %1405 = vmatprep.subr.mxu0 0.0
  %1406 = vmatpush2.msra.mxu0 0.0
  %1407 = vmatprep.subr.mxu0 0.0
  %1408 = vmatpush2.msra.mxu0 0.0
  %1409 = vmatprep.subr.mxu0 0.0
  %1410 = vmatpush2.msra.mxu0 0.0
  %1411 = vmatprep.mubr.f32.mxu0 0.0
  %1412 = vmatmul.mubr.f32.gmra.mxu0 %v1342
  %v1413 = vpop.f32.mrf.mxu0
  %v1414 = vadd.f32 %v1340, %v1413
  %v1415 = vpop.f32.mrf.mxu0
  %1416 = vmatprep.mubr.f32.mxu0 0.0
  %1417 = vmatmul.mubr.f32.gmra.mxu0 %v1345
  %v1418 = vpop.f32.mrf.mxu0
  %v1419 = vadd.f32 %v1340, %v1418
  %v1420 = vpop.f32.mrf.mxu0
  %1421 = vdwg.mxu0
  %v1422 = vlaneseq
  %v1423 = vshrl.u32 %v1422, 7
  %v1424 = vsub.s32 0, %v1423
  %v1425 = vrot.slane %v1336, %v1424
  %1426 = vmatprep.subr.mxu0 0.0
  %1427 = vmatpush1.msra.mxu0 0.0
  %1428 = vmatprep.subr.mxu0 0.0
  %1429 = vmatpush1.msra.mxu0 0.0
  %1430 = vmatprep.subr.mxu0 0.0
  %1431 = vmatpush1.msra.mxu0 0.0
  %1432 = vmatprep.subr.mxu0 0.0
  %1433 = vmatpush1.msra.mxu0 0.0
  %1434 = vmatprep.subr.mxu0 0.0
  %1435 = vmatpush1.msra.mxu0 0.0
  %1436 = vmatprep.subr.mxu0 0.0
  %1437 = vmatpush1.msra.mxu0 0.0
  %1438 = vmatprep.subr.mxu0 0.0
  %1439 = vmatpush1.msra.mxu0 0.0
  %1440 = vmatprep.subr.mxu0 0.0
  %1441 = vmatpush1.msra.mxu0 0.0
  %1442 = vmatprep.subr.mxu0 0.0
  %1443 = vmatpush1.msra.mxu0 0.0
  %1444 = vmatprep.subr.mxu0 0.0
  %1445 = vmatpush1.msra.mxu0 0.0
  %1446 = vmatprep.subr.mxu0 0.0
  %1447 = vmatpush1.msra.mxu0 0.0
  %1448 = vmatprep.subr.mxu0 0.0
  %1449 = vmatpush1.msra.mxu0 0.0
  %1450 = vmatprep.subr.mxu0 0.0
  %1451 = vmatpush1.msra.mxu0 %v1334
  %1452 = vmatprep.subr.mxu0 0.0
  %1453 = vmatpush1.msra.mxu0 %v1333
  %1454 = vmatprep.subr.mxu0 0.0
  %1455 = vmatpush1.msra.mxu0 %v1332
  %1456 = vmatprep.subr.mxu0 0.0
  %1457 = vmatpush1.msra.mxu0 %v1331
  %1458 = vmatprep.subr.mxu0 0.0
  %1459 = vmatpush2.msra.mxu0 0.0
  %1460 = vmatprep.subr.mxu0 0.0
  %1461 = vmatpush2.msra.mxu0 0.0
  %1462 = vmatprep.subr.mxu0 0.0
  %1463 = vmatpush2.msra.mxu0 0.0
  %1464 = vmatprep.subr.mxu0 0.0
  %1465 = vmatpush2.msra.mxu0 0.0
  %1466 = vmatprep.subr.mxu0 0.0
  %1467 = vmatpush2.msra.mxu0 0.0
  %1468 = vmatprep.subr.mxu0 0.0
  %1469 = vmatpush2.msra.mxu0 0.0
  %1470 = vmatprep.subr.mxu0 0.0
  %1471 = vmatpush2.msra.mxu0 0.0
  %1472 = vmatprep.subr.mxu0 0.0
  %1473 = vmatpush2.msra.mxu0 0.0
  %1474 = vmatprep.subr.mxu0 0.0
  %1475 = vmatpush2.msra.mxu0 0.0
  %1476 = vmatprep.subr.mxu0 0.0
  %1477 = vmatpush2.msra.mxu0 0.0
  %1478 = vmatprep.subr.mxu0 0.0
  %1479 = vmatpush2.msra.mxu0 0.0
  %1480 = vmatprep.subr.mxu0 0.0
  %1481 = vmatpush2.msra.mxu0 0.0
  %1482 = vmatprep.subr.mxu0 0.0
  %1483 = vmatpush2.msra.mxu0 0.0
  %1484 = vmatprep.subr.mxu0 0.0
  %1485 = vmatpush2.msra.mxu0 0.0
  %1486 = vmatprep.subr.mxu0 0.0
  %1487 = vmatpush2.msra.mxu0 0.0
  %1488 = vmatprep.subr.mxu0 0.0
  %1489 = vmatpush2.msra.mxu0 0.0
  %1490 = vmatprep.mubr.f32.mxu0 0.0
  %1491 = vmatmul.mubr.f32.gmra.mxu0 %v397
  %v1492 = vpop.f32.mrf.mxu0
  %v1493 = vadd.f32 0.0, %v1492
  %v1494 = vpop.f32.mrf.mxu0
  %1495 = vdwg.mxu0
  %v1496 = vadd.f32 %v1414, %v1493
  %v1497 = vxor.u32 %v1496, 2147483648
  %v1498 = vmul.f32 %v1497, 1.442695
  %v1499 = vpow.pop %v1498
  %v1500 = vadd.f32 %v1499, 1.0
  %v1501 = vrcp.pop %v1500
  %v1502 = vmul.f32 1.0, %v1501
  %1504 = vrot.lane.b32.xlu0 %v1425, 64
  %v1505 = vpop.permute.xlu0 %1504
  %v1507 = vadd.f32 %v1493, %v1505
  %1509 = vrot.lane.b32.xlu0 %v1507, 64
  %v1510 = vpop.permute.xlu0 %1509
  %v1512 = vmul.f32 %v1502, %v1510
  %1514 = vrot.lane.b32.xlu0 %v1512, 64
  %v1515 = vpop.permute.xlu0 %1514
  %v1517 = vadd.f32 %v1414, %v1515
  %v1518 = vtanh.pop %v1517
  %v1519 = vsub.f32 1.0, %v1502
  %1521 = vrot.lane.b32.xlu0 %v1518, 96
  %v1522 = vpop.permute.xlu0 %1521
  %v1524 = vmul.f32 %v1519, %v1522
  %v1525 = vmul.f32 %v1502, 0.0
  %v1526 = vadd.f32 %v1524, %v1525
  %1528 = vrot.lane.b32.xlu0 %v1526, 96
  %v1529 = vpop.permute.xlu0 %1528
  %v1531 = vmul.f32 %v295, %v1529
  %v1532 = vadd.f32 %v1531, %v506
  %v1534 = vsel %vm140, %v1532, 0
  %1536 = vmatprep.subr.mxu0 0.0
  %1537 = vmatpush1.msra.mxu0 0.0
  %1538 = vmatprep.subr.mxu0 0.0
  %1539 = vmatpush1.msra.mxu0 0.0
  %1540 = vmatprep.subr.mxu0 0.0
  %1541 = vmatpush1.msra.mxu0 0.0
  %1542 = vmatprep.subr.mxu0 0.0
  %1543 = vmatpush1.msra.mxu0 0.0
  %1544 = vmatprep.subr.mxu0 0.0
  %1545 = vmatpush1.msra.mxu0 0.0
  %1546 = vmatprep.subr.mxu0 0.0
  %1547 = vmatpush1.msra.mxu0 0.0
  %1548 = vmatprep.subr.mxu0 0.0
  %1549 = vmatpush1.msra.mxu0 0.0
  %1550 = vmatprep.subr.mxu0 0.0
  %1551 = vmatpush1.msra.mxu0 0.0
  %1552 = vmatprep.subr.mxu0 0.0
  %1553 = vmatpush1.msra.mxu0 0.0
  %1554 = vmatprep.subr.mxu0 0.0
  %1555 = vmatpush1.msra.mxu0 0.0
  %1556 = vmatprep.subr.mxu0 0.0
  %1557 = vmatpush1.msra.mxu0 0.0
  %1558 = vmatprep.subr.mxu0 0.0
  %1559 = vmatpush1.msra.mxu0 0.0
  %1560 = vmatprep.subr.mxu0 0.0
  %1561 = vmatpush1.msra.mxu0 %v1334
  %1562 = vmatprep.subr.mxu0 0.0
  %1563 = vmatpush1.msra.mxu0 %v1333
  %1564 = vmatprep.subr.mxu0 0.0
  %1565 = vmatpush1.msra.mxu0 %v1332
  %1566 = vmatprep.subr.mxu0 0.0
  %1567 = vmatpush1.msra.mxu0 %v1331
  %1568 = vmatprep.subr.mxu0 0.0
  %1569 = vmatpush2.msra.mxu0 0.0
  %1570 = vmatprep.subr.mxu0 0.0
  %1571 = vmatpush2.msra.mxu0 0.0
  %1572 = vmatprep.subr.mxu0 0.0
  %1573 = vmatpush2.msra.mxu0 0.0
  %1574 = vmatprep.subr.mxu0 0.0
  %1575 = vmatpush2.msra.mxu0 0.0
  %1576 = vmatprep.subr.mxu0 0.0
  %1577 = vmatpush2.msra.mxu0 0.0
  %1578 = vmatprep.subr.mxu0 0.0
  %1579 = vmatpush2.msra.mxu0 0.0
  %1580 = vmatprep.subr.mxu0 0.0
  %1581 = vmatpush2.msra.mxu0 0.0
  %1582 = vmatprep.subr.mxu0 0.0
  %1583 = vmatpush2.msra.mxu0 0.0
  %1584 = vmatprep.subr.mxu0 0.0
  %1585 = vmatpush2.msra.mxu0 0.0
  %1586 = vmatprep.subr.mxu0 0.0
  %1587 = vmatpush2.msra.mxu0 0.0
  %1588 = vmatprep.subr.mxu0 0.0
  %1589 = vmatpush2.msra.mxu0 0.0
  %1590 = vmatprep.subr.mxu0 0.0
  %1591 = vmatpush2.msra.mxu0 0.0
  %1592 = vmatprep.subr.mxu0 0.0
  %1593 = vmatpush2.msra.mxu0 0.0
  %1594 = vmatprep.subr.mxu0 0.0
  %1595 = vmatpush2.msra.mxu0 0.0
  %1596 = vmatprep.subr.mxu0 0.0
  %1597 = vmatpush2.msra.mxu0 0.0
  %1598 = vmatprep.subr.mxu0 0.0
  %1599 = vmatpush2.msra.mxu0 0.0
  %1600 = vmatprep.mubr.f32.mxu0 0.0
  %1601 = vmatmul.mubr.f32.gmra.mxu0 %v1534
  %v1602 = vpop.f32.mrf.mxu0
  %v1603 = vadd.f32 0.0, %v1602
  %v1604 = vpop.f32.mrf.mxu0
  %1605 = vdwg.mxu0
  %v1607 = vrot.slane %v1603, 6
  %v1609 = vadd.f32 %v1414, %v1607
  %v1610 = vxor.u32 %v1609, 2147483648
  %v1611 = vmul.f32 %v1610, 1.442695
  %v1612 = vpow.pop %v1611
  %v1613 = vadd.f32 %v1612, 1.0
  %v1614 = vrcp.pop %v1613
  %v1615 = vmul.f32 1.0, %v1614
  %v1616 = vadd.f32 %v1603, %v1505
  %v1618 = vrot.slane %v1616, 6
  %1619 = vrot.lane.b32.xlu0 %v1618, 64
  %v1620 = vpop.permute.xlu0 %1619
  %v1622 = vmul.f32 %v1615, %v1620
  %1624 = vrot.lane.b32.xlu0 %v1622, 64
  %v1625 = vpop.permute.xlu0 %1624
  %v1627 = vadd.f32 %v1414, %v1625
  %v1628 = vtanh.pop %v1627
  %v1629 = vsub.f32 1.0, %v1615
  %1631 = vrot.lane.b32.xlu0 %v1628, 96
  %v1632 = vpop.permute.xlu0 %1631
  %v1634 = vmul.f32 %v1629, %v1632
  %v1635 = vrot.slane %v1532, 6
  %1636 = vrot.lane.b32.xlu0 %v1635, 32
  %v1637 = vpop.permute.xlu0 %1636
  %v1639 = vmul.f32 %v1615, %v1637
  %v1640 = vadd.f32 %v1634, %v1639
  %1642 = vrot.lane.b32.xlu0 %v1640, 96
  %v1643 = vpop.permute.xlu0 %1642
  %v1645 = vmul.f32 %v295, %v1643
  %v1647 = vmul.f32 %v505, %v1635
  %v1648 = vadd.f32 %v1645, %v1647
  %v1650 = vrot.slane %v1648, 2
  %v1651 = vsel %vm140, %v1650, 0
  %1653 = vmatprep.subr.mxu0 0.0
  %1654 = vmatpush1.msra.mxu0 0.0
  %1655 = vmatprep.subr.mxu0 0.0
  %1656 = vmatpush1.msra.mxu0 0.0
  %1657 = vmatprep.subr.mxu0 0.0
  %1658 = vmatpush1.msra.mxu0 0.0
  %1659 = vmatprep.subr.mxu0 0.0
  %1660 = vmatpush1.msra.mxu0 0.0
  %1661 = vmatprep.subr.mxu0 0.0
  %1662 = vmatpush1.msra.mxu0 0.0
  %1663 = vmatprep.subr.mxu0 0.0
  %1664 = vmatpush1.msra.mxu0 0.0
  %1665 = vmatprep.subr.mxu0 0.0
  %1666 = vmatpush1.msra.mxu0 0.0
  %1667 = vmatprep.subr.mxu0 0.0
  %1668 = vmatpush1.msra.mxu0 0.0
  %1669 = vmatprep.subr.mxu0 0.0
  %1670 = vmatpush1.msra.mxu0 0.0
  %1671 = vmatprep.subr.mxu0 0.0
  %1672 = vmatpush1.msra.mxu0 0.0
  %1673 = vmatprep.subr.mxu0 0.0
  %1674 = vmatpush1.msra.mxu0 0.0
  %1675 = vmatprep.subr.mxu0 0.0
  %1676 = vmatpush1.msra.mxu0 0.0
  %1677 = vmatprep.subr.mxu0 0.0
  %1678 = vmatpush1.msra.mxu0 %v1334
  %1679 = vmatprep.subr.mxu0 0.0
  %1680 = vmatpush1.msra.mxu0 %v1333
  %1681 = vmatprep.subr.mxu0 0.0
  %1682 = vmatpush1.msra.mxu0 %v1332
  %1683 = vmatprep.subr.mxu0 0.0
  %1684 = vmatpush1.msra.mxu0 %v1331
  %1685 = vmatprep.subr.mxu0 0.0
  %1686 = vmatpush2.msra.mxu0 0.0
  %1687 = vmatprep.subr.mxu0 0.0
  %1688 = vmatpush2.msra.mxu0 0.0
  %1689 = vmatprep.subr.mxu0 0.0
  %1690 = vmatpush2.msra.mxu0 0.0
  %1691 = vmatprep.subr.mxu0 0.0
  %1692 = vmatpush2.msra.mxu0 0.0
  %1693 = vmatprep.subr.mxu0 0.0
  %1694 = vmatpush2.msra.mxu0 0.0
  %1695 = vmatprep.subr.mxu0 0.0
  %1696 = vmatpush2.msra.mxu0 0.0
  %1697 = vmatprep.subr.mxu0 0.0
  %1698 = vmatpush2.msra.mxu0 0.0
  %1699 = vmatprep.subr.mxu0 0.0
  %1700 = vmatpush2.msra.mxu0 0.0
  %1701 = vmatprep.subr.mxu0 0.0
  %1702 = vmatpush2.msra.mxu0 0.0
  %1703 = vmatprep.subr.mxu0 0.0
  %1704 = vmatpush2.msra.mxu0 0.0
  %1705 = vmatprep.subr.mxu0 0.0
  %1706 = vmatpush2.msra.mxu0 0.0
  %1707 = vmatprep.subr.mxu0 0.0
  %1708 = vmatpush2.msra.mxu0 0.0
  %1709 = vmatprep.subr.mxu0 0.0
  %1710 = vmatpush2.msra.mxu0 0.0
  %1711 = vmatprep.subr.mxu0 0.0
  %1712 = vmatpush2.msra.mxu0 0.0
  %1713 = vmatprep.subr.mxu0 0.0
  %1714 = vmatpush2.msra.mxu0 0.0
  %1715 = vmatprep.subr.mxu0 0.0
  %1716 = vmatpush2.msra.mxu0 0.0
  %1717 = vmatprep.mubr.f32.mxu0 0.0
  %1718 = vmatmul.mubr.f32.gmra.mxu0 %v1651
  %v1719 = vpop.f32.mrf.mxu0
  %v1720 = vadd.f32 0.0, %v1719
  %v1721 = vpop.f32.mrf.mxu0
  %1722 = vdwg.mxu0
  %v1724 = vrot.slane %v1720, 4
  %v1726 = vadd.f32 %v1414, %v1724
  %v1727 = vxor.u32 %v1726, 2147483648
  %v1728 = vmul.f32 %v1727, 1.442695
  %v1729 = vpow.pop %v1728
  %v1730 = vadd.f32 %v1729, 1.0
  %v1731 = vrcp.pop %v1730
  %v1732 = vmul.f32 1.0, %v1731
  %v1733 = vadd.f32 %v1720, %v1505
  %v1735 = vrot.slane %v1733, 4
  %1736 = vrot.lane.b32.xlu0 %v1735, 64
  %v1737 = vpop.permute.xlu0 %1736
  %v1739 = vmul.f32 %v1732, %v1737
  %1741 = vrot.lane.b32.xlu0 %v1739, 64
  %v1742 = vpop.permute.xlu0 %1741
  %v1744 = vadd.f32 %v1414, %v1742
  %v1745 = vtanh.pop %v1744
  %v1746 = vsub.f32 1.0, %v1732
  %1748 = vrot.lane.b32.xlu0 %v1745, 96
  %v1749 = vpop.permute.xlu0 %1748
  %v1751 = vmul.f32 %v1746, %v1749
  %v1752 = vrot.slane %v1648, 6
  %1753 = vrot.lane.b32.xlu0 %v1752, 32
  %v1754 = vpop.permute.xlu0 %1753
  %v1756 = vmul.f32 %v1732, %v1754
  %v1757 = vadd.f32 %v1751, %v1756
  %1759 = vrot.lane.b32.xlu0 %v1757, 96
  %v1760 = vpop.permute.xlu0 %1759
  %v1762 = vmul.f32 %v295, %v1760
  %v1764 = vmul.f32 %v505, %v1752
  %v1765 = vadd.f32 %v1762, %v1764
  %v1767 = vrot.slane %v1765, 4
  %v1768 = vsel %vm140, %v1767, 0
  %1770 = vmatprep.subr.mxu0 0.0
  %1771 = vmatpush1.msra.mxu0 0.0
  %1772 = vmatprep.subr.mxu0 0.0
  %1773 = vmatpush1.msra.mxu0 0.0
  %1774 = vmatprep.subr.mxu0 0.0
  %1775 = vmatpush1.msra.mxu0 0.0
  %1776 = vmatprep.subr.mxu0 0.0
  %1777 = vmatpush1.msra.mxu0 0.0
  %1778 = vmatprep.subr.mxu0 0.0
  %1779 = vmatpush1.msra.mxu0 0.0
  %1780 = vmatprep.subr.mxu0 0.0
  %1781 = vmatpush1.msra.mxu0 0.0
  %1782 = vmatprep.subr.mxu0 0.0
  %1783 = vmatpush1.msra.mxu0 0.0
  %1784 = vmatprep.subr.mxu0 0.0
  %1785 = vmatpush1.msra.mxu0 0.0
  %1786 = vmatprep.subr.mxu0 0.0
  %1787 = vmatpush1.msra.mxu0 0.0
  %1788 = vmatprep.subr.mxu0 0.0
  %1789 = vmatpush1.msra.mxu0 0.0
  %1790 = vmatprep.subr.mxu0 0.0
  %1791 = vmatpush1.msra.mxu0 0.0
  %1792 = vmatprep.subr.mxu0 0.0
  %1793 = vmatpush1.msra.mxu0 0.0
  %1794 = vmatprep.subr.mxu0 0.0
  %1795 = vmatpush1.msra.mxu0 %v1334
  %1796 = vmatprep.subr.mxu0 0.0
  %1797 = vmatpush1.msra.mxu0 %v1333
  %1798 = vmatprep.subr.mxu0 0.0
  %1799 = vmatpush1.msra.mxu0 %v1332
  %1800 = vmatprep.subr.mxu0 0.0
  %1801 = vmatpush1.msra.mxu0 %v1331
  %1802 = vmatprep.subr.mxu0 0.0
  %1803 = vmatpush2.msra.mxu0 0.0
  %1804 = vmatprep.subr.mxu0 0.0
  %1805 = vmatpush2.msra.mxu0 0.0
  %1806 = vmatprep.subr.mxu0 0.0
  %1807 = vmatpush2.msra.mxu0 0.0
  %1808 = vmatprep.subr.mxu0 0.0
  %1809 = vmatpush2.msra.mxu0 0.0
  %1810 = vmatprep.subr.mxu0 0.0
  %1811 = vmatpush2.msra.mxu0 0.0
  %1812 = vmatprep.subr.mxu0 0.0
  %1813 = vmatpush2.msra.mxu0 0.0
  %1814 = vmatprep.subr.mxu0 0.0
  %1815 = vmatpush2.msra.mxu0 0.0
  %1816 = vmatprep.subr.mxu0 0.0
  %1817 = vmatpush2.msra.mxu0 0.0
  %1818 = vmatprep.subr.mxu0 0.0
  %1819 = vmatpush2.msra.mxu0 0.0
  %1820 = vmatprep.subr.mxu0 0.0
  %1821 = vmatpush2.msra.mxu0 0.0
  %1822 = vmatprep.subr.mxu0 0.0
  %1823 = vmatpush2.msra.mxu0 0.0
  %1824 = vmatprep.subr.mxu0 0.0
  %1825 = vmatpush2.msra.mxu0 0.0
  %1826 = vmatprep.subr.mxu0 0.0
  %1827 = vmatpush2.msra.mxu0 0.0
  %1828 = vmatprep.subr.mxu0 0.0
  %1829 = vmatpush2.msra.mxu0 0.0
  %1830 = vmatprep.subr.mxu0 0.0
  %1831 = vmatpush2.msra.mxu0 0.0
  %1832 = vmatprep.subr.mxu0 0.0
  %1833 = vmatpush2.msra.mxu0 0.0
  %1834 = vmatprep.mubr.f32.mxu0 0.0
  %1835 = vmatmul.mubr.f32.gmra.mxu0 %v1768
  %v1836 = vpop.f32.mrf.mxu0
  %v1837 = vadd.f32 0.0, %v1836
  %v1838 = vpop.f32.mrf.mxu0
  %1839 = vdwg.mxu0
  %v1841 = vrot.slane %v1837, 2
  %v1843 = vadd.f32 %v1414, %v1841
  %v1844 = vxor.u32 %v1843, 2147483648
  %v1845 = vmul.f32 %v1844, 1.442695
  %v1846 = vpow.pop %v1845
  %v1847 = vadd.f32 %v1846, 1.0
  %v1848 = vrcp.pop %v1847
  %v1849 = vmul.f32 1.0, %v1848
  %v1850 = vadd.f32 %v1837, %v1505
  %v1852 = vrot.slane %v1850, 2
  %1853 = vrot.lane.b32.xlu0 %v1852, 64
  %v1854 = vpop.permute.xlu0 %1853
  %v1856 = vmul.f32 %v1849, %v1854
  %1858 = vrot.lane.b32.xlu0 %v1856, 64
  %v1859 = vpop.permute.xlu0 %1858
  %v1861 = vadd.f32 %v1414, %v1859
  %v1862 = vtanh.pop %v1861
  %v1863 = vsub.f32 1.0, %v1849
  %1865 = vrot.lane.b32.xlu0 %v1862, 96
  %v1866 = vpop.permute.xlu0 %1865
  %v1868 = vmul.f32 %v1863, %v1866
  %v1869 = vrot.slane %v1765, 6
  %1870 = vrot.lane.b32.xlu0 %v1869, 32
  %v1871 = vpop.permute.xlu0 %1870
  %v1873 = vmul.f32 %v1849, %v1871
  %v1874 = vadd.f32 %v1868, %v1873
  %1876 = vrot.lane.b32.xlu0 %v1874, 96
  %v1877 = vpop.permute.xlu0 %1876
  %v1879 = vmul.f32 %v295, %v1877
  %v1881 = vmul.f32 %v505, %v1869
  %v1882 = vadd.f32 %v1879, %v1881
  %v1884 = vrot.slane %v1882, 6
  %v1885 = vsel %vm140, %v1884, 0
  %1887 = vmatprep.subr.mxu0 0.0
  %1888 = vmatpush1.msra.mxu0 0.0
  %1889 = vmatprep.subr.mxu0 0.0
  %1890 = vmatpush1.msra.mxu0 0.0
  %1891 = vmatprep.subr.mxu0 0.0
  %1892 = vmatpush1.msra.mxu0 0.0
  %1893 = vmatprep.subr.mxu0 0.0
  %1894 = vmatpush1.msra.mxu0 0.0
  %1895 = vmatprep.subr.mxu0 0.0
  %1896 = vmatpush1.msra.mxu0 0.0
  %1897 = vmatprep.subr.mxu0 0.0
  %1898 = vmatpush1.msra.mxu0 0.0
  %1899 = vmatprep.subr.mxu0 0.0
  %1900 = vmatpush1.msra.mxu0 0.0
  %1901 = vmatprep.subr.mxu0 0.0
  %1902 = vmatpush1.msra.mxu0 0.0
  %1903 = vmatprep.subr.mxu0 0.0
  %1904 = vmatpush1.msra.mxu0 0.0
  %1905 = vmatprep.subr.mxu0 0.0
  %1906 = vmatpush1.msra.mxu0 0.0
  %1907 = vmatprep.subr.mxu0 0.0
  %1908 = vmatpush1.msra.mxu0 0.0
  %1909 = vmatprep.subr.mxu0 0.0
  %1910 = vmatpush1.msra.mxu0 0.0
  %1911 = vmatprep.subr.mxu0 0.0
  %1912 = vmatpush1.msra.mxu0 %v1334
  %1913 = vmatprep.subr.mxu0 0.0
  %1914 = vmatpush1.msra.mxu0 %v1333
  %1915 = vmatprep.subr.mxu0 0.0
  %1916 = vmatpush1.msra.mxu0 %v1332
  %1917 = vmatprep.subr.mxu0 0.0
  %1918 = vmatpush1.msra.mxu0 %v1331
  %1919 = vmatprep.subr.mxu0 0.0
  %1920 = vmatpush2.msra.mxu0 0.0
  %1921 = vmatprep.subr.mxu0 0.0
  %1922 = vmatpush2.msra.mxu0 0.0
  %1923 = vmatprep.subr.mxu0 0.0
  %1924 = vmatpush2.msra.mxu0 0.0
  %1925 = vmatprep.subr.mxu0 0.0
  %1926 = vmatpush2.msra.mxu0 0.0
  %1927 = vmatprep.subr.mxu0 0.0
  %1928 = vmatpush2.msra.mxu0 0.0
  %1929 = vmatprep.subr.mxu0 0.0
  %1930 = vmatpush2.msra.mxu0 0.0
  %1931 = vmatprep.subr.mxu0 0.0
  %1932 = vmatpush2.msra.mxu0 0.0
  %1933 = vmatprep.subr.mxu0 0.0
  %1934 = vmatpush2.msra.mxu0 0.0
  %1935 = vmatprep.subr.mxu0 0.0
  %1936 = vmatpush2.msra.mxu0 0.0
  %1937 = vmatprep.subr.mxu0 0.0
  %1938 = vmatpush2.msra.mxu0 0.0
  %1939 = vmatprep.subr.mxu0 0.0
  %1940 = vmatpush2.msra.mxu0 0.0
  %1941 = vmatprep.subr.mxu0 0.0
  %1942 = vmatpush2.msra.mxu0 0.0
  %1943 = vmatprep.subr.mxu0 0.0
  %1944 = vmatpush2.msra.mxu0 0.0
  %1945 = vmatprep.subr.mxu0 0.0
  %1946 = vmatpush2.msra.mxu0 0.0
  %1947 = vmatprep.subr.mxu0 0.0
  %1948 = vmatpush2.msra.mxu0 0.0
  %1949 = vmatprep.subr.mxu0 0.0
  %1950 = vmatpush2.msra.mxu0 0.0
  %1951 = vmatprep.mubr.f32.mxu0 0.0
  %1952 = vmatmul.mubr.f32.gmra.mxu0 %v1885
  %v1953 = vpop.f32.mrf.mxu0
  %v1954 = vadd.f32 0.0, %v1953
  %v1955 = vpop.f32.mrf.mxu0
  %1956 = vdwg.mxu0
  %v1957 = vadd.f32 %v1419, %v1954
  %v1958 = vxor.u32 %v1957, 2147483648
  %v1959 = vmul.f32 %v1958, 1.442695
  %v1960 = vpow.pop %v1959
  %v1961 = vadd.f32 %v1960, 1.0
  %v1962 = vrcp.pop %v1961
  %v1963 = vmul.f32 1.0, %v1962
  %v1964 = vadd.f32 %v1954, %v1505
  %1966 = vrot.lane.b32.xlu0 %v1964, 64
  %v1967 = vpop.permute.xlu0 %1966
  %v1969 = vmul.f32 %v1963, %v1967
  %1971 = vrot.lane.b32.xlu0 %v1969, 64
  %v1972 = vpop.permute.xlu0 %1971
  %v1974 = vadd.f32 %v1419, %v1972
  %v1975 = vtanh.pop %v1974
  %v1976 = vsub.f32 1.0, %v1963
  %1978 = vrot.lane.b32.xlu0 %v1975, 96
  %v1979 = vpop.permute.xlu0 %1978
  %v1981 = vmul.f32 %v1976, %v1979
  %1982 = vrot.lane.b32.xlu0 %v1884, 32
  %v1983 = vpop.permute.xlu0 %1982
  %v1985 = vmul.f32 %v1963, %v1983
  %v1986 = vadd.f32 %v1981, %v1985
  %1988 = vrot.lane.b32.xlu0 %v1986, 96
  %v1989 = vpop.permute.xlu0 %1988
  %v1991 = vmul.f32 %v296, %v1989
  %v1993 = vmul.f32 %v967, %v1884
  %v1994 = vadd.f32 %v1991, %v1993
  %v1996 = vsel %vm140, %v1994, 0
  %1998 = vmatprep.subr.mxu0 0.0
  %1999 = vmatpush1.msra.mxu0 0.0
  %2000 = vmatprep.subr.mxu0 0.0
  %2001 = vmatpush1.msra.mxu0 0.0
  %2002 = vmatprep.subr.mxu0 0.0
  %2003 = vmatpush1.msra.mxu0 0.0
  %2004 = vmatprep.subr.mxu0 0.0
  %2005 = vmatpush1.msra.mxu0 0.0
  %2006 = vmatprep.subr.mxu0 0.0
  %2007 = vmatpush1.msra.mxu0 0.0
  %2008 = vmatprep.subr.mxu0 0.0
  %2009 = vmatpush1.msra.mxu0 0.0
  %2010 = vmatprep.subr.mxu0 0.0
  %2011 = vmatpush1.msra.mxu0 0.0
  %2012 = vmatprep.subr.mxu0 0.0
  %2013 = vmatpush1.msra.mxu0 0.0
  %2014 = vmatprep.subr.mxu0 0.0
  %2015 = vmatpush1.msra.mxu0 0.0
  %2016 = vmatprep.subr.mxu0 0.0
  %2017 = vmatpush1.msra.mxu0 0.0
  %2018 = vmatprep.subr.mxu0 0.0
  %2019 = vmatpush1.msra.mxu0 0.0
  %2020 = vmatprep.subr.mxu0 0.0
  %2021 = vmatpush1.msra.mxu0 0.0
  %2022 = vmatprep.subr.mxu0 0.0
  %2023 = vmatpush1.msra.mxu0 %v1334
  %2024 = vmatprep.subr.mxu0 0.0
  %2025 = vmatpush1.msra.mxu0 %v1333
  %2026 = vmatprep.subr.mxu0 0.0
  %2027 = vmatpush1.msra.mxu0 %v1332
  %2028 = vmatprep.subr.mxu0 0.0
  %2029 = vmatpush1.msra.mxu0 %v1331
  %2030 = vmatprep.subr.mxu0 0.0
  %2031 = vmatpush2.msra.mxu0 0.0
  %2032 = vmatprep.subr.mxu0 0.0
  %2033 = vmatpush2.msra.mxu0 0.0
  %2034 = vmatprep.subr.mxu0 0.0
  %2035 = vmatpush2.msra.mxu0 0.0
  %2036 = vmatprep.subr.mxu0 0.0
  %2037 = vmatpush2.msra.mxu0 0.0
  %2038 = vmatprep.subr.mxu0 0.0
  %2039 = vmatpush2.msra.mxu0 0.0
  %2040 = vmatprep.subr.mxu0 0.0
  %2041 = vmatpush2.msra.mxu0 0.0
  %2042 = vmatprep.subr.mxu0 0.0
  %2043 = vmatpush2.msra.mxu0 0.0
  %2044 = vmatprep.subr.mxu0 0.0
  %2045 = vmatpush2.msra.mxu0 0.0
  %2046 = vmatprep.subr.mxu0 0.0
  %2047 = vmatpush2.msra.mxu0 0.0
  %2048 = vmatprep.subr.mxu0 0.0
  %2049 = vmatpush2.msra.mxu0 0.0
  %2050 = vmatprep.subr.mxu0 0.0
  %2051 = vmatpush2.msra.mxu0 0.0
  %2052 = vmatprep.subr.mxu0 0.0
  %2053 = vmatpush2.msra.mxu0 0.0
  %2054 = vmatprep.subr.mxu0 0.0
  %2055 = vmatpush2.msra.mxu0 0.0
  %2056 = vmatprep.subr.mxu0 0.0
  %2057 = vmatpush2.msra.mxu0 0.0
  %2058 = vmatprep.subr.mxu0 0.0
  %2059 = vmatpush2.msra.mxu0 0.0
  %2060 = vmatprep.subr.mxu0 0.0
  %2061 = vmatpush2.msra.mxu0 0.0
  %2062 = vmatprep.mubr.f32.mxu0 0.0
  %2063 = vmatmul.mubr.f32.gmra.mxu0 %v1996
  %v2064 = vpop.f32.mrf.mxu0
  %v2065 = vadd.f32 0.0, %v2064
  %v2066 = vpop.f32.mrf.mxu0
  %2067 = vdwg.mxu0
  %v2069 = vrot.slane %v2065, 6
  %v2071 = vadd.f32 %v1419, %v2069
  %v2072 = vxor.u32 %v2071, 2147483648
  %v2073 = vmul.f32 %v2072, 1.442695
  %v2074 = vpow.pop %v2073
  %v2075 = vadd.f32 %v2074, 1.0
  %v2076 = vrcp.pop %v2075
  %v2077 = vmul.f32 1.0, %v2076
  %v2078 = vadd.f32 %v2065, %v1505
  %v2080 = vrot.slane %v2078, 6
  %2081 = vrot.lane.b32.xlu0 %v2080, 64
  %v2082 = vpop.permute.xlu0 %2081
  %v2084 = vmul.f32 %v2077, %v2082
  %2086 = vrot.lane.b32.xlu0 %v2084, 64
  %v2087 = vpop.permute.xlu0 %2086
  %v2089 = vadd.f32 %v1419, %v2087
  %v2090 = vtanh.pop %v2089
  %v2091 = vsub.f32 1.0, %v2077
  %2093 = vrot.lane.b32.xlu0 %v2090, 96
  %v2094 = vpop.permute.xlu0 %2093
  %v2096 = vmul.f32 %v2091, %v2094
  %v2097 = vrot.slane %v1994, 6
  %2098 = vrot.lane.b32.xlu0 %v2097, 32
  %v2099 = vpop.permute.xlu0 %2098
  %v2101 = vmul.f32 %v2077, %v2099
  %v2102 = vadd.f32 %v2096, %v2101
  %2104 = vrot.lane.b32.xlu0 %v2102, 96
  %v2105 = vpop.permute.xlu0 %2104
  %v2107 = vmul.f32 %v296, %v2105
  %v2109 = vmul.f32 %v967, %v2097
  %v2110 = vadd.f32 %v2107, %v2109
  %v2112 = vrot.slane %v2110, 2
  %v2113 = vsel %vm140, %v2112, 0
  %2115 = vmatprep.subr.mxu0 0.0
  %2116 = vmatpush1.msra.mxu0 0.0
  %2117 = vmatprep.subr.mxu0 0.0
  %2118 = vmatpush1.msra.mxu0 0.0
  %2119 = vmatprep.subr.mxu0 0.0
  %2120 = vmatpush1.msra.mxu0 0.0
  %2121 = vmatprep.subr.mxu0 0.0
  %2122 = vmatpush1.msra.mxu0 0.0
  %2123 = vmatprep.subr.mxu0 0.0
  %2124 = vmatpush1.msra.mxu0 0.0
  %2125 = vmatprep.subr.mxu0 0.0
  %2126 = vmatpush1.msra.mxu0 0.0
  %2127 = vmatprep.subr.mxu0 0.0
  %2128 = vmatpush1.msra.mxu0 0.0
  %2129 = vmatprep.subr.mxu0 0.0
  %2130 = vmatpush1.msra.mxu0 0.0
  %2131 = vmatprep.subr.mxu0 0.0
  %2132 = vmatpush1.msra.mxu0 0.0
  %2133 = vmatprep.subr.mxu0 0.0
  %2134 = vmatpush1.msra.mxu0 0.0
  %2135 = vmatprep.subr.mxu0 0.0
  %2136 = vmatpush1.msra.mxu0 0.0
  %2137 = vmatprep.subr.mxu0 0.0
  %2138 = vmatpush1.msra.mxu0 0.0
  %2139 = vmatprep.subr.mxu0 0.0
  %2140 = vmatpush1.msra.mxu0 %v1334
  %2141 = vmatprep.subr.mxu0 0.0
  %2142 = vmatpush1.msra.mxu0 %v1333
  %2143 = vmatprep.subr.mxu0 0.0
  %2144 = vmatpush1.msra.mxu0 %v1332
  %2145 = vmatprep.subr.mxu0 0.0
  %2146 = vmatpush1.msra.mxu0 %v1331
  %2147 = vmatprep.subr.mxu0 0.0
  %2148 = vmatpush2.msra.mxu0 0.0
  %2149 = vmatprep.subr.mxu0 0.0
  %2150 = vmatpush2.msra.mxu0 0.0
  %2151 = vmatprep.subr.mxu0 0.0
  %2152 = vmatpush2.msra.mxu0 0.0
  %2153 = vmatprep.subr.mxu0 0.0
  %2154 = vmatpush2.msra.mxu0 0.0
  %2155 = vmatprep.subr.mxu0 0.0
  %2156 = vmatpush2.msra.mxu0 0.0
  %2157 = vmatprep.subr.mxu0 0.0
  %2158 = vmatpush2.msra.mxu0 0.0
  %2159 = vmatprep.subr.mxu0 0.0
  %2160 = vmatpush2.msra.mxu0 0.0
  %2161 = vmatprep.subr.mxu0 0.0
  %2162 = vmatpush2.msra.mxu0 0.0
  %2163 = vmatprep.subr.mxu0 0.0
  %2164 = vmatpush2.msra.mxu0 0.0
  %2165 = vmatprep.subr.mxu0 0.0
  %2166 = vmatpush2.msra.mxu0 0.0
  %2167 = vmatprep.subr.mxu0 0.0
  %2168 = vmatpush2.msra.mxu0 0.0
  %2169 = vmatprep.subr.mxu0 0.0
  %2170 = vmatpush2.msra.mxu0 0.0
  %2171 = vmatprep.subr.mxu0 0.0
  %2172 = vmatpush2.msra.mxu0 0.0
  %2173 = vmatprep.subr.mxu0 0.0
  %2174 = vmatpush2.msra.mxu0 0.0
  %2175 = vmatprep.subr.mxu0 0.0
  %2176 = vmatpush2.msra.mxu0 0.0
  %2177 = vmatprep.subr.mxu0 0.0
  %2178 = vmatpush2.msra.mxu0 0.0
  %2179 = vmatprep.mubr.f32.mxu0 0.0
  %2180 = vmatmul.mubr.f32.gmra.mxu0 %v2113
  %v2181 = vpop.f32.mrf.mxu0
  %v2182 = vadd.f32 0.0, %v2181
  %v2183 = vpop.f32.mrf.mxu0
  %2184 = vdwg.mxu0
  %v2186 = vrot.slane %v2182, 4
  %v2188 = vadd.f32 %v1419, %v2186
  %v2189 = vxor.u32 %v2188, 2147483648
  %v2190 = vmul.f32 %v2189, 1.442695
  %v2191 = vpow.pop %v2190
  %v2192 = vadd.f32 %v2191, 1.0
  %v2193 = vrcp.pop %v2192
  %v2194 = vmul.f32 1.0, %v2193
  %v2195 = vadd.f32 %v2182, %v1505
  %v2197 = vrot.slane %v2195, 4
  %2198 = vrot.lane.b32.xlu0 %v2197, 64
  %v2199 = vpop.permute.xlu0 %2198
  %v2201 = vmul.f32 %v2194, %v2199
  %2203 = vrot.lane.b32.xlu0 %v2201, 64
  %v2204 = vpop.permute.xlu0 %2203
  %v2206 = vadd.f32 %v1419, %v2204
  %v2207 = vtanh.pop %v2206
  %v2208 = vsub.f32 1.0, %v2194
  %2210 = vrot.lane.b32.xlu0 %v2207, 96
  %v2211 = vpop.permute.xlu0 %2210
  %v2213 = vmul.f32 %v2208, %v2211
  %v2214 = vrot.slane %v2110, 6
  %2215 = vrot.lane.b32.xlu0 %v2214, 32
  %v2216 = vpop.permute.xlu0 %2215
  %v2218 = vmul.f32 %v2194, %v2216
  %v2219 = vadd.f32 %v2213, %v2218
  %2221 = vrot.lane.b32.xlu0 %v2219, 96
  %v2222 = vpop.permute.xlu0 %2221
  %v2224 = vmul.f32 %v296, %v2222
  %v2226 = vmul.f32 %v967, %v2214
  %v2227 = vadd.f32 %v2224, %v2226
  %v2229 = vrot.slane %v2227, 4
  %v2230 = vsel %vm140, %v2229, 0
  %2232 = vmatprep.subr.mxu0 0.0
  %2233 = vmatpush1.msra.mxu0 0.0
  %2234 = vmatprep.subr.mxu0 0.0
  %2235 = vmatpush1.msra.mxu0 0.0
  %2236 = vmatprep.subr.mxu0 0.0
  %2237 = vmatpush1.msra.mxu0 0.0
  %2238 = vmatprep.subr.mxu0 0.0
  %2239 = vmatpush1.msra.mxu0 0.0
  %2240 = vmatprep.subr.mxu0 0.0
  %2241 = vmatpush1.msra.mxu0 0.0
  %2242 = vmatprep.subr.mxu0 0.0
  %2243 = vmatpush1.msra.mxu0 0.0
  %2244 = vmatprep.subr.mxu0 0.0
  %2245 = vmatpush1.msra.mxu0 0.0
  %2246 = vmatprep.subr.mxu0 0.0
  %2247 = vmatpush1.msra.mxu0 0.0
  %2248 = vmatprep.subr.mxu0 0.0
  %2249 = vmatpush1.msra.mxu0 0.0
  %2250 = vmatprep.subr.mxu0 0.0
  %2251 = vmatpush1.msra.mxu0 0.0
  %2252 = vmatprep.subr.mxu0 0.0
  %2253 = vmatpush1.msra.mxu0 0.0
  %2254 = vmatprep.subr.mxu0 0.0
  %2255 = vmatpush1.msra.mxu0 0.0
  %2256 = vmatprep.subr.mxu0 0.0
  %2257 = vmatpush1.msra.mxu0 %v1334
  %2258 = vmatprep.subr.mxu0 0.0
  %2259 = vmatpush1.msra.mxu0 %v1333
  %2260 = vmatprep.subr.mxu0 0.0
  %2261 = vmatpush1.msra.mxu0 %v1332
  %2262 = vmatprep.subr.mxu0 0.0
  %2263 = vmatpush1.msra.mxu0 %v1331
  %2264 = vmatprep.subr.mxu0 0.0
  %2265 = vmatpush2.msra.mxu0 0.0
  %2266 = vmatprep.subr.mxu0 0.0
  %2267 = vmatpush2.msra.mxu0 0.0
  %2268 = vmatprep.subr.mxu0 0.0
  %2269 = vmatpush2.msra.mxu0 0.0
  %2270 = vmatprep.subr.mxu0 0.0
  %2271 = vmatpush2.msra.mxu0 0.0
  %2272 = vmatprep.subr.mxu0 0.0
  %2273 = vmatpush2.msra.mxu0 0.0
  %2274 = vmatprep.subr.mxu0 0.0
  %2275 = vmatpush2.msra.mxu0 0.0
  %2276 = vmatprep.subr.mxu0 0.0
  %2277 = vmatpush2.msra.mxu0 0.0
  %2278 = vmatprep.subr.mxu0 0.0
  %2279 = vmatpush2.msra.mxu0 0.0
  %2280 = vmatprep.subr.mxu0 0.0
  %2281 = vmatpush2.msra.mxu0 0.0
  %2282 = vmatprep.subr.mxu0 0.0
  %2283 = vmatpush2.msra.mxu0 0.0
  %2284 = vmatprep.subr.mxu0 0.0
  %2285 = vmatpush2.msra.mxu0 0.0
  %2286 = vmatprep.subr.mxu0 0.0
  %2287 = vmatpush2.msra.mxu0 0.0
  %2288 = vmatprep.subr.mxu0 0.0
  %2289 = vmatpush2.msra.mxu0 0.0
  %2290 = vmatprep.subr.mxu0 0.0
  %2291 = vmatpush2.msra.mxu0 0.0
  %2292 = vmatprep.subr.mxu0 0.0
  %2293 = vmatpush2.msra.mxu0 0.0
  %2294 = vmatprep.subr.mxu0 0.0
  %2295 = vmatpush2.msra.mxu0 0.0
  %2296 = vmatprep.mubr.f32.mxu0 0.0
  %2297 = vmatmul.mubr.f32.gmra.mxu0 %v2230
  %v2298 = vpop.f32.mrf.mxu0
  %v2299 = vadd.f32 0.0, %v2298
  %v2300 = vpop.f32.mrf.mxu0
  %2301 = vdwg.mxu0
  %v2303 = vrot.slane %v2299, 2
  %v2305 = vadd.f32 %v1419, %v2303
  %v2306 = vxor.u32 %v2305, 2147483648
  %v2307 = vmul.f32 %v2306, 1.442695
  %v2308 = vpow.pop %v2307
  %v2309 = vadd.f32 %v2308, 1.0
  %v2310 = vrcp.pop %v2309
  %v2311 = vmul.f32 1.0, %v2310
  %v2312 = vadd.f32 %v2299, %v1505
  %v2314 = vrot.slane %v2312, 2
  %2315 = vrot.lane.b32.xlu0 %v2314, 64
  %v2316 = vpop.permute.xlu0 %2315
  %v2318 = vmul.f32 %v2311, %v2316
  %2320 = vrot.lane.b32.xlu0 %v2318, 64
  %v2321 = vpop.permute.xlu0 %2320
  %v2323 = vadd.f32 %v1419, %v2321
  %v2324 = vtanh.pop %v2323
  %v2325 = vsub.f32 1.0, %v2311
  %2327 = vrot.lane.b32.xlu0 %v2324, 96
  %v2328 = vpop.permute.xlu0 %2327
  %v2330 = vmul.f32 %v2325, %v2328
  %v2331 = vrot.slane %v2227, 6
  %2332 = vrot.lane.b32.xlu0 %v2331, 32
  %v2333 = vpop.permute.xlu0 %2332
  %v2335 = vmul.f32 %v2311, %v2333
  %v2336 = vadd.f32 %v2330, %v2335
  %2338 = vrot.lane.b32.xlu0 %v2336, 96
  %v2339 = vpop.permute.xlu0 %2338
  %v2341 = vmul.f32 %v296, %v2339
  %v2343 = vmul.f32 %v967, %v2331
  %v2344 = vadd.f32 %v2341, %v2343
  %v2345 = vld [vmem:[%s1 + $0x100] sm:$0x1]
  %v2346 = vtanh.pop %v1531
  %v2347 = vlaneseq
  %v2348 = vshrl.u32 %v2347, 7
  %v2349 = vsub.s32 0, %v2348
  %v2350 = vrot.slane %v2345, %v2349
  %v2351 = vmul.f32 %v2346, %v2350
  %vm2352 = vcmask 254976
  %v2353 = vsel %vm2352, %v2351, 0.0
  %2354 = vadd.xlane.f32.xlu0 %v2353
  %v2355 = vpop.xlane.xlu0 %2354
  %v2356 = vsel %vm287, %v2355, -inf
  %v2357 = vrot.slane %v2356, 4
  %v2358 = vmax.f32 %v2356, %v2357
  %v2359 = vrot.slane %v2358, 2
  %v2360 = vmax.f32 %v2358, %v2359
  %v2361 = vrot.slane %v2360, 1
  %v2362 = vmax.f32 %v2360, %v2361
  %v2363 = vsub.f32 %v2355, %v2362
  %v2364 = vmul.f32 %v2363, 1.442695
  %v2365 = vpow.pop %v2364
  %v2366 = vsel %vm287, %v2365, 0.0
  %v2367 = vrot.slane %v2366, 4
  %v2368 = vadd.f32 %v2366, %v2367
  %v2369 = vrot.slane %v2368, 2
  %v2370 = vadd.f32 %v2368, %v2369
  %v2371 = vrot.slane %v2370, 1
  %v2372 = vadd.f32 %v2370, %v2371
  %v2373 = vrcp.pop %v2372
  %v2374 = vmul.f32 %v2365, %v2373
  %v2375 = vadd.f32 %v2374, 1.0
  %v2376 = vmul.f32 %v1531, %v2375
  %v2377 = vadd.f32 %v2376, 0.0
  %v2378 = vtanh.pop %v1645
  %v2379 = vmul.f32 %v2378, %v2350
  %vm2380 = vcmask 257026
  %v2381 = vsel %vm2380, %v2379, 0.0
  %2382 = vadd.xlane.f32.xlu0 %v2381
  %v2383 = vpop.xlane.xlu0 %2382
  %vm2384 = vcmask 1043458
  %v2385 = vsel %vm2384, %v2383, -inf
  %v2386 = vrot.slane %v2385, 4
  %v2387 = vmax.f32 %v2385, %v2386
  %v2388 = vrot.slane %v2387, 2
  %v2389 = vmax.f32 %v2387, %v2388
  %v2390 = vrot.slane %v2389, 1
  %v2391 = vmax.f32 %v2389, %v2390
  %v2392 = vsub.f32 %v2383, %v2391
  %v2393 = vmul.f32 %v2392, 1.442695
  %v2394 = vpow.pop %v2393
  %v2396 = vrot.slane %v2394, 2
  %v2398 = vsel %vm287, %v2396, 0.0
  %v2399 = vrot.slane %v2398, 4
  %v2400 = vadd.f32 %v2398, %v2399
  %v2401 = vrot.slane %v2400, 2
  %v2402 = vadd.f32 %v2400, %v2401
  %v2403 = vrot.slane %v2402, 1
  %v2404 = vadd.f32 %v2402, %v2403
  %v2405 = vrcp.pop %v2404
  %v2406 = vmul.f32 %v2394, %v2405
  %v2407 = vadd.f32 %v2406, 1.0
  %v2408 = vmul.f32 %v1645, %v2407
  %v2410 = vrot.slane %v2408, 2
  %v2412 = vadd.f32 %v2377, %v2410
  %v2413 = vtanh.pop %v1762
  %v2414 = vmul.f32 %v2413, %v2350
  %vm2415 = vcmask 259076
  %v2416 = vsel %vm2415, %v2414, 0.0
  %2417 = vadd.xlane.f32.xlu0 %v2416
  %v2418 = vpop.xlane.xlu0 %2417
  %vm2419 = vcmask 1045508
  %v2420 = vsel %vm2419, %v2418, -inf
  %v2421 = vrot.slane %v2420, 4
  %v2422 = vmax.f32 %v2420, %v2421
  %v2423 = vrot.slane %v2422, 2
  %v2424 = vmax.f32 %v2422, %v2423
  %v2425 = vrot.slane %v2424, 1
  %v2426 = vmax.f32 %v2424, %v2425
  %v2427 = vsub.f32 %v2418, %v2426
  %v2428 = vmul.f32 %v2427, 1.442695
  %v2429 = vpow.pop %v2428
  %v2431 = vrot.slane %v2429, 4
  %v2433 = vsel %vm287, %v2431, 0.0
  %v2434 = vrot.slane %v2433, 4
  %v2435 = vadd.f32 %v2433, %v2434
  %v2436 = vrot.slane %v2435, 2
  %v2437 = vadd.f32 %v2435, %v2436
  %v2438 = vrot.slane %v2437, 1
  %v2439 = vadd.f32 %v2437, %v2438
  %v2440 = vrcp.pop %v2439
  %v2441 = vmul.f32 %v2429, %v2440
  %v2442 = vadd.f32 %v2441, 1.0
  %v2443 = vmul.f32 %v1762, %v2442
  %v2445 = vrot.slane %v2443, 4
  %v2447 = vadd.f32 %v2412, %v2445
  %v2448 = vtanh.pop %v1879
  %v2449 = vmul.f32 %v2448, %v2350
  %vm2450 = vcmask 261126
  %v2451 = vsel %vm2450, %v2449, 0.0
  %2452 = vadd.xlane.f32.xlu0 %v2451
  %v2453 = vpop.xlane.xlu0 %2452
  %vm2454 = vcmask 1047558
  %v2455 = vsel %vm2454, %v2453, -inf
  %v2456 = vrot.slane %v2455, 4
  %v2457 = vmax.f32 %v2455, %v2456
  %v2458 = vrot.slane %v2457, 2
  %v2459 = vmax.f32 %v2457, %v2458
  %v2460 = vrot.slane %v2459, 1
  %v2461 = vmax.f32 %v2459, %v2460
  %v2462 = vsub.f32 %v2453, %v2461
  %v2463 = vmul.f32 %v2462, 1.442695
  %v2464 = vpow.pop %v2463
  %v2466 = vrot.slane %v2464, 6
  %v2468 = vsel %vm287, %v2466, 0.0
  %v2469 = vrot.slane %v2468, 4
  %v2470 = vadd.f32 %v2468, %v2469
  %v2471 = vrot.slane %v2470, 2
  %v2472 = vadd.f32 %v2470, %v2471
  %v2473 = vrot.slane %v2472, 1
  %v2474 = vadd.f32 %v2472, %v2473
  %v2475 = vrcp.pop %v2474
  %v2476 = vmul.f32 %v2464, %v2475
  %v2477 = vadd.f32 %v2476, 1.0
  %v2478 = vmul.f32 %v1879, %v2477
  %v2480 = vrot.slane %v2478, 6
  %v2482 = vadd.f32 %v2447, %v2480
  %v2483 = vtanh.pop %v1991
  %v2484 = vmul.f32 %v2483, %v2350
  %v2485 = vsel %vm2352, %v2484, 0.0
  %2486 = vadd.xlane.f32.xlu0 %v2485
  %v2487 = vpop.xlane.xlu0 %2486
  %v2488 = vsel %vm287, %v2487, -inf
  %v2489 = vrot.slane %v2488, 4
  %v2490 = vmax.f32 %v2488, %v2489
  %v2491 = vrot.slane %v2490, 2
  %v2492 = vmax.f32 %v2490, %v2491
  %v2493 = vrot.slane %v2492, 1
  %v2494 = vmax.f32 %v2492, %v2493
  %v2495 = vsub.f32 %v2487, %v2494
  %v2496 = vmul.f32 %v2495, 1.442695
  %v2497 = vpow.pop %v2496
  %v2498 = vsel %vm287, %v2497, 0.0
  %v2499 = vrot.slane %v2498, 4
  %v2500 = vadd.f32 %v2498, %v2499
  %v2501 = vrot.slane %v2500, 2
  %v2502 = vadd.f32 %v2500, %v2501
  %v2503 = vrot.slane %v2502, 1
  %v2504 = vadd.f32 %v2502, %v2503
  %v2505 = vrcp.pop %v2504
  %v2506 = vmul.f32 %v2497, %v2505
  %v2507 = vadd.f32 %v2506, 1.0
  %v2508 = vmul.f32 %v1991, %v2507
  %v2509 = vadd.f32 %v2482, %v2508
  %v2510 = vtanh.pop %v2107
  %v2511 = vmul.f32 %v2510, %v2350
  %v2512 = vsel %vm2380, %v2511, 0.0
  %2513 = vadd.xlane.f32.xlu0 %v2512
  %v2514 = vpop.xlane.xlu0 %2513
  %v2515 = vsel %vm2384, %v2514, -inf
  %v2516 = vrot.slane %v2515, 4
  %v2517 = vmax.f32 %v2515, %v2516
  %v2518 = vrot.slane %v2517, 2
  %v2519 = vmax.f32 %v2517, %v2518
  %v2520 = vrot.slane %v2519, 1
  %v2521 = vmax.f32 %v2519, %v2520
  %v2522 = vsub.f32 %v2514, %v2521
  %v2523 = vmul.f32 %v2522, 1.442695
  %v2524 = vpow.pop %v2523
  %v2526 = vrot.slane %v2524, 2
  %v2528 = vsel %vm287, %v2526, 0.0
  %v2529 = vrot.slane %v2528, 4
  %v2530 = vadd.f32 %v2528, %v2529
  %v2531 = vrot.slane %v2530, 2
  %v2532 = vadd.f32 %v2530, %v2531
  %v2533 = vrot.slane %v2532, 1
  %v2534 = vadd.f32 %v2532, %v2533
  %v2535 = vrcp.pop %v2534
  %v2536 = vmul.f32 %v2524, %v2535
  %v2537 = vadd.f32 %v2536, 1.0
  %v2538 = vmul.f32 %v2107, %v2537
  %v2540 = vrot.slane %v2538, 2
  %v2542 = vadd.f32 %v2509, %v2540
  %v2543 = vtanh.pop %v2224
  %v2544 = vmul.f32 %v2543, %v2350
  %v2545 = vsel %vm2415, %v2544, 0.0
  %2546 = vadd.xlane.f32.xlu0 %v2545
  %v2547 = vpop.xlane.xlu0 %2546
  %v2548 = vsel %vm2419, %v2547, -inf
  %v2549 = vrot.slane %v2548, 4
  %v2550 = vmax.f32 %v2548, %v2549
  %v2551 = vrot.slane %v2550, 2
  %v2552 = vmax.f32 %v2550, %v2551
  %v2553 = vrot.slane %v2552, 1
  %v2554 = vmax.f32 %v2552, %v2553
  %v2555 = vsub.f32 %v2547, %v2554
  %v2556 = vmul.f32 %v2555, 1.442695
  %v2557 = vpow.pop %v2556
  %v2559 = vrot.slane %v2557, 4
  %v2561 = vsel %vm287, %v2559, 0.0
  %v2562 = vrot.slane %v2561, 4
  %v2563 = vadd.f32 %v2561, %v2562
  %v2564 = vrot.slane %v2563, 2
  %v2565 = vadd.f32 %v2563, %v2564
  %v2566 = vrot.slane %v2565, 1
  %v2567 = vadd.f32 %v2565, %v2566
  %v2568 = vrcp.pop %v2567
  %v2569 = vmul.f32 %v2557, %v2568
  %v2570 = vadd.f32 %v2569, 1.0
  %v2571 = vmul.f32 %v2224, %v2570
  %v2573 = vrot.slane %v2571, 4
  %v2575 = vadd.f32 %v2542, %v2573
  %v2576 = vtanh.pop %v2341
  %v2577 = vmul.f32 %v2576, %v2350
  %v2578 = vsel %vm2450, %v2577, 0.0
  %2579 = vadd.xlane.f32.xlu0 %v2578
  %v2580 = vpop.xlane.xlu0 %2579
  %v2581 = vsel %vm2454, %v2580, -inf
  %v2582 = vrot.slane %v2581, 4
  %v2583 = vmax.f32 %v2581, %v2582
  %v2584 = vrot.slane %v2583, 2
  %v2585 = vmax.f32 %v2583, %v2584
  %v2586 = vrot.slane %v2585, 1
  %v2587 = vmax.f32 %v2585, %v2586
  %v2588 = vsub.f32 %v2580, %v2587
  %v2589 = vmul.f32 %v2588, 1.442695
  %v2590 = vpow.pop %v2589
  %v2592 = vrot.slane %v2590, 6
  %v2594 = vsel %vm287, %v2592, 0.0
  %v2595 = vrot.slane %v2594, 4
  %v2596 = vadd.f32 %v2594, %v2595
  %v2597 = vrot.slane %v2596, 2
  %v2598 = vadd.f32 %v2596, %v2597
  %v2599 = vrot.slane %v2598, 1
  %v2600 = vadd.f32 %v2598, %v2599
  %v2601 = vrcp.pop %v2600
  %v2602 = vmul.f32 %v2590, %v2601
  %v2603 = vadd.f32 %v2602, 1.0
  %v2604 = vmul.f32 %v2341, %v2603
  %v2606 = vrot.slane %v2604, 6
  %v2608 = vadd.f32 %v2575, %v2606
  %v2610 = vrot.slane %v1320, 6
  %v2612 = vsel %vm2352, %v2610, 0.0
  %v2613 = vrot.slane %v2612, 4
  %v2614 = vadd.f32 %v2612, %v2613
  %v2615 = vrot.slane %v2614, 2
  %v2616 = vadd.f32 %v2614, %v2615
  %v2617 = vrot.slane %v2616, 1
  %v2618 = vadd.f32 %v2616, %v2617
  %v2619 = vrcp.pop 2.0
  %v2620 = vmul.f32 %v2618, %v2619
  %v2622 = vrot.slane %v2344, 6
  %v2624 = vsel %vm2352, %v2622, 0.0
  %v2625 = vrot.slane %v2624, 4
  %v2626 = vadd.f32 %v2624, %v2625
  %v2627 = vrot.slane %v2626, 2
  %v2628 = vadd.f32 %v2626, %v2627
  %v2629 = vrot.slane %v2628, 1
  %v2630 = vadd.f32 %v2628, %v2629
  %v2631 = vmul.f32 %v2630, %v2619
  %v2632 = vsel %vm278, %v2620, %v2631
  %v2634 = vrot.slane %v2632, 6
  %v2636 = vsel %vm287, %v2608, %v2634
  %v2637 = vld [vmem:[%s1 + $0x108] sm:$0xff]
  %v2638 = vld [vmem:[%s1 + $0x110] sm:$0xff]
  %v2639 = vld [vmem:[%s1 + $0x118] sm:$0xff]
  %v2640 = vld [vmem:[%s1 + $0x120] sm:$0xff]
  %v2641 = vld [vmem:[%s1 + $0x128] sm:$0x1]
  %v2642 = vlaneseq
  %v2643 = vshrl.u32 %v2642, 7
  %v2644 = vsub.s32 0, %v2643
  %v2645 = vrot.slane %v2641, %v2644
  %v2646 = vsel %vm287, 0.0, %v2645
  %v2648 = vsel %vm140, %v2636, 0
  %2650 = vmatprep.subr.mxu0 0.0
  %2651 = vmatpush1.msra.mxu0 0.0
  %2652 = vmatprep.subr.mxu0 0.0
  %2653 = vmatpush1.msra.mxu0 0.0
  %2654 = vmatprep.subr.mxu0 0.0
  %2655 = vmatpush1.msra.mxu0 0.0
  %2656 = vmatprep.subr.mxu0 0.0
  %2657 = vmatpush1.msra.mxu0 0.0
  %2658 = vmatprep.subr.mxu0 0.0
  %2659 = vmatpush1.msra.mxu0 0.0
  %2660 = vmatprep.subr.mxu0 0.0
  %2661 = vmatpush1.msra.mxu0 0.0
  %2662 = vmatprep.subr.mxu0 0.0
  %2663 = vmatpush1.msra.mxu0 0.0
  %2664 = vmatprep.subr.mxu0 0.0
  %2665 = vmatpush1.msra.mxu0 0.0
  %2666 = vmatprep.subr.mxu0 0.0
  %2667 = vmatpush1.msra.mxu0 0.0
  %2668 = vmatprep.subr.mxu0 0.0
  %2669 = vmatpush1.msra.mxu0 0.0
  %2670 = vmatprep.subr.mxu0 0.0
  %2671 = vmatpush1.msra.mxu0 0.0
  %2672 = vmatprep.subr.mxu0 0.0
  %2673 = vmatpush1.msra.mxu0 0.0
  %2674 = vmatprep.subr.mxu0 0.0
  %2675 = vmatpush1.msra.mxu0 %v2640
  %2676 = vmatprep.subr.mxu0 0.0
  %2677 = vmatpush1.msra.mxu0 %v2639
  %2678 = vmatprep.subr.mxu0 0.0
  %2679 = vmatpush1.msra.mxu0 %v2638
  %2680 = vmatprep.subr.mxu0 0.0
  %2681 = vmatpush1.msra.mxu0 %v2637
  %2682 = vmatprep.subr.mxu0 0.0
  %2683 = vmatpush2.msra.mxu0 0.0
  %2684 = vmatprep.subr.mxu0 0.0
  %2685 = vmatpush2.msra.mxu0 0.0
  %2686 = vmatprep.subr.mxu0 0.0
  %2687 = vmatpush2.msra.mxu0 0.0
  %2688 = vmatprep.subr.mxu0 0.0
  %2689 = vmatpush2.msra.mxu0 0.0
  %2690 = vmatprep.subr.mxu0 0.0
  %2691 = vmatpush2.msra.mxu0 0.0
  %2692 = vmatprep.subr.mxu0 0.0
  %2693 = vmatpush2.msra.mxu0 0.0
  %2694 = vmatprep.subr.mxu0 0.0
  %2695 = vmatpush2.msra.mxu0 0.0
  %2696 = vmatprep.subr.mxu0 0.0
  %2697 = vmatpush2.msra.mxu0 0.0
  %2698 = vmatprep.subr.mxu0 0.0
  %2699 = vmatpush2.msra.mxu0 0.0
  %2700 = vmatprep.subr.mxu0 0.0
  %2701 = vmatpush2.msra.mxu0 0.0
  %2702 = vmatprep.subr.mxu0 0.0
  %2703 = vmatpush2.msra.mxu0 0.0
  %2704 = vmatprep.subr.mxu0 0.0
  %2705 = vmatpush2.msra.mxu0 0.0
  %2706 = vmatprep.subr.mxu0 0.0
  %2707 = vmatpush2.msra.mxu0 0.0
  %2708 = vmatprep.subr.mxu0 0.0
  %2709 = vmatpush2.msra.mxu0 0.0
  %2710 = vmatprep.subr.mxu0 0.0
  %2711 = vmatpush2.msra.mxu0 0.0
  %2712 = vmatprep.subr.mxu0 0.0
  %2713 = vmatpush2.msra.mxu0 0.0
  %2714 = vmatprep.mubr.f32.mxu0 0.0
  %2715 = vmatmul.mubr.f32.gmra.mxu0 %v2648
  %v2716 = vpop.f32.mrf.mxu0
  %v2717 = vadd.f32 %v2646, %v2716
  %v2718 = vpop.f32.mrf.mxu0
  %2719 = vdwg.mxu0
  %vm2720 = vcmask 19456
  %2721 = vst.msk [vmem:[%s2] sm:$0xf] %vm2720, %v2717
  // Predicated region
  $region10: #{drbert_forward.1} parent=0 // pred_check
    _
  $region11: #{drbert_forward.1} parent=0 // pred_check_branch
    %2723 = sbr.rel (0) target = $region13
  $region12: #{drbert_forward.1} parent=0 // pred_region
    _
  $region13: #{drbert_forward.1} parent=0 // pred_fallthru
    _
  // Predicated region
  $region14: #{drbert_forward.1} parent=0 // pred_check
    _
  $region15: #{drbert_forward.1} parent=0 // pred_check_branch
    %2725 = sbr.rel (0) target = $region17
  $region16: #{drbert_forward.1} parent=0 // pred_region
    _
  $region17: #{drbert_forward.1} parent=0 // pred_fallthru
    _

</llo_original>
